<compile_context>
chip_gen: v6e
topology: v6e:2x2x1
jax: 0.10.0
libtpu: 0.0.40
codegen_flags: <defaults>
</compile_context>

<pallas_src>
import functools

import jax
import jax.numpy as jnp
import numpy as np
from jax import lax
from jax.experimental import pallas as pl
from jax.experimental.pallas import tpu as pltpu

# ----------------------------- fixed geometry ------------------------------
IN_H = IN_W = 32                 # LeNet geometry requires 32x32 input
IN_C = 2
KS = 5
C1_OH = IN_H - KS + 1            # 28  conv1 output height/width
C1_ROWS = C1_OH * C1_OH          # 784 conv1 patch rows per image (host im2col)
K1 = KS * KS * IN_C              # 50  conv1 patch length
K1_PAD = 64                      # lane-padded patch length
P1_W = C1_OH // 2                # 14  pooled1 spatial size
S1 = 208                         # pooled1 rows per image (196 valid + 12 zero pad)
C2_H = P1_W - KS + 1             # 10  conv2 valid output rows (full-width trick)
C2_ROWS = C2_H * P1_W            # 140 conv2 output rows per image
P2_W = C2_H // 2                 # 5   pooled2 spatial size
S2 = 32                          # pooled2 rows per image (25 valid + 7 zero pad)
C3_ROWS = 8                      # conv3 / fc tile rows (row 0 is the valid one)
C1, C2, C3 = 6, 16, 120          # real channel counts
C1P, C2P, C3P = 8, 16, 128       # lane-padded channel counts
K2 = KS * KS * C1P               # 200 conv2 patch length (padded cin)
K3 = KS * KS * C2P               # 400 conv3 patch length
FC_HID = 84
FC_PAD = 128                     # padded fc width


# ------------------------------ fused kernel -------------------------------
def _lenet_kernel(b1_ref, w1_ref, w2_ref, w3_ref, wf1_ref, wf2_ref,
                  p1_ref, p2_ref, out_ref):
    f32 = jnp.float32
    relu = lambda v: jnp.maximum(v, 0.0)

    # conv1 + ReLU: host-side im2col -> one MXU matmul.      (784,64)@(64,8)
    y1 = relu(jnp.dot(b1_ref[...], w1_ref[...], preferred_element_type=f32))

    # pool1: one constant 0.25-valued selector matmul.       (208,784)@(784,8)
    # Rows 196..207 of the selector are zero -> aligned, pre-zeroed pad rows.
    q1 = jnp.dot(p1_ref[...], y1, preferred_element_type=f32)            # (208, 8)

    # conv2 + ReLU: in-kernel im2col via 25 static slices of the pooled map
    # (full-width trick: garbage columns are never selected by pool2).
    b2 = jnp.concatenate(
        [q1[i * P1_W + j: i * P1_W + j + C2_ROWS, :]
         for i in range(KS) for j in range(KS)], axis=-1)                # (140, 200)
    y2 = relu(jnp.dot(b2, w2_ref[...], preferred_element_type=f32))      # (140, 16)

    # pool2: one constant selector matmul.                   (32,140)@(140,16)
    q2 = jnp.dot(p2_ref[...], y2, preferred_element_type=f32)            # (32, 16)

    # conv3 + ReLU: 1x1 spatial output -> AdaptiveAvgPool2d(1) is the identity.
    # Rows 1..7 of the tile are finite garbage and are never read back.
    b3 = jnp.concatenate(
        [q2[i * P2_W + j: i * P2_W + j + C3_ROWS, :]
         for i in range(KS) for j in range(KS)], axis=-1)                # (8, 400)
    y3 = relu(jnp.dot(b3, w3_ref[...], preferred_element_type=f32))      # (8, 128)

    # fc1 + ReLU, fc2 — lane/sublane-dense (8,128) store; only row 0 and the
    # first num_classes lanes are meaningful (sliced once on the host).
    h = relu(jnp.dot(y3, wf1_ref[...], preferred_element_type=f32))      # (8, 128)
    out_ref[0] = jnp.dot(h, wf2_ref[...], preferred_element_type=f32)    # (8, 128)


# ------------------------------- host wrapper -------------------------------
def _im2col_conv1(x):
    """NCHW (N,2,32,32) -> lane-dense conv1 patch matrix (N*784, 64)."""
    n = x.shape[0]
    xt = jnp.transpose(x, (0, 2, 3, 1))                                   # NHWC
    cols = [xt[:, i:i + C1_OH, j:j + C1_OH, :]
            for i in range(KS) for j in range(KS)]                        # 25 x (N,28,28,2)
    p = jnp.concatenate(cols, axis=-1).reshape(n * C1_ROWS, K1)           # (N*784, 50)
    return jnp.pad(p, ((0, 0), (0, K1_PAD - K1)))                         # (N*784, 64)


@functools.partial(jax.jit, static_argnames=("num_classes",))
def cnn_lenet_forward(params, x, num_classes=1):
    n = x.shape[0]
    b1 = _im2col_conv1(x)

    out = pl.pallas_call(
        _lenet_kernel,
        out_shape=jax.ShapeDtypeStruct((n, C3_ROWS, FC_PAD), jnp.float32),
        grid=(n,),
        in_specs=[
            pl.BlockSpec((C1_ROWS, K1_PAD), lambda i: (i, 0)),   # per-image patch block
            pl.BlockSpec((K1_PAD, C1P), lambda i: (0, 0)),       # conv1 weight
            pl.BlockSpec((K2, C2P), lambda i: (0, 0)),           # conv2 weight
            pl.BlockSpec((K3, C3P), lambda i: (0, 0)),           # conv3 weight
            pl.BlockSpec((C3P, FC_PAD), lambda i: (0, 0)),       # fc1 weight
            pl.BlockSpec((FC_PAD, FC_PAD), lambda i: (0, 0)),    # fc2 weight
            pl.BlockSpec((S1, C1_ROWS), lambda i: (0, 0)),       # pool1 selector
            pl.BlockSpec((S2, C2_ROWS), lambda i: (0, 0)),       # pool2 selector
        ],
        out_specs=pl.BlockSpec((1, C3_ROWS, FC_PAD), lambda i: (i, 0, 0)),
        compiler_params=pltpu.CompilerParams(
            dimension_semantics=("parallel",)),                  # v7x: batch over both TCs
    )(b1, params["w1"], params["w2"], params["w3"],
      params["wfc1"], params["wfc2"], params["pool1"], params["pool2"])

    return out[:, 0, :num_classes]          # drop lane/sublane padding once, at the end


# ------------------ params (PyTorch layouts -> kernel layouts) ------------------
def init_torch_like_params(key, num_classes=1):
    ks = jax.random.split(key, 5)

    def u(k, shape, fan_in):
        b = 1.0 / float(fan_in) ** 0.5
        return jax.random.uniform(k, shape, jnp.float32, -b, b)

    return {
        "conv1": u(ks[0], (C1, IN_C, KS, KS), IN_C * KS * KS),
        "conv2": u(ks[1], (C2, C1, KS, KS), C1 * KS * KS),
        "conv3": u(ks[2], (C3, C2, KS, KS), C2 * KS * KS),
        "fc1": u(ks[3], (FC_HID, C3), C3),               # PyTorch Linear: (out, in)
        "fc2": u(ks[4], (num_classes, FC_HID), FC_HID),
    }


def prepare_params(tp):
    """One-time re-layout: conv -> (KH*KW*Cin_pad, Cout_pad), fc -> (in_pad, out_pad),
    plus constant 0.25-valued 2x2 avg-pool selector matrices (zero pad rows)."""
    num_classes = tp["fc2"].shape[0]
    assert num_classes <= FC_PAD

    def conv_mat(w, cin_pad, cout_pad, rows_pad=None):
        cout, cin, kh, kw = w.shape
        m = jnp.transpose(w, (2, 3, 1, 0))                              # (kh,kw,cin,cout)
        m = jnp.pad(m, ((0, 0), (0, 0), (0, cin_pad - cin), (0, cout_pad - cout)))
        m = m.reshape(kh * kw * cin_pad, cout_pad)
        if rows_pad is not None:
            m = jnp.pad(m, ((0, rows_pad - m.shape[0]), (0, 0)))
        return m

    def fc_mat(w, in_pad, out_pad):
        o, i = w.shape
        return jnp.pad(w.T, ((0, in_pad - i), (0, out_pad - o)))

    def pool_sel(out_hw, in_w, rows_out, rows_in):
        m = np.zeros((rows_out, rows_in), np.float32)
        for h in range(out_hw):
            for w in range(out_hw):
                r = h * out_hw + w
                for dh in range(2):
                    for dw in range(2):
                        m[r, (2 * h + dh) * in_w + (2 * w + dw)] = 0.25
        return jnp.asarray(m)

    return {
        "w1": conv_mat(tp["conv1"], IN_C, C1P, rows_pad=K1_PAD),        # (64, 8)
        "w2": conv_mat(tp["conv2"], C1P, C2P),                          # (200, 16)
        "w3": conv_mat(tp["conv3"], C2P, C3P),                          # (400, 128)
        "wfc1": fc_mat(tp["fc1"], C3P, FC_PAD),                         # (128, 128)
        "wfc2": fc_mat(tp["fc2"], FC_PAD, FC_PAD),                      # (128, 128)
        "pool1": pool_sel(P1_W, C1_OH, S1, C1_ROWS),                    # (208, 784)
        "pool2": pool_sel(P2_W, P1_W, S2, C2_ROWS),                     # (32, 140)
    }


# ------------------------------ pure-JAX reference ------------------------------
def reference_forward(tp, x):
    dn = ("NCHW", "OIHW", "NCHW")
    hp = lax.Precision.HIGHEST

    def conv(v, w):
        return lax.conv_general_dilated(v, w, (1, 1), "VALID",
                                        dimension_numbers=dn, precision=hp)

    def pool(v):
        n, c, h, w = v.shape
        return v.reshape(n, c, h // 2, 2, w // 2, 2).mean(axis=(3, 5))

    y = pool(jnp.maximum(conv(x, tp["conv1"]), 0.0))
    y = pool(jnp.maximum(conv(y, tp["conv2"]), 0.0))
    y = jnp.maximum(conv(y, tp["conv3"]), 0.0)
    y = y.mean(axis=(2, 3))                          # AdaptiveAvgPool2d(1) + flatten
    y = jnp.maximum(jnp.dot(y, tp["fc1"].T, precision=hp), 0.0)
    return jnp.dot(y, tp["fc2"].T, precision=hp)


# ------------------------------------ main ------------------------------------
if __name__ == "__main__":
    key = jax.random.PRNGKey(0)
    kx, kp = jax.random.split(key)

    x = jax.random.normal(kx, (2, IN_C, IN_H, IN_W), jnp.float32)   # (2, 2, 32, 32)
    torch_params = init_torch_like_params(kp, num_classes=1)
    params = prepare_params(torch_params)

    out = cnn_lenet_forward(params, x, num_classes=1)
    jax.block_until_ready(out)
    assert out.shape == (2, 1) and out.dtype == jnp.float32

    ref = reference_forward(torch_params, x)
    np.testing.assert_allclose(np.asarray(out), np.asarray(ref), rtol=2e-2, atol=2e-3)

    print("KERNEL_OK")
</pallas_src>

<mosaic_0001>
module attributes {stable_mosaic.version = 11 : i64} {
  func.func @_lenet_kernel(%arg0: i32, %arg1: memref<784x64xf32, #tpu.memory_space<vmem>>, %arg2: memref<64x8xf32, #tpu.memory_space<vmem>>, %arg3: memref<200x16xf32, #tpu.memory_space<vmem>>, %arg4: memref<400x128xf32, #tpu.memory_space<vmem>>, %arg5: memref<128x128xf32, #tpu.memory_space<vmem>>, %arg6: memref<128x128xf32, #tpu.memory_space<vmem>>, %arg7: memref<208x784xf32, #tpu.memory_space<vmem>>, %arg8: memref<32x140xf32, #tpu.memory_space<vmem>>, %arg9: memref<1x8x128xf32, #tpu.memory_space<vmem>>) attributes {dimension_semantics = [#tpu.dimension_semantics<parallel>], iteration_bounds = array<i64: 2>, scalar_prefetch = 0 : i64, scratch_operands = 0 : i64, tpu.core_type = #tpu.core_type<tc>, window_params = [{transform_indices = @transform_0, window_bounds = array<i64: 784, 64>}, {pipeline_mode = #tpu.pipeline_mode<synchronous>, transform_indices = @transform_1, window_bounds = array<i64: 64, 8>}, {pipeline_mode = #tpu.pipeline_mode<synchronous>, transform_indices = @transform_2, window_bounds = array<i64: 200, 16>}, {pipeline_mode = #tpu.pipeline_mode<synchronous>, transform_indices = @transform_3, window_bounds = array<i64: 400, 128>}, {pipeline_mode = #tpu.pipeline_mode<synchronous>, transform_indices = @transform_4, window_bounds = array<i64: 128, 128>}, {pipeline_mode = #tpu.pipeline_mode<synchronous>, transform_indices = @transform_5, window_bounds = array<i64: 128, 128>}, {pipeline_mode = #tpu.pipeline_mode<synchronous>, transform_indices = @transform_6, window_bounds = array<i64: 208, 784>}, {pipeline_mode = #tpu.pipeline_mode<synchronous>, transform_indices = @transform_7, window_bounds = array<i64: 32, 140>}, {transform_indices = @transform_8, window_bounds = array<i64: 1, 8, 128>}]} {
    %c0 = arith.constant 0 : index
    %c0_0 = arith.constant 0 : index
    %0 = vector.load %arg1[%c0, %c0_0] : memref<784x64xf32, #tpu.memory_space<vmem>>, vector<784x64xf32>
    %c0_1 = arith.constant 0 : index
    %c0_2 = arith.constant 0 : index
    %1 = vector.load %arg2[%c0_1, %c0_2] : memref<64x8xf32, #tpu.memory_space<vmem>>, vector<64x8xf32>
    %cst = arith.constant dense<0.000000e+00> : vector<784x8xf32>
    %2 = tpu.matmul %0, %1, %cst {dimension_numbers = #tpu.dot_dimension_numbers<[1], [0], [0], [1], [0, 0, 1, 1], [], []>} : vector<784x64xf32>, vector<64x8xf32>, vector<784x8xf32> -> vector<784x8xf32>
    %cst_3 = arith.constant 0.000000e+00 : f32
    %3 = vector.broadcast %cst_3 : f32 to vector<784x8xf32>
    %4 = arith.maximumf %2, %3 : vector<784x8xf32>
    %c0_4 = arith.constant 0 : index
    %c0_5 = arith.constant 0 : index
    %5 = vector.load %arg7[%c0_4, %c0_5] : memref<208x784xf32, #tpu.memory_space<vmem>>, vector<208x784xf32>
    %cst_6 = arith.constant dense<0.000000e+00> : vector<208x8xf32>
    %6 = tpu.matmul %5, %4, %cst_6 {dimension_numbers = #tpu.dot_dimension_numbers<[1], [0], [0], [1], [0, 0, 1, 1], [], []>} : vector<208x784xf32>, vector<784x8xf32>, vector<208x8xf32> -> vector<208x8xf32>
    %7 = vector.extract_strided_slice %6 {offsets = [0, 0], sizes = [140, 8], strides = [1, 1]} : vector<208x8xf32> to vector<140x8xf32>
    %8 = vector.extract_strided_slice %6 {offsets = [1, 0], sizes = [140, 8], strides = [1, 1]} : vector<208x8xf32> to vector<140x8xf32>
    %9 = vector.extract_strided_slice %6 {offsets = [2, 0], sizes = [140, 8], strides = [1, 1]} : vector<208x8xf32> to vector<140x8xf32>
    %10 = vector.extract_strided_slice %6 {offsets = [3, 0], sizes = [140, 8], strides = [1, 1]} : vector<208x8xf32> to vector<140x8xf32>
    %11 = vector.extract_strided_slice %6 {offsets = [4, 0], sizes = [140, 8], strides = [1, 1]} : vector<208x8xf32> to vector<140x8xf32>
    %12 = vector.extract_strided_slice %6 {offsets = [14, 0], sizes = [140, 8], strides = [1, 1]} : vector<208x8xf32> to vector<140x8xf32>
    %13 = vector.extract_strided_slice %6 {offsets = [15, 0], sizes = [140, 8], strides = [1, 1]} : vector<208x8xf32> to vector<140x8xf32>
    %14 = vector.extract_strided_slice %6 {offsets = [16, 0], sizes = [140, 8], strides = [1, 1]} : vector<208x8xf32> to vector<140x8xf32>
    %15 = vector.extract_strided_slice %6 {offsets = [17, 0], sizes = [140, 8], strides = [1, 1]} : vector<208x8xf32> to vector<140x8xf32>
    %16 = vector.extract_strided_slice %6 {offsets = [18, 0], sizes = [140, 8], strides = [1, 1]} : vector<208x8xf32> to vector<140x8xf32>
    %17 = vector.extract_strided_slice %6 {offsets = [28, 0], sizes = [140, 8], strides = [1, 1]} : vector<208x8xf32> to vector<140x8xf32>
    %18 = vector.extract_strided_slice %6 {offsets = [29, 0], sizes = [140, 8], strides = [1, 1]} : vector<208x8xf32> to vector<140x8xf32>
    %19 = vector.extract_strided_slice %6 {offsets = [30, 0], sizes = [140, 8], strides = [1, 1]} : vector<208x8xf32> to vector<140x8xf32>
    %20 = vector.extract_strided_slice %6 {offsets = [31, 0], sizes = [140, 8], strides = [1, 1]} : vector<208x8xf32> to vector<140x8xf32>
    %21 = vector.extract_strided_slice %6 {offsets = [32, 0], sizes = [140, 8], strides = [1, 1]} : vector<208x8xf32> to vector<140x8xf32>
    %22 = vector.extract_strided_slice %6 {offsets = [42, 0], sizes = [140, 8], strides = [1, 1]} : vector<208x8xf32> to vector<140x8xf32>
    %23 = vector.extract_strided_slice %6 {offsets = [43, 0], sizes = [140, 8], strides = [1, 1]} : vector<208x8xf32> to vector<140x8xf32>
    %24 = vector.extract_strided_slice %6 {offsets = [44, 0], sizes = [140, 8], strides = [1, 1]} : vector<208x8xf32> to vector<140x8xf32>
    %25 = vector.extract_strided_slice %6 {offsets = [45, 0], sizes = [140, 8], strides = [1, 1]} : vector<208x8xf32> to vector<140x8xf32>
    %26 = vector.extract_strided_slice %6 {offsets = [46, 0], sizes = [140, 8], strides = [1, 1]} : vector<208x8xf32> to vector<140x8xf32>
    %27 = vector.extract_strided_slice %6 {offsets = [56, 0], sizes = [140, 8], strides = [1, 1]} : vector<208x8xf32> to vector<140x8xf32>
    %28 = vector.extract_strided_slice %6 {offsets = [57, 0], sizes = [140, 8], strides = [1, 1]} : vector<208x8xf32> to vector<140x8xf32>
    %29 = vector.extract_strided_slice %6 {offsets = [58, 0], sizes = [140, 8], strides = [1, 1]} : vector<208x8xf32> to vector<140x8xf32>
    %30 = vector.extract_strided_slice %6 {offsets = [59, 0], sizes = [140, 8], strides = [1, 1]} : vector<208x8xf32> to vector<140x8xf32>
    %31 = vector.extract_strided_slice %6 {offsets = [60, 0], sizes = [140, 8], strides = [1, 1]} : vector<208x8xf32> to vector<140x8xf32>
    %32 = tpu.concatenate %7, %8, %9, %10, %11, %12, %13, %14, %15, %16, %17, %18, %19, %20, %21, %22 in 1 : vector<140x8xf32>, vector<140x8xf32>, vector<140x8xf32>, vector<140x8xf32>, vector<140x8xf32>, vector<140x8xf32>, vector<140x8xf32>, vector<140x8xf32>, vector<140x8xf32>, vector<140x8xf32>, vector<140x8xf32>, vector<140x8xf32>, vector<140x8xf32>, vector<140x8xf32>, vector<140x8xf32>, vector<140x8xf32> -> vector<140x128xf32>
    %33 = tpu.concatenate %23, %24, %25, %26, %27, %28, %29, %30, %31 in 1 : vector<140x8xf32>, vector<140x8xf32>, vector<140x8xf32>, vector<140x8xf32>, vector<140x8xf32>, vector<140x8xf32>, vector<140x8xf32>, vector<140x8xf32>, vector<140x8xf32> -> vector<140x72xf32>
    %34 = tpu.concatenate %32, %33 in 1 : vector<140x128xf32>, vector<140x72xf32> -> vector<140x200xf32>
    %c0_7 = arith.constant 0 : index
    %c0_8 = arith.constant 0 : index
    %35 = vector.load %arg3[%c0_7, %c0_8] : memref<200x16xf32, #tpu.memory_space<vmem>>, vector<200x16xf32>
    %cst_9 = arith.constant dense<0.000000e+00> : vector<140x16xf32>
    %36 = tpu.matmul %34, %35, %cst_9 {dimension_numbers = #tpu.dot_dimension_numbers<[1], [0], [0], [1], [0, 0, 1, 1], [], []>} : vector<140x200xf32>, vector<200x16xf32>, vector<140x16xf32> -> vector<140x16xf32>
    %cst_10 = arith.constant 0.000000e+00 : f32
    %37 = vector.broadcast %cst_10 : f32 to vector<140x16xf32>
    %38 = arith.maximumf %36, %37 : vector<140x16xf32>
    %c0_11 = arith.constant 0 : index
    %c0_12 = arith.constant 0 : index
    %39 = vector.load %arg8[%c0_11, %c0_12] : memref<32x140xf32, #tpu.memory_space<vmem>>, vector<32x140xf32>
    %cst_13 = arith.constant dense<0.000000e+00> : vector<32x16xf32>
    %40 = tpu.matmul %39, %38, %cst_13 {dimension_numbers = #tpu.dot_dimension_numbers<[1], [0], [0], [1], [0, 0, 1, 1], [], []>} : vector<32x140xf32>, vector<140x16xf32>, vector<32x16xf32> -> vector<32x16xf32>
    %41 = vector.extract_strided_slice %40 {offsets = [0, 0], sizes = [8, 16], strides = [1, 1]} : vector<32x16xf32> to vector<8x16xf32>
    %42 = vector.extract_strided_slice %40 {offsets = [1, 0], sizes = [8, 16], strides = [1, 1]} : vector<32x16xf32> to vector<8x16xf32>
    %43 = vector.extract_strided_slice %40 {offsets = [2, 0], sizes = [8, 16], strides = [1, 1]} : vector<32x16xf32> to vector<8x16xf32>
    %44 = vector.extract_strided_slice %40 {offsets = [3, 0], sizes = [8, 16], strides = [1, 1]} : vector<32x16xf32> to vector<8x16xf32>
    %45 = vector.extract_strided_slice %40 {offsets = [4, 0], sizes = [8, 16], strides = [1, 1]} : vector<32x16xf32> to vector<8x16xf32>
    %46 = vector.extract_strided_slice %40 {offsets = [5, 0], sizes = [8, 16], strides = [1, 1]} : vector<32x16xf32> to vector<8x16xf32>
    %47 = vector.extract_strided_slice %40 {offsets = [6, 0], sizes = [8, 16], strides = [1, 1]} : vector<32x16xf32> to vector<8x16xf32>
    %48 = vector.extract_strided_slice %40 {offsets = [7, 0], sizes = [8, 16], strides = [1, 1]} : vector<32x16xf32> to vector<8x16xf32>
    %49 = vector.extract_strided_slice %40 {offsets = [8, 0], sizes = [8, 16], strides = [1, 1]} : vector<32x16xf32> to vector<8x16xf32>
    %50 = vector.extract_strided_slice %40 {offsets = [9, 0], sizes = [8, 16], strides = [1, 1]} : vector<32x16xf32> to vector<8x16xf32>
    %51 = vector.extract_strided_slice %40 {offsets = [10, 0], sizes = [8, 16], strides = [1, 1]} : vector<32x16xf32> to vector<8x16xf32>
    %52 = vector.extract_strided_slice %40 {offsets = [11, 0], sizes = [8, 16], strides = [1, 1]} : vector<32x16xf32> to vector<8x16xf32>
    %53 = vector.extract_strided_slice %40 {offsets = [12, 0], sizes = [8, 16], strides = [1, 1]} : vector<32x16xf32> to vector<8x16xf32>
    %54 = vector.extract_strided_slice %40 {offsets = [13, 0], sizes = [8, 16], strides = [1, 1]} : vector<32x16xf32> to vector<8x16xf32>
    %55 = vector.extract_strided_slice %40 {offsets = [14, 0], sizes = [8, 16], strides = [1, 1]} : vector<32x16xf32> to vector<8x16xf32>
    %56 = vector.extract_strided_slice %40 {offsets = [15, 0], sizes = [8, 16], strides = [1, 1]} : vector<32x16xf32> to vector<8x16xf32>
    %57 = vector.extract_strided_slice %40 {offsets = [16, 0], sizes = [8, 16], strides = [1, 1]} : vector<32x16xf32> to vector<8x16xf32>
    %58 = vector.extract_strided_slice %40 {offsets = [17, 0], sizes = [8, 16], strides = [1, 1]} : vector<32x16xf32> to vector<8x16xf32>
    %59 = vector.extract_strided_slice %40 {offsets = [18, 0], sizes = [8, 16], strides = [1, 1]} : vector<32x16xf32> to vector<8x16xf32>
    %60 = vector.extract_strided_slice %40 {offsets = [19, 0], sizes = [8, 16], strides = [1, 1]} : vector<32x16xf32> to vector<8x16xf32>
    %61 = vector.extract_strided_slice %40 {offsets = [20, 0], sizes = [8, 16], strides = [1, 1]} : vector<32x16xf32> to vector<8x16xf32>
    %62 = vector.extract_strided_slice %40 {offsets = [21, 0], sizes = [8, 16], strides = [1, 1]} : vector<32x16xf32> to vector<8x16xf32>
    %63 = vector.extract_strided_slice %40 {offsets = [22, 0], sizes = [8, 16], strides = [1, 1]} : vector<32x16xf32> to vector<8x16xf32>
    %64 = vector.extract_strided_slice %40 {offsets = [23, 0], sizes = [8, 16], strides = [1, 1]} : vector<32x16xf32> to vector<8x16xf32>
    %65 = vector.extract_strided_slice %40 {offsets = [24, 0], sizes = [8, 16], strides = [1, 1]} : vector<32x16xf32> to vector<8x16xf32>
    %66 = tpu.concatenate %41, %42, %43, %44, %45, %46, %47, %48, %49, %50, %51, %52, %53, %54, %55, %56 in 1 : vector<8x16xf32>, vector<8x16xf32>, vector<8x16xf32>, vector<8x16xf32>, vector<8x16xf32>, vector<8x16xf32>, vector<8x16xf32>, vector<8x16xf32>, vector<8x16xf32>, vector<8x16xf32>, vector<8x16xf32>, vector<8x16xf32>, vector<8x16xf32>, vector<8x16xf32>, vector<8x16xf32>, vector<8x16xf32> -> vector<8x256xf32>
    %67 = tpu.concatenate %57, %58, %59, %60, %61, %62, %63, %64, %65 in 1 : vector<8x16xf32>, vector<8x16xf32>, vector<8x16xf32>, vector<8x16xf32>, vector<8x16xf32>, vector<8x16xf32>, vector<8x16xf32>, vector<8x16xf32>, vector<8x16xf32> -> vector<8x144xf32>
    %68 = tpu.concatenate %66, %67 in 1 : vector<8x256xf32>, vector<8x144xf32> -> vector<8x400xf32>
    %c0_14 = arith.constant 0 : index
    %c0_15 = arith.constant 0 : index
    %69 = vector.load %arg4[%c0_14, %c0_15] : memref<400x128xf32, #tpu.memory_space<vmem>>, vector<400x128xf32>
    %cst_16 = arith.constant dense<0.000000e+00> : vector<8x128xf32>
    %70 = tpu.matmul %68, %69, %cst_16 {dimension_numbers = #tpu.dot_dimension_numbers<[1], [0], [0], [1], [0, 0, 1, 1], [], []>} : vector<8x400xf32>, vector<400x128xf32>, vector<8x128xf32> -> vector<8x128xf32>
    %cst_17 = arith.constant 0.000000e+00 : f32
    %71 = vector.broadcast %cst_17 : f32 to vector<8x128xf32>
    %72 = arith.maximumf %70, %71 : vector<8x128xf32>
    %c0_18 = arith.constant 0 : index
    %c0_19 = arith.constant 0 : index
    %73 = vector.load %arg5[%c0_18, %c0_19] : memref<128x128xf32, #tpu.memory_space<vmem>>, vector<128x128xf32>
    %cst_20 = arith.constant dense<0.000000e+00> : vector<8x128xf32>
    %74 = tpu.matmul %72, %73, %cst_20 {dimension_numbers = #tpu.dot_dimension_numbers<[1], [0], [0], [1], [0, 0, 1, 1], [], []>} : vector<8x128xf32>, vector<128x128xf32>, vector<8x128xf32> -> vector<8x128xf32>
    %cst_21 = arith.constant 0.000000e+00 : f32
    %75 = vector.broadcast %cst_21 : f32 to vector<8x128xf32>
    %76 = arith.maximumf %74, %75 : vector<8x128xf32>
    %c0_22 = arith.constant 0 : index
    %c0_23 = arith.constant 0 : index
    %77 = vector.load %arg6[%c0_22, %c0_23] : memref<128x128xf32, #tpu.memory_space<vmem>>, vector<128x128xf32>
    %cst_24 = arith.constant dense<0.000000e+00> : vector<8x128xf32>
    %78 = tpu.matmul %76, %77, %cst_24 {dimension_numbers = #tpu.dot_dimension_numbers<[1], [0], [0], [1], [0, 0, 1, 1], [], []>} : vector<8x128xf32>, vector<128x128xf32>, vector<8x128xf32> -> vector<8x128xf32>
    %c0_25 = arith.constant 0 : index
    %c0_26 = arith.constant 0 : index
    %c0_27 = arith.constant 0 : index
    %79 = vector.load %arg9[%c0_25, %c0_26, %c0_27] : memref<1x8x128xf32, #tpu.memory_space<vmem>>, vector<1x8x128xf32>
    %80 = vector.shape_cast %79 : vector<1x8x128xf32> to vector<8x128xf32>
    %81 = vector.shape_cast %78 : vector<8x128xf32> to vector<1x8x128xf32>
    tpu.vector_store %arg9[%c0_25, %c0_26, %c0_27], %81 {strides = array<i32>} : memref<1x8x128xf32, #tpu.memory_space<vmem>>, vector<1x8x128xf32>,
    return
  }
  func.func @transform_0(%arg0: i32) -> (i32, i32) {
    %c0_i32 = arith.constant 0 : i32
    %c0_i32_0 = arith.constant 0 : i32
    return %arg0, %c0_i32 : i32, i32
  }
  func.func @transform_1(%arg0: i32) -> (i32, i32) {
    %c0_i32 = arith.constant 0 : i32
    %c0_i32_0 = arith.constant 0 : i32
    %c0_i32_1 = arith.constant 0 : i32
    return %c0_i32, %c0_i32_0 : i32, i32
  }
  func.func @transform_2(%arg0: i32) -> (i32, i32) {
    %c0_i32 = arith.constant 0 : i32
    %c0_i32_0 = arith.constant 0 : i32
    %c0_i32_1 = arith.constant 0 : i32
    return %c0_i32, %c0_i32_0 : i32, i32
  }
  func.func @transform_3(%arg0: i32) -> (i32, i32) {
    %c0_i32 = arith.constant 0 : i32
    %c0_i32_0 = arith.constant 0 : i32
    %c0_i32_1 = arith.constant 0 : i32
    return %c0_i32, %c0_i32_0 : i32, i32
  }
  func.func @transform_4(%arg0: i32) -> (i32, i32) {
    %c0_i32 = arith.constant 0 : i32
    %c0_i32_0 = arith.constant 0 : i32
    %c0_i32_1 = arith.constant 0 : i32
    return %c0_i32, %c0_i32_0 : i32, i32
  }
  func.func @transform_5(%arg0: i32) -> (i32, i32) {
    %c0_i32 = arith.constant 0 : i32
    %c0_i32_0 = arith.constant 0 : i32
    %c0_i32_1 = arith.constant 0 : i32
    return %c0_i32, %c0_i32_0 : i32, i32
  }
  func.func @transform_6(%arg0: i32) -> (i32, i32) {
    %c0_i32 = arith.constant 0 : i32
    %c0_i32_0 = arith.constant 0 : i32
    %c0_i32_1 = arith.constant 0 : i32
    return %c0_i32, %c0_i32_0 : i32, i32
  }
  func.func @transform_7(%arg0: i32) -> (i32, i32) {
    %c0_i32 = arith.constant 0 : i32
    %c0_i32_0 = arith.constant 0 : i32
    %c0_i32_1 = arith.constant 0 : i32
    return %c0_i32, %c0_i32_0 : i32, i32
  }
  func.func @transform_8(%arg0: i32) -> (i32, i32, i32) {
    %c0_i32 = arith.constant 0 : i32
    %c0_i32_0 = arith.constant 0 : i32
    %c0_i32_1 = arith.constant 0 : i32
    return %arg0, %c0_i32, %c0_i32_0 : i32, i32, i32
  }
}

</mosaic_0001>

<llo_original>
// kernel: cnn_lenet_forward.1
$region0: #{cnn_lenet_forward.1}
  #allocation0 [shape = 'u32[]', space=smem, size = 0x4, offset = 0x4, fixed_abs, tag = 'smem constant byte address 0x4 - core index']
  #allocation1 [shape = 'u32[144,128]{1,0:T(1,128)}', space=vmem, size = 0x12000, scoped, tag = 'internal scratch']
  %s0 = inlined_call_operand.vmem [shape: f32[1568,64], index: 0, kind: input, shape index: {}]
  %s1 = inlined_call_operand.vmem [shape: f32[64,8], index: 1, kind: input, shape index: {}]
  %s2 = inlined_call_operand.vmem [shape: f32[200,16], index: 2, kind: input, shape index: {}]
  %s3 = inlined_call_operand.vmem [shape: f32[400,128], index: 3, kind: input, shape index: {}]
  %s4 = inlined_call_operand.vmem [shape: f32[128,128], index: 4, kind: input, shape index: {}]
  %s5 = inlined_call_operand.vmem [shape: f32[128,128], index: 5, kind: input, shape index: {}]
  %s6 = inlined_call_operand.vmem [shape: f32[208,784], index: 6, kind: input, shape index: {}]
  %s7 = inlined_call_operand.vmem [shape: f32[32,140], index: 7, kind: input, shape index: {}]
  %s8 = inlined_call_operand.vmem [shape: f32[2,8,128], index: 8, kind: output, shape index: {}]
  %s9 = sld [smem:[#allocation0]]
  $region65: #{cnn_lenet_forward.1} parent=0
    _
  %s11 = ssub.s32 1, %s9
  %s12 = scalar_select 0, %s11, %s9
  loop: start=0, step=1, limit=4
  $region2: #{cnn_lenet_forward.1} parent=0 // loop_pre_header
    _
  $region3: #{cnn_lenet_forward.1} parent=0 // loop_header
    %s14 = sphi 0, %s18
    %p15 = scmp.ge.s32.totalorder %s14, 4
    %s24 = sphi 0, %s26
    %s27 = sphi 0, %s24
    %s28 = sphi 0, %s27
    %s44 = sphi 0, %s28
    %s48 = sphi 0, %s48
    %s50 = sphi 0, %s48
    %s51 = sphi 0, %s50
    %s65 = sphi 0, %s51
    %s69 = sphi 0, %s69
    %s71 = sphi 0, %s69
    %s72 = sphi 0, %s71
    %s86 = sphi 0, %s72
    %s90 = sphi 0, %s90
    %s92 = sphi 0, %s90
    %s93 = sphi 0, %s92
    %s107 = sphi 0, %s93
    %s111 = sphi 0, %s111
    %s113 = sphi 0, %s111
    %s114 = sphi 0, %s113
    %s128 = sphi 0, %s114
    %s132 = sphi 0, %s132
    %s134 = sphi 0, %s132
    %s135 = sphi 0, %s134
    %s149 = sphi 0, %s135
    %s153 = sphi 0, %s153
    %s155 = sphi 0, %s153
    %s156 = sphi 0, %s155
    %s170 = sphi 0, %s156
    %s174 = sphi 0, %s174
    %s176 = sphi 0, %s174
    %s177 = sphi 0, %s176
    %s191 = sphi 0, %s177
    %s197 = sphi 0, %s199
    %s200 = sphi 0, %s197
    %s201 = sphi 0, %s200
    %s217 = sphi 0, %s201
  $region4: #{cnn_lenet_forward.1} parent=0 // loop_header_branch
    %17 = sbr.rel (%p15) target = $region8
  $region5: #{cnn_lenet_forward.1} parent=0 // loop_body
    %s19 = ssub.s32 %s14, 1
    %s20 = ssub.s32 %s14, 2
    %s21 = sadd.s32 %s14, 1
    %s22 = ssub.s32 %s14, %s21
    %p23 = scmp.eq.s32.totalorder %s22, 0
    %s25 = sadd.s32 %s24, 1
    %s26 = scalar_select %p23, %s24, %s25
    %p29 = pneg %p23
    %p30 = scmp.eq.s32.totalorder %s14, 1
    %p31 = por %p29, %p30
    %p32 = scmp.ne.s32.totalorder %s24, %s27
    %p33 = scmp.eq.s32.totalorder %s14, 0
    %p34 = por %p32, %p33
    %p35 = scmp.ne.s32.totalorder %s24, %s27
    %p36 = scmp.eq.s32.totalorder %s19, 1
    %p37 = por %p35, %p36
    %p38 = scmp.ne.s32.totalorder %s27, %s28
    %p39 = scmp.eq.s32.totalorder %s19, 0
    %p40 = por %p38, %p39
    %p41 = scmp.ne.s32.totalorder %s27, %s28
    %p42 = scmp.eq.s32.totalorder %s20, 1
    %p43 = por %p41, %p42
    %p45 = scmp.ne.s32.totalorder %s28, %s44
    %p46 = scmp.eq.s32.totalorder %s20, 0
    %p47 = por %p45, %p46
    %s49 = sadd.s32 %s48, 1
    %p52 = scmp.eq.s32.totalorder %s14, 1
    %p53 = scmp.ne.s32.totalorder %s48, %s50
    %p54 = scmp.eq.s32.totalorder %s14, 0
    %p55 = por %p53, %p54
    %p56 = scmp.ne.s32.totalorder %s48, %s50
    %p57 = scmp.eq.s32.totalorder %s19, 1
    %p58 = por %p56, %p57
    %p59 = scmp.ne.s32.totalorder %s50, %s51
    %p60 = scmp.eq.s32.totalorder %s19, 0
    %p61 = por %p59, %p60
    %p62 = scmp.ne.s32.totalorder %s50, %s51
    %p63 = scmp.eq.s32.totalorder %s20, 1
    %p64 = por %p62, %p63
    %p66 = scmp.ne.s32.totalorder %s51, %s65
    %p67 = scmp.eq.s32.totalorder %s20, 0
    %p68 = por %p66, %p67
    %s70 = sadd.s32 %s69, 1
    %p73 = scmp.eq.s32.totalorder %s14, 1
    %p74 = scmp.ne.s32.totalorder %s69, %s71
    %p75 = scmp.eq.s32.totalorder %s14, 0
    %p76 = por %p74, %p75
    %p77 = scmp.ne.s32.totalorder %s69, %s71
    %p78 = scmp.eq.s32.totalorder %s19, 1
    %p79 = por %p77, %p78
    %p80 = scmp.ne.s32.totalorder %s71, %s72
    %p81 = scmp.eq.s32.totalorder %s19, 0
    %p82 = por %p80, %p81
    %p83 = scmp.ne.s32.totalorder %s71, %s72
    %p84 = scmp.eq.s32.totalorder %s20, 1
    %p85 = por %p83, %p84
    %p87 = scmp.ne.s32.totalorder %s72, %s86
    %p88 = scmp.eq.s32.totalorder %s20, 0
    %p89 = por %p87, %p88
    %s91 = sadd.s32 %s90, 1
    %p94 = scmp.eq.s32.totalorder %s14, 1
    %p95 = scmp.ne.s32.totalorder %s90, %s92
    %p96 = scmp.eq.s32.totalorder %s14, 0
    %p97 = por %p95, %p96
    %p98 = scmp.ne.s32.totalorder %s90, %s92
    %p99 = scmp.eq.s32.totalorder %s19, 1
    %p100 = por %p98, %p99
    %p101 = scmp.ne.s32.totalorder %s92, %s93
    %p102 = scmp.eq.s32.totalorder %s19, 0
    %p103 = por %p101, %p102
    %p104 = scmp.ne.s32.totalorder %s92, %s93
    %p105 = scmp.eq.s32.totalorder %s20, 1
    %p106 = por %p104, %p105
    %p108 = scmp.ne.s32.totalorder %s93, %s107
    %p109 = scmp.eq.s32.totalorder %s20, 0
    %p110 = por %p108, %p109
    %s112 = sadd.s32 %s111, 1
    %p115 = scmp.eq.s32.totalorder %s14, 1
    %p116 = scmp.ne.s32.totalorder %s111, %s113
    %p117 = scmp.eq.s32.totalorder %s14, 0
    %p118 = por %p116, %p117
    %p119 = scmp.ne.s32.totalorder %s111, %s113
    %p120 = scmp.eq.s32.totalorder %s19, 1
    %p121 = por %p119, %p120
    %p122 = scmp.ne.s32.totalorder %s113, %s114
    %p123 = scmp.eq.s32.totalorder %s19, 0
    %p124 = por %p122, %p123
    %p125 = scmp.ne.s32.totalorder %s113, %s114
    %p126 = scmp.eq.s32.totalorder %s20, 1
    %p127 = por %p125, %p126
    %p129 = scmp.ne.s32.totalorder %s114, %s128
    %p130 = scmp.eq.s32.totalorder %s20, 0
    %p131 = por %p129, %p130
    %s133 = sadd.s32 %s132, 1
    %p136 = scmp.eq.s32.totalorder %s14, 1
    %p137 = scmp.ne.s32.totalorder %s132, %s134
    %p138 = scmp.eq.s32.totalorder %s14, 0
    %p139 = por %p137, %p138
    %p140 = scmp.ne.s32.totalorder %s132, %s134
    %p141 = scmp.eq.s32.totalorder %s19, 1
    %p142 = por %p140, %p141
    %p143 = scmp.ne.s32.totalorder %s134, %s135
    %p144 = scmp.eq.s32.totalorder %s19, 0
    %p145 = por %p143, %p144
    %p146 = scmp.ne.s32.totalorder %s134, %s135
    %p147 = scmp.eq.s32.totalorder %s20, 1
    %p148 = por %p146, %p147
    %p150 = scmp.ne.s32.totalorder %s135, %s149
    %p151 = scmp.eq.s32.totalorder %s20, 0
    %p152 = por %p150, %p151
    %s154 = sadd.s32 %s153, 1
    %p157 = scmp.eq.s32.totalorder %s14, 1
    %p158 = scmp.ne.s32.totalorder %s153, %s155
    %p159 = scmp.eq.s32.totalorder %s14, 0
    %p160 = por %p158, %p159
    %p161 = scmp.ne.s32.totalorder %s153, %s155
    %p162 = scmp.eq.s32.totalorder %s19, 1
    %p163 = por %p161, %p162
    %p164 = scmp.ne.s32.totalorder %s155, %s156
    %p165 = scmp.eq.s32.totalorder %s19, 0
    %p166 = por %p164, %p165
    %p167 = scmp.ne.s32.totalorder %s155, %s156
    %p168 = scmp.eq.s32.totalorder %s20, 1
    %p169 = por %p167, %p168
    %p171 = scmp.ne.s32.totalorder %s156, %s170
    %p172 = scmp.eq.s32.totalorder %s20, 0
    %p173 = por %p171, %p172
    %s175 = sadd.s32 %s174, 1
    %p178 = scmp.eq.s32.totalorder %s14, 1
    %p179 = scmp.ne.s32.totalorder %s174, %s176
    %p180 = scmp.eq.s32.totalorder %s14, 0
    %p181 = por %p179, %p180
    %p182 = scmp.ne.s32.totalorder %s174, %s176
    %p183 = scmp.eq.s32.totalorder %s19, 1
    %p184 = por %p182, %p183
    %p185 = scmp.ne.s32.totalorder %s176, %s177
    %p186 = scmp.eq.s32.totalorder %s19, 0
    %p187 = por %p185, %p186
    %p188 = scmp.ne.s32.totalorder %s176, %s177
    %p189 = scmp.eq.s32.totalorder %s20, 1
    %p190 = por %p188, %p189
    %p192 = scmp.ne.s32.totalorder %s177, %s191
    %p193 = scmp.eq.s32.totalorder %s20, 0
    %p194 = por %p192, %p193
    %s195 = ssub.s32 %s14, %s21
    %p196 = scmp.eq.s32.totalorder %s195, 0
    %s198 = sadd.s32 %s197, 1
    %s199 = scalar_select %p196, %s197, %s198
    %p202 = pneg %p196
    %p203 = scmp.eq.s32.totalorder %s14, 1
    %p204 = por %p202, %p203
    %p205 = scmp.ne.s32.totalorder %s197, %s200
    %p206 = scmp.eq.s32.totalorder %s14, 0
    %p207 = por %p205, %p206
    %p208 = scmp.ne.s32.totalorder %s197, %s200
    %p209 = scmp.eq.s32.totalorder %s19, 1
    %p210 = por %p208, %p209
    %p211 = scmp.ne.s32.totalorder %s200, %s201
    %p212 = scmp.eq.s32.totalorder %s19, 0
    %p213 = por %p211, %p212
    %p214 = scmp.ne.s32.totalorder %s200, %s201
    %p215 = scmp.eq.s32.totalorder %s20, 1
    %p216 = por %p214, %p215
    %p218 = scmp.ne.s32.totalorder %s201, %s217
    %p219 = scmp.eq.s32.totalorder %s20, 0
    %p220 = por %p218, %p219
    %p221 = scmp.le.s32.totalorder 1, %s14
    %p222 = scmp.lt.s32.totalorder %s14, 3
    %p223 = pnand %p221, %p222
    %p224 = pneg %p223
    // Predicated region
    $region9: #{cnn_lenet_forward.1} parent=5 // pred_check
      _
    $region10: #{cnn_lenet_forward.1} parent=5 // pred_check_branch
      %226 = sbr.rel (%p223) target = $region12
    $region11: #{cnn_lenet_forward.1} parent=5 // pred_region
      %s227 = ssub.s32 %s14, 1
      // Predicated region
      $region13: #{cnn_lenet_forward.1} parent=11 // pred_check
        %p228 = pneg %p61
      $region14: #{cnn_lenet_forward.1} parent=11 // pred_check_branch
        %230 = sbr.rel (%p228) target = $region16
      $region15: #{cnn_lenet_forward.1} parent=11 // pred_region
        _
      $region16: #{cnn_lenet_forward.1} parent=11 // pred_fallthru
        _
      // Predicated region
      $region17: #{cnn_lenet_forward.1} parent=11 // pred_check
        %p231 = pneg %p82
      $region18: #{cnn_lenet_forward.1} parent=11 // pred_check_branch
        %233 = sbr.rel (%p231) target = $region20
      $region19: #{cnn_lenet_forward.1} parent=11 // pred_region
        _
      $region20: #{cnn_lenet_forward.1} parent=11 // pred_fallthru
        _
      // Predicated region
      $region21: #{cnn_lenet_forward.1} parent=11 // pred_check
        %p234 = pneg %p103
      $region22: #{cnn_lenet_forward.1} parent=11 // pred_check_branch
        %236 = sbr.rel (%p234) target = $region24
      $region23: #{cnn_lenet_forward.1} parent=11 // pred_region
        _
      $region24: #{cnn_lenet_forward.1} parent=11 // pred_fallthru
        _
      // Predicated region
      $region25: #{cnn_lenet_forward.1} parent=11 // pred_check
        %p237 = pneg %p124
      $region26: #{cnn_lenet_forward.1} parent=11 // pred_check_branch
        %239 = sbr.rel (%p237) target = $region28
      $region27: #{cnn_lenet_forward.1} parent=11 // pred_region
        _
      $region28: #{cnn_lenet_forward.1} parent=11 // pred_fallthru
        _
      // Predicated region
      $region29: #{cnn_lenet_forward.1} parent=11 // pred_check
        %p240 = pneg %p145
      $region30: #{cnn_lenet_forward.1} parent=11 // pred_check_branch
        %242 = sbr.rel (%p240) target = $region32
      $region31: #{cnn_lenet_forward.1} parent=11 // pred_region
        _
      $region32: #{cnn_lenet_forward.1} parent=11 // pred_fallthru
        _
      // Predicated region
      $region33: #{cnn_lenet_forward.1} parent=11 // pred_check
        %p243 = pneg %p166
      $region34: #{cnn_lenet_forward.1} parent=11 // pred_check_branch
        %245 = sbr.rel (%p243) target = $region36
      $region35: #{cnn_lenet_forward.1} parent=11 // pred_region
        _
      $region36: #{cnn_lenet_forward.1} parent=11 // pred_fallthru
        _
      // Predicated region
      $region37: #{cnn_lenet_forward.1} parent=11 // pred_check
        %p246 = pneg %p187
      $region38: #{cnn_lenet_forward.1} parent=11 // pred_check_branch
        %248 = sbr.rel (%p246) target = $region40
      $region39: #{cnn_lenet_forward.1} parent=11 // pred_region
        _
      $region40: #{cnn_lenet_forward.1} parent=11 // pred_fallthru
        _
    $region12: #{cnn_lenet_forward.1} parent=5 // pred_fallthru
      _
    %p249 = scmp.lt.s32.totalorder %s14, 2
    // Predicated region
    $region41: #{cnn_lenet_forward.1} parent=5 // pred_check
      %p250 = pneg %p249
    $region42: #{cnn_lenet_forward.1} parent=5 // pred_check_branch
      %252 = sbr.rel (%p250) target = $region44
    $region43: #{cnn_lenet_forward.1} parent=5 // pred_region
      // Predicated region
      $region45: #{cnn_lenet_forward.1} parent=43 // pred_check
        %p253 = pneg %p34
      $region46: #{cnn_lenet_forward.1} parent=43 // pred_check_branch
        %255 = sbr.rel (%p253) target = $region48
      $region47: #{cnn_lenet_forward.1} parent=43 // pred_region
        %s256 = smul.u32 98, %s14
        %p257 = scmp.lt.s32.totalorder %s256, 195
        %s258 = scalar_select %p257, %s256, 195
        %s259 = smul.addr %s258, 8
        %s260 = scalar_lea.vmem %s0, %s259
        %s261 = smul.u32 98, %s14
      $region48: #{cnn_lenet_forward.1} parent=43 // pred_fallthru
        _
    $region44: #{cnn_lenet_forward.1} parent=5 // pred_fallthru
      _
    %p262 = scmp.le.s32.totalorder 1, %s14
    %p263 = scmp.lt.s32.totalorder %s14, 3
    %p264 = pnand %p262, %p263
    %p265 = pneg %p264
    // Predicated region
    $region49: #{cnn_lenet_forward.1} parent=5 // pred_check
      _
    $region50: #{cnn_lenet_forward.1} parent=5 // pred_check_branch
      %267 = sbr.rel (%p264) target = $region52
    $region51: #{cnn_lenet_forward.1} parent=5 // pred_region
      %s268 = ssub.s32 %s14, 1
      %s269 = smul.u32 98, %s19
      %p270 = scmp.lt.s32.totalorder %s269, 195
      %s271 = scalar_select %p270, %s269, 195
      %s272 = smul.addr %s271, 8
      %s273 = scalar_lea.vmem %s0, %s272
      %p274 = pneg %p40
      %p275 = pneg %p37
      %p276 = pneg %p61
      %p277 = pneg %p58
      %p278 = pneg %p82
      %p279 = pneg %p79
      %p280 = pneg %p103
      %p281 = pneg %p100
      %p282 = pneg %p124
      %p283 = pneg %p121
      %p284 = pneg %p145
      %p285 = pneg %p142
      %p286 = pneg %p166
      %p287 = pneg %p163
      %p288 = pneg %p187
      %p289 = pneg %p184
      %p290 = pneg %p213
      %p291 = pneg %p210
      %p292 = scmp.lt.s32.totalorder %s19, 1
      %s293 = scalar_select %p292, %s19, 1
      %s294 = smul.addr %s293, 8
      %s295 = scalar_lea.vmem %s8, %s294
      %s296 = smul.u32 98, %s19
      %p297 = scmp.lt.s32.totalorder %s296, 195
      %s298 = scalar_select %p297, %s296, 195
      %s299 = smul.addr %s298, 8
      %s300 = scalar_lea.vmem %s0, %s299
      %s301 = smul.u32 98, %s19
      %p302 = scmp.lt.s32.totalorder %s19, 1
      %s303 = scalar_select %p302, %s19, 1
      %s304 = smul.addr %s303, 8
      %s305 = scalar_lea.vmem %s8, %s304
      %v306 = vld [vmem:[%s300] sm:$0xff]
      %v307 = vld [vmem:[%s300 + $0x8] sm:$0xff]
      %v308 = vld [vmem:[%s300 + $0x10] sm:$0xff]
      %v309 = vld [vmem:[%s300 + $0x18] sm:$0xff]
      %v310 = vld [vmem:[%s300 + $0x20] sm:$0xff]
      %v311 = vld [vmem:[%s300 + $0x28] sm:$0xff]
      %v312 = vld [vmem:[%s300 + $0x30] sm:$0xff]
      %v313 = vld [vmem:[%s300 + $0x38] sm:$0xff]
      %v314 = vld [vmem:[%s300 + $0x40] sm:$0xff]
      %v315 = vld [vmem:[%s300 + $0x48] sm:$0xff]
      %v316 = vld [vmem:[%s300 + $0x50] sm:$0xff]
      %v317 = vld [vmem:[%s300 + $0x58] sm:$0xff]
      %v318 = vld [vmem:[%s300 + $0x60] sm:$0xff]
      %v319 = vld [vmem:[%s300 + $0x68] sm:$0xff]
      %v320 = vld [vmem:[%s300 + $0x70] sm:$0xff]
      %v321 = vld [vmem:[%s300 + $0x78] sm:$0xff]
      %v322 = vld [vmem:[%s300 + $0x80] sm:$0xff]
      %v323 = vld [vmem:[%s300 + $0x88] sm:$0xff]
      %v324 = vld [vmem:[%s300 + $0x90] sm:$0xff]
      %v325 = vld [vmem:[%s300 + $0x98] sm:$0xff]
      %v326 = vld [vmem:[%s300 + $0xa0] sm:$0xff]
      %v327 = vld [vmem:[%s300 + $0xa8] sm:$0xff]
      %v328 = vld [vmem:[%s300 + $0xb0] sm:$0xff]
      %v329 = vld [vmem:[%s300 + $0xb8] sm:$0xff]
      %v330 = vld [vmem:[%s300 + $0xc0] sm:$0xff]
      %v331 = vld [vmem:[%s300 + $0xc8] sm:$0xff]
      %v332 = vld [vmem:[%s300 + $0xd0] sm:$0xff]
      %v333 = vld [vmem:[%s300 + $0xd8] sm:$0xff]
      %v334 = vld [vmem:[%s300 + $0xe0] sm:$0xff]
      %v335 = vld [vmem:[%s300 + $0xe8] sm:$0xff]
      %v336 = vld [vmem:[%s300 + $0xf0] sm:$0xff]
      %v337 = vld [vmem:[%s300 + $0xf8] sm:$0xff]
      %v338 = vld [vmem:[%s300 + $0x100] sm:$0xff]
      %v339 = vld [vmem:[%s300 + $0x108] sm:$0xff]
      %v340 = vld [vmem:[%s300 + $0x110] sm:$0xff]
      %v341 = vld [vmem:[%s300 + $0x118] sm:$0xff]
      %v342 = vld [vmem:[%s300 + $0x120] sm:$0xff]
      %v343 = vld [vmem:[%s300 + $0x128] sm:$0xff]
      %v344 = vld [vmem:[%s300 + $0x130] sm:$0xff]
      %v345 = vld [vmem:[%s300 + $0x138] sm:$0xff]
      %v346 = vld [vmem:[%s300 + $0x140] sm:$0xff]
      %v347 = vld [vmem:[%s300 + $0x148] sm:$0xff]
      %v348 = vld [vmem:[%s300 + $0x150] sm:$0xff]
      %v349 = vld [vmem:[%s300 + $0x158] sm:$0xff]
      %v350 = vld [vmem:[%s300 + $0x160] sm:$0xff]
      %v351 = vld [vmem:[%s300 + $0x168] sm:$0xff]
      %v352 = vld [vmem:[%s300 + $0x170] sm:$0xff]
      %v353 = vld [vmem:[%s300 + $0x178] sm:$0xff]
      %v354 = vld [vmem:[%s300 + $0x180] sm:$0xff]
      %v355 = vld [vmem:[%s300 + $0x188] sm:$0xff]
      %v356 = vld [vmem:[%s300 + $0x190] sm:$0xff]
      %v357 = vld [vmem:[%s300 + $0x198] sm:$0xff]
      %v358 = vld [vmem:[%s300 + $0x1a0] sm:$0xff]
      %v359 = vld [vmem:[%s300 + $0x1a8] sm:$0xff]
      %v360 = vld [vmem:[%s300 + $0x1b0] sm:$0xff]
      %v361 = vld [vmem:[%s300 + $0x1b8] sm:$0xff]
      %v362 = vld [vmem:[%s300 + $0x1c0] sm:$0xff]
      %v363 = vld [vmem:[%s300 + $0x1c8] sm:$0xff]
      %v364 = vld [vmem:[%s300 + $0x1d0] sm:$0xff]
      %v365 = vld [vmem:[%s300 + $0x1d8] sm:$0xff]
      %v366 = vld [vmem:[%s300 + $0x1e0] sm:$0xff]
      %v367 = vld [vmem:[%s300 + $0x1e8] sm:$0xff]
      %v368 = vld [vmem:[%s300 + $0x1f0] sm:$0xff]
      %v369 = vld [vmem:[%s300 + $0x1f8] sm:$0xff]
      %v370 = vld [vmem:[%s300 + $0x200] sm:$0xff]
      %v371 = vld [vmem:[%s300 + $0x208] sm:$0xff]
      %v372 = vld [vmem:[%s300 + $0x210] sm:$0xff]
      %v373 = vld [vmem:[%s300 + $0x218] sm:$0xff]
      %v374 = vld [vmem:[%s300 + $0x220] sm:$0xff]
      %v375 = vld [vmem:[%s300 + $0x228] sm:$0xff]
      %v376 = vld [vmem:[%s300 + $0x230] sm:$0xff]
      %v377 = vld [vmem:[%s300 + $0x238] sm:$0xff]
      %v378 = vld [vmem:[%s300 + $0x240] sm:$0xff]
      %v379 = vld [vmem:[%s300 + $0x248] sm:$0xff]
      %v380 = vld [vmem:[%s300 + $0x250] sm:$0xff]
      %v381 = vld [vmem:[%s300 + $0x258] sm:$0xff]
      %v382 = vld [vmem:[%s300 + $0x260] sm:$0xff]
      %v383 = vld [vmem:[%s300 + $0x268] sm:$0xff]
      %v384 = vld [vmem:[%s300 + $0x270] sm:$0xff]
      %v385 = vld [vmem:[%s300 + $0x278] sm:$0xff]
      %v386 = vld [vmem:[%s300 + $0x280] sm:$0xff]
      %v387 = vld [vmem:[%s300 + $0x288] sm:$0xff]
      %v388 = vld [vmem:[%s300 + $0x290] sm:$0xff]
      %v389 = vld [vmem:[%s300 + $0x298] sm:$0xff]
      %v390 = vld [vmem:[%s300 + $0x2a0] sm:$0xff]
      %v391 = vld [vmem:[%s300 + $0x2a8] sm:$0xff]
      %v392 = vld [vmem:[%s300 + $0x2b0] sm:$0xff]
      %v393 = vld [vmem:[%s300 + $0x2b8] sm:$0xff]
      %v394 = vld [vmem:[%s300 + $0x2c0] sm:$0xff]
      %v395 = vld [vmem:[%s300 + $0x2c8] sm:$0xff]
      %v396 = vld [vmem:[%s300 + $0x2d0] sm:$0xff]
      %v397 = vld [vmem:[%s300 + $0x2d8] sm:$0xff]
      %v398 = vld [vmem:[%s300 + $0x2e0] sm:$0xff]
      %v399 = vld [vmem:[%s300 + $0x2e8] sm:$0xff]
      %v400 = vld [vmem:[%s300 + $0x2f0] sm:$0xff]
      %v401 = vld [vmem:[%s300 + $0x2f8] sm:$0xff]
      %v402 = vld [vmem:[%s300 + $0x300] sm:$0xff]
      %v403 = vld [vmem:[%s300 + $0x308] sm:$0xff]
      %v404 = vld [vmem:[%s1] sm:$0xff]
      %v405 = vld [vmem:[%s1 + $0x8] sm:$0xff]
      %v406 = vld [vmem:[%s1 + $0x10] sm:$0xff]
      %v407 = vld [vmem:[%s1 + $0x18] sm:$0xff]
      %v408 = vld [vmem:[%s1 + $0x20] sm:$0xff]
      %v409 = vld [vmem:[%s1 + $0x28] sm:$0xff]
      %v410 = vld [vmem:[%s1 + $0x30] sm:$0xff]
      %v411 = vld [vmem:[%s1 + $0x38] sm:$0xff]
      %vm412 = vcmask 523264
      %v414 = vsel %vm412, %v306, 0
      %v417 = vsel %vm412, %v307, 0
      %v420 = vsel %vm412, %v308, 0
      %v423 = vsel %vm412, %v309, 0
      %v426 = vsel %vm412, %v310, 0
      %v429 = vsel %vm412, %v311, 0
      %v432 = vsel %vm412, %v312, 0
      %v435 = vsel %vm412, %v313, 0
      %v438 = vsel %vm412, %v314, 0
      %v441 = vsel %vm412, %v315, 0
      %v444 = vsel %vm412, %v316, 0
      %v447 = vsel %vm412, %v317, 0
      %v450 = vsel %vm412, %v318, 0
      %v453 = vsel %vm412, %v319, 0
      %v456 = vsel %vm412, %v320, 0
      %v459 = vsel %vm412, %v321, 0
      %v462 = vsel %vm412, %v322, 0
      %v465 = vsel %vm412, %v323, 0
      %v468 = vsel %vm412, %v324, 0
      %v471 = vsel %vm412, %v325, 0
      %v474 = vsel %vm412, %v326, 0
      %v477 = vsel %vm412, %v327, 0
      %v480 = vsel %vm412, %v328, 0
      %v483 = vsel %vm412, %v329, 0
      %v486 = vsel %vm412, %v330, 0
      %v489 = vsel %vm412, %v331, 0
      %v492 = vsel %vm412, %v332, 0
      %v495 = vsel %vm412, %v333, 0
      %v498 = vsel %vm412, %v334, 0
      %v501 = vsel %vm412, %v335, 0
      %v504 = vsel %vm412, %v336, 0
      %v507 = vsel %vm412, %v337, 0
      %v510 = vsel %vm412, %v338, 0
      %v513 = vsel %vm412, %v339, 0
      %v516 = vsel %vm412, %v340, 0
      %v519 = vsel %vm412, %v341, 0
      %v522 = vsel %vm412, %v342, 0
      %v525 = vsel %vm412, %v343, 0
      %v528 = vsel %vm412, %v344, 0
      %v531 = vsel %vm412, %v345, 0
      %v534 = vsel %vm412, %v346, 0
      %v537 = vsel %vm412, %v347, 0
      %v540 = vsel %vm412, %v348, 0
      %v543 = vsel %vm412, %v349, 0
      %v546 = vsel %vm412, %v350, 0
      %v549 = vsel %vm412, %v351, 0
      %v552 = vsel %vm412, %v352, 0
      %v555 = vsel %vm412, %v353, 0
      %v558 = vsel %vm412, %v354, 0
      %v561 = vsel %vm412, %v355, 0
      %v564 = vsel %vm412, %v356, 0
      %v567 = vsel %vm412, %v357, 0
      %v570 = vsel %vm412, %v358, 0
      %v573 = vsel %vm412, %v359, 0
      %v576 = vsel %vm412, %v360, 0
      %v579 = vsel %vm412, %v361, 0
      %v582 = vsel %vm412, %v362, 0
      %v585 = vsel %vm412, %v363, 0
      %v588 = vsel %vm412, %v364, 0
      %v591 = vsel %vm412, %v365, 0
      %v594 = vsel %vm412, %v366, 0
      %v597 = vsel %vm412, %v367, 0
      %v600 = vsel %vm412, %v368, 0
      %v603 = vsel %vm412, %v369, 0
      %v606 = vsel %vm412, %v370, 0
      %v609 = vsel %vm412, %v371, 0
      %v612 = vsel %vm412, %v372, 0
      %v615 = vsel %vm412, %v373, 0
      %v618 = vsel %vm412, %v374, 0
      %v621 = vsel %vm412, %v375, 0
      %v624 = vsel %vm412, %v376, 0
      %v627 = vsel %vm412, %v377, 0
      %v630 = vsel %vm412, %v378, 0
      %v633 = vsel %vm412, %v379, 0
      %v636 = vsel %vm412, %v380, 0
      %v639 = vsel %vm412, %v381, 0
      %v642 = vsel %vm412, %v382, 0
      %v645 = vsel %vm412, %v383, 0
      %v648 = vsel %vm412, %v384, 0
      %v651 = vsel %vm412, %v385, 0
      %v654 = vsel %vm412, %v386, 0
      %v657 = vsel %vm412, %v387, 0
      %v660 = vsel %vm412, %v388, 0
      %v663 = vsel %vm412, %v389, 0
      %v666 = vsel %vm412, %v390, 0
      %v669 = vsel %vm412, %v391, 0
      %v672 = vsel %vm412, %v392, 0
      %v675 = vsel %vm412, %v393, 0
      %v678 = vsel %vm412, %v394, 0
      %v681 = vsel %vm412, %v395, 0
      %v684 = vsel %vm412, %v396, 0
      %v687 = vsel %vm412, %v397, 0
      %v690 = vsel %vm412, %v398, 0
      %v693 = vsel %vm412, %v399, 0
      %v696 = vsel %vm412, %v400, 0
      %v699 = vsel %vm412, %v401, 0
      %v702 = vsel %vm412, %v402, 0
      %v705 = vsel %vm412, %v403, 0
      %707 = vmatprep.subr.mxu0 0.0
      %708 = vmatpush1.msra.mxu0 0.0
      %709 = vmatprep.subr.mxu0 0.0
      %710 = vmatpush1.msra.mxu0 0.0
      %711 = vmatprep.subr.mxu0 0.0
      %712 = vmatpush1.msra.mxu0 0.0
      %713 = vmatprep.subr.mxu0 0.0
      %714 = vmatpush1.msra.mxu0 0.0
      %715 = vmatprep.subr.mxu0 0.0
      %716 = vmatpush1.msra.mxu0 0.0
      %717 = vmatprep.subr.mxu0 0.0
      %718 = vmatpush1.msra.mxu0 0.0
      %719 = vmatprep.subr.mxu0 0.0
      %720 = vmatpush1.msra.mxu0 0.0
      %721 = vmatprep.subr.mxu0 0.0
      %722 = vmatpush1.msra.mxu0 0.0
      %723 = vmatprep.subr.mxu0 0.0
      %724 = vmatpush1.msra.mxu0 %v411
      %725 = vmatprep.subr.mxu0 0.0
      %726 = vmatpush1.msra.mxu0 %v410
      %727 = vmatprep.subr.mxu0 0.0
      %728 = vmatpush1.msra.mxu0 %v409
      %729 = vmatprep.subr.mxu0 0.0
      %730 = vmatpush1.msra.mxu0 %v408
      %731 = vmatprep.subr.mxu0 0.0
      %732 = vmatpush1.msra.mxu0 %v407
      %733 = vmatprep.subr.mxu0 0.0
      %734 = vmatpush1.msra.mxu0 %v406
      %735 = vmatprep.subr.mxu0 0.0
      %736 = vmatpush1.msra.mxu0 %v405
      %737 = vmatprep.subr.mxu0 0.0
      %738 = vmatpush1.msra.mxu0 %v404
      %739 = vmatprep.subr.mxu0 0.0
      %740 = vmatpush2.msra.mxu0 0.0
      %741 = vmatprep.subr.mxu0 0.0
      %742 = vmatpush2.msra.mxu0 0.0
      %743 = vmatprep.subr.mxu0 0.0
      %744 = vmatpush2.msra.mxu0 0.0
      %745 = vmatprep.subr.mxu0 0.0
      %746 = vmatpush2.msra.mxu0 0.0
      %747 = vmatprep.subr.mxu0 0.0
      %748 = vmatpush2.msra.mxu0 0.0
      %749 = vmatprep.subr.mxu0 0.0
      %750 = vmatpush2.msra.mxu0 0.0
      %751 = vmatprep.subr.mxu0 0.0
      %752 = vmatpush2.msra.mxu0 0.0
      %753 = vmatprep.subr.mxu0 0.0
      %754 = vmatpush2.msra.mxu0 0.0
      %755 = vmatprep.subr.mxu0 0.0
      %756 = vmatpush2.msra.mxu0 0.0
      %757 = vmatprep.subr.mxu0 0.0
      %758 = vmatpush2.msra.mxu0 0.0
      %759 = vmatprep.subr.mxu0 0.0
      %760 = vmatpush2.msra.mxu0 0.0
      %761 = vmatprep.subr.mxu0 0.0
      %762 = vmatpush2.msra.mxu0 0.0
      %763 = vmatprep.subr.mxu0 0.0
      %764 = vmatpush2.msra.mxu0 0.0
      %765 = vmatprep.subr.mxu0 0.0
      %766 = vmatpush2.msra.mxu0 0.0
      %767 = vmatprep.subr.mxu0 0.0
      %768 = vmatpush2.msra.mxu0 0.0
      %769 = vmatprep.subr.mxu0 0.0
      %770 = vmatpush2.msra.mxu0 0.0
      %771 = vmatprep.mubr.f32.mxu0 0.0
      %772 = vmatmul.mubr.f32.gmra.mxu0 %v414
      %v773 = vpop.f32.mrf.mxu0
      %v774 = vadd.f32 0.0, %v773
      %v775 = vpop.f32.mrf.mxu0
      %776 = vmatprep.mubr.f32.mxu0 0.0
      %777 = vmatmul.mubr.f32.gmra.mxu0 %v417
      %v778 = vpop.f32.mrf.mxu0
      %v779 = vadd.f32 0.0, %v778
      %v780 = vpop.f32.mrf.mxu0
      %781 = vmatprep.mubr.f32.mxu0 0.0
      %782 = vmatmul.mubr.f32.gmra.mxu0 %v420
      %v783 = vpop.f32.mrf.mxu0
      %v784 = vadd.f32 0.0, %v783
      %v785 = vpop.f32.mrf.mxu0
      %786 = vmatprep.mubr.f32.mxu0 0.0
      %787 = vmatmul.mubr.f32.gmra.mxu0 %v423
      %v788 = vpop.f32.mrf.mxu0
      %v789 = vadd.f32 0.0, %v788
      %v790 = vpop.f32.mrf.mxu0
      %791 = vmatprep.mubr.f32.mxu0 0.0
      %792 = vmatmul.mubr.f32.gmra.mxu0 %v426
      %v793 = vpop.f32.mrf.mxu0
      %v794 = vadd.f32 0.0, %v793
      %v795 = vpop.f32.mrf.mxu0
      %796 = vmatprep.mubr.f32.mxu0 0.0
      %797 = vmatmul.mubr.f32.gmra.mxu0 %v429
      %v798 = vpop.f32.mrf.mxu0
      %v799 = vadd.f32 0.0, %v798
      %v800 = vpop.f32.mrf.mxu0
      %801 = vmatprep.mubr.f32.mxu0 0.0
      %802 = vmatmul.mubr.f32.gmra.mxu0 %v432
      %v803 = vpop.f32.mrf.mxu0
      %v804 = vadd.f32 0.0, %v803
      %v805 = vpop.f32.mrf.mxu0
      %806 = vmatprep.mubr.f32.mxu0 0.0
      %807 = vmatmul.mubr.f32.gmra.mxu0 %v435
      %v808 = vpop.f32.mrf.mxu0
      %v809 = vadd.f32 0.0, %v808
      %v810 = vpop.f32.mrf.mxu0
      %811 = vmatprep.mubr.f32.mxu0 0.0
      %812 = vmatmul.mubr.f32.gmra.mxu0 %v438
      %v813 = vpop.f32.mrf.mxu0
      %v814 = vadd.f32 0.0, %v813
      %v815 = vpop.f32.mrf.mxu0
      %816 = vmatprep.mubr.f32.mxu0 0.0
      %817 = vmatmul.mubr.f32.gmra.mxu0 %v441
      %v818 = vpop.f32.mrf.mxu0
      %v819 = vadd.f32 0.0, %v818
      %v820 = vpop.f32.mrf.mxu0
      %821 = vmatprep.mubr.f32.mxu0 0.0
      %822 = vmatmul.mubr.f32.gmra.mxu0 %v444
      %v823 = vpop.f32.mrf.mxu0
      %v824 = vadd.f32 0.0, %v823
      %v825 = vpop.f32.mrf.mxu0
      %826 = vmatprep.mubr.f32.mxu0 0.0
      %827 = vmatmul.mubr.f32.gmra.mxu0 %v447
      %v828 = vpop.f32.mrf.mxu0
      %v829 = vadd.f32 0.0, %v828
      %v830 = vpop.f32.mrf.mxu0
      %831 = vmatprep.mubr.f32.mxu0 0.0
      %832 = vmatmul.mubr.f32.gmra.mxu0 %v450
      %v833 = vpop.f32.mrf.mxu0
      %v834 = vadd.f32 0.0, %v833
      %v835 = vpop.f32.mrf.mxu0
      %836 = vmatprep.mubr.f32.mxu0 0.0
      %837 = vmatmul.mubr.f32.gmra.mxu0 %v453
      %v838 = vpop.f32.mrf.mxu0
      %v839 = vadd.f32 0.0, %v838
      %v840 = vpop.f32.mrf.mxu0
      %841 = vmatprep.mubr.f32.mxu0 0.0
      %842 = vmatmul.mubr.f32.gmra.mxu0 %v456
      %v843 = vpop.f32.mrf.mxu0
      %v844 = vadd.f32 0.0, %v843
      %v845 = vpop.f32.mrf.mxu0
      %846 = vmatprep.mubr.f32.mxu0 0.0
      %847 = vmatmul.mubr.f32.gmra.mxu0 %v459
      %v848 = vpop.f32.mrf.mxu0
      %v849 = vadd.f32 0.0, %v848
      %v850 = vpop.f32.mrf.mxu0
      %851 = vmatprep.mubr.f32.mxu0 0.0
      %852 = vmatmul.mubr.f32.gmra.mxu0 %v462
      %v853 = vpop.f32.mrf.mxu0
      %v854 = vadd.f32 0.0, %v853
      %v855 = vpop.f32.mrf.mxu0
      %856 = vmatprep.mubr.f32.mxu0 0.0
      %857 = vmatmul.mubr.f32.gmra.mxu0 %v465
      %v858 = vpop.f32.mrf.mxu0
      %v859 = vadd.f32 0.0, %v858
      %v860 = vpop.f32.mrf.mxu0
      %861 = vmatprep.mubr.f32.mxu0 0.0
      %862 = vmatmul.mubr.f32.gmra.mxu0 %v468
      %v863 = vpop.f32.mrf.mxu0
      %v864 = vadd.f32 0.0, %v863
      %v865 = vpop.f32.mrf.mxu0
      %866 = vmatprep.mubr.f32.mxu0 0.0
      %867 = vmatmul.mubr.f32.gmra.mxu0 %v471
      %v868 = vpop.f32.mrf.mxu0
      %v869 = vadd.f32 0.0, %v868
      %v870 = vpop.f32.mrf.mxu0
      %871 = vmatprep.mubr.f32.mxu0 0.0
      %872 = vmatmul.mubr.f32.gmra.mxu0 %v474
      %v873 = vpop.f32.mrf.mxu0
      %v874 = vadd.f32 0.0, %v873
      %v875 = vpop.f32.mrf.mxu0
      %876 = vmatprep.mubr.f32.mxu0 0.0
      %877 = vmatmul.mubr.f32.gmra.mxu0 %v477
      %v878 = vpop.f32.mrf.mxu0
      %v879 = vadd.f32 0.0, %v878
      %v880 = vpop.f32.mrf.mxu0
      %881 = vmatprep.mubr.f32.mxu0 0.0
      %882 = vmatmul.mubr.f32.gmra.mxu0 %v480
      %v883 = vpop.f32.mrf.mxu0
      %v884 = vadd.f32 0.0, %v883
      %v885 = vpop.f32.mrf.mxu0
      %886 = vmatprep.mubr.f32.mxu0 0.0
      %887 = vmatmul.mubr.f32.gmra.mxu0 %v483
      %v888 = vpop.f32.mrf.mxu0
      %v889 = vadd.f32 0.0, %v888
      %v890 = vpop.f32.mrf.mxu0
      %891 = vmatprep.mubr.f32.mxu0 0.0
      %892 = vmatmul.mubr.f32.gmra.mxu0 %v486
      %v893 = vpop.f32.mrf.mxu0
      %v894 = vadd.f32 0.0, %v893
      %v895 = vpop.f32.mrf.mxu0
      %896 = vmatprep.mubr.f32.mxu0 0.0
      %897 = vmatmul.mubr.f32.gmra.mxu0 %v489
      %v898 = vpop.f32.mrf.mxu0
      %v899 = vadd.f32 0.0, %v898
      %v900 = vpop.f32.mrf.mxu0
      %901 = vmatprep.mubr.f32.mxu0 0.0
      %902 = vmatmul.mubr.f32.gmra.mxu0 %v492
      %v903 = vpop.f32.mrf.mxu0
      %v904 = vadd.f32 0.0, %v903
      %v905 = vpop.f32.mrf.mxu0
      %906 = vmatprep.mubr.f32.mxu0 0.0
      %907 = vmatmul.mubr.f32.gmra.mxu0 %v495
      %v908 = vpop.f32.mrf.mxu0
      %v909 = vadd.f32 0.0, %v908
      %v910 = vpop.f32.mrf.mxu0
      %911 = vmatprep.mubr.f32.mxu0 0.0
      %912 = vmatmul.mubr.f32.gmra.mxu0 %v498
      %v913 = vpop.f32.mrf.mxu0
      %v914 = vadd.f32 0.0, %v913
      %v915 = vpop.f32.mrf.mxu0
      %916 = vmatprep.mubr.f32.mxu0 0.0
      %917 = vmatmul.mubr.f32.gmra.mxu0 %v501
      %v918 = vpop.f32.mrf.mxu0
      %v919 = vadd.f32 0.0, %v918
      %v920 = vpop.f32.mrf.mxu0
      %921 = vmatprep.mubr.f32.mxu0 0.0
      %922 = vmatmul.mubr.f32.gmra.mxu0 %v504
      %v923 = vpop.f32.mrf.mxu0
      %v924 = vadd.f32 0.0, %v923
      %v925 = vpop.f32.mrf.mxu0
      %926 = vmatprep.mubr.f32.mxu0 0.0
      %927 = vmatmul.mubr.f32.gmra.mxu0 %v507
      %v928 = vpop.f32.mrf.mxu0
      %v929 = vadd.f32 0.0, %v928
      %v930 = vpop.f32.mrf.mxu0
      %931 = vmatprep.mubr.f32.mxu0 0.0
      %932 = vmatmul.mubr.f32.gmra.mxu0 %v510
      %v933 = vpop.f32.mrf.mxu0
      %v934 = vadd.f32 0.0, %v933
      %v935 = vpop.f32.mrf.mxu0
      %936 = vmatprep.mubr.f32.mxu0 0.0
      %937 = vmatmul.mubr.f32.gmra.mxu0 %v513
      %v938 = vpop.f32.mrf.mxu0
      %v939 = vadd.f32 0.0, %v938
      %v940 = vpop.f32.mrf.mxu0
      %941 = vmatprep.mubr.f32.mxu0 0.0
      %942 = vmatmul.mubr.f32.gmra.mxu0 %v516
      %v943 = vpop.f32.mrf.mxu0
      %v944 = vadd.f32 0.0, %v943
      %v945 = vpop.f32.mrf.mxu0
      %946 = vmatprep.mubr.f32.mxu0 0.0
      %947 = vmatmul.mubr.f32.gmra.mxu0 %v519
      %v948 = vpop.f32.mrf.mxu0
      %v949 = vadd.f32 0.0, %v948
      %v950 = vpop.f32.mrf.mxu0
      %951 = vmatprep.mubr.f32.mxu0 0.0
      %952 = vmatmul.mubr.f32.gmra.mxu0 %v522
      %v953 = vpop.f32.mrf.mxu0
      %v954 = vadd.f32 0.0, %v953
      %v955 = vpop.f32.mrf.mxu0
      %956 = vmatprep.mubr.f32.mxu0 0.0
      %957 = vmatmul.mubr.f32.gmra.mxu0 %v525
      %v958 = vpop.f32.mrf.mxu0
      %v959 = vadd.f32 0.0, %v958
      %v960 = vpop.f32.mrf.mxu0
      %961 = vmatprep.mubr.f32.mxu0 0.0
      %962 = vmatmul.mubr.f32.gmra.mxu0 %v528
      %v963 = vpop.f32.mrf.mxu0
      %v964 = vadd.f32 0.0, %v963
      %v965 = vpop.f32.mrf.mxu0
      %966 = vmatprep.mubr.f32.mxu0 0.0
      %967 = vmatmul.mubr.f32.gmra.mxu0 %v531
      %v968 = vpop.f32.mrf.mxu0
      %v969 = vadd.f32 0.0, %v968
      %v970 = vpop.f32.mrf.mxu0
      %971 = vmatprep.mubr.f32.mxu0 0.0
      %972 = vmatmul.mubr.f32.gmra.mxu0 %v534
      %v973 = vpop.f32.mrf.mxu0
      %v974 = vadd.f32 0.0, %v973
      %v975 = vpop.f32.mrf.mxu0
      %976 = vmatprep.mubr.f32.mxu0 0.0
      %977 = vmatmul.mubr.f32.gmra.mxu0 %v537
      %v978 = vpop.f32.mrf.mxu0
      %v979 = vadd.f32 0.0, %v978
      %v980 = vpop.f32.mrf.mxu0
      %981 = vmatprep.mubr.f32.mxu0 0.0
      %982 = vmatmul.mubr.f32.gmra.mxu0 %v540
      %v983 = vpop.f32.mrf.mxu0
      %v984 = vadd.f32 0.0, %v983
      %v985 = vpop.f32.mrf.mxu0
      %986 = vmatprep.mubr.f32.mxu0 0.0
      %987 = vmatmul.mubr.f32.gmra.mxu0 %v543
      %v988 = vpop.f32.mrf.mxu0
      %v989 = vadd.f32 0.0, %v988
      %v990 = vpop.f32.mrf.mxu0
      %991 = vmatprep.mubr.f32.mxu0 0.0
      %992 = vmatmul.mubr.f32.gmra.mxu0 %v546
      %v993 = vpop.f32.mrf.mxu0
      %v994 = vadd.f32 0.0, %v993
      %v995 = vpop.f32.mrf.mxu0
      %996 = vmatprep.mubr.f32.mxu0 0.0
      %997 = vmatmul.mubr.f32.gmra.mxu0 %v549
      %v998 = vpop.f32.mrf.mxu0
      %v999 = vadd.f32 0.0, %v998
      %v1000 = vpop.f32.mrf.mxu0
      %1001 = vmatprep.mubr.f32.mxu0 0.0
      %1002 = vmatmul.mubr.f32.gmra.mxu0 %v552
      %v1003 = vpop.f32.mrf.mxu0
      %v1004 = vadd.f32 0.0, %v1003
      %v1005 = vpop.f32.mrf.mxu0
      %1006 = vmatprep.mubr.f32.mxu0 0.0
      %1007 = vmatmul.mubr.f32.gmra.mxu0 %v555
      %v1008 = vpop.f32.mrf.mxu0
      %v1009 = vadd.f32 0.0, %v1008
      %v1010 = vpop.f32.mrf.mxu0
      %1011 = vmatprep.mubr.f32.mxu0 0.0
      %1012 = vmatmul.mubr.f32.gmra.mxu0 %v558
      %v1013 = vpop.f32.mrf.mxu0
      %v1014 = vadd.f32 0.0, %v1013
      %v1015 = vpop.f32.mrf.mxu0
      %1016 = vmatprep.mubr.f32.mxu0 0.0
      %1017 = vmatmul.mubr.f32.gmra.mxu0 %v561
      %v1018 = vpop.f32.mrf.mxu0
      %v1019 = vadd.f32 0.0, %v1018
      %v1020 = vpop.f32.mrf.mxu0
      %1021 = vmatprep.mubr.f32.mxu0 0.0
      %1022 = vmatmul.mubr.f32.gmra.mxu0 %v564
      %v1023 = vpop.f32.mrf.mxu0
      %v1024 = vadd.f32 0.0, %v1023
      %v1025 = vpop.f32.mrf.mxu0
      %1026 = vmatprep.mubr.f32.mxu0 0.0
      %1027 = vmatmul.mubr.f32.gmra.mxu0 %v567
      %v1028 = vpop.f32.mrf.mxu0
      %v1029 = vadd.f32 0.0, %v1028
      %v1030 = vpop.f32.mrf.mxu0
      %1031 = vmatprep.mubr.f32.mxu0 0.0
      %1032 = vmatmul.mubr.f32.gmra.mxu0 %v570
      %v1033 = vpop.f32.mrf.mxu0
      %v1034 = vadd.f32 0.0, %v1033
      %v1035 = vpop.f32.mrf.mxu0
      %1036 = vmatprep.mubr.f32.mxu0 0.0
      %1037 = vmatmul.mubr.f32.gmra.mxu0 %v573
      %v1038 = vpop.f32.mrf.mxu0
      %v1039 = vadd.f32 0.0, %v1038
      %v1040 = vpop.f32.mrf.mxu0
      %1041 = vmatprep.mubr.f32.mxu0 0.0
      %1042 = vmatmul.mubr.f32.gmra.mxu0 %v576
      %v1043 = vpop.f32.mrf.mxu0
      %v1044 = vadd.f32 0.0, %v1043
      %v1045 = vpop.f32.mrf.mxu0
      %1046 = vmatprep.mubr.f32.mxu0 0.0
      %1047 = vmatmul.mubr.f32.gmra.mxu0 %v579
      %v1048 = vpop.f32.mrf.mxu0
      %v1049 = vadd.f32 0.0, %v1048
      %v1050 = vpop.f32.mrf.mxu0
      %1051 = vmatprep.mubr.f32.mxu0 0.0
      %1052 = vmatmul.mubr.f32.gmra.mxu0 %v582
      %v1053 = vpop.f32.mrf.mxu0
      %v1054 = vadd.f32 0.0, %v1053
      %v1055 = vpop.f32.mrf.mxu0
      %1056 = vmatprep.mubr.f32.mxu0 0.0
      %1057 = vmatmul.mubr.f32.gmra.mxu0 %v585
      %v1058 = vpop.f32.mrf.mxu0
      %v1059 = vadd.f32 0.0, %v1058
      %v1060 = vpop.f32.mrf.mxu0
      %1061 = vmatprep.mubr.f32.mxu0 0.0
      %1062 = vmatmul.mubr.f32.gmra.mxu0 %v588
      %v1063 = vpop.f32.mrf.mxu0
      %v1064 = vadd.f32 0.0, %v1063
      %v1065 = vpop.f32.mrf.mxu0
      %1066 = vmatprep.mubr.f32.mxu0 0.0
      %1067 = vmatmul.mubr.f32.gmra.mxu0 %v591
      %v1068 = vpop.f32.mrf.mxu0
      %v1069 = vadd.f32 0.0, %v1068
      %v1070 = vpop.f32.mrf.mxu0
      %1071 = vmatprep.mubr.f32.mxu0 0.0
      %1072 = vmatmul.mubr.f32.gmra.mxu0 %v594
      %v1073 = vpop.f32.mrf.mxu0
      %v1074 = vadd.f32 0.0, %v1073
      %v1075 = vpop.f32.mrf.mxu0
      %1076 = vmatprep.mubr.f32.mxu0 0.0
      %1077 = vmatmul.mubr.f32.gmra.mxu0 %v597
      %v1078 = vpop.f32.mrf.mxu0
      %v1079 = vadd.f32 0.0, %v1078
      %v1080 = vpop.f32.mrf.mxu0
      %1081 = vmatprep.mubr.f32.mxu0 0.0
      %1082 = vmatmul.mubr.f32.gmra.mxu0 %v600
      %v1083 = vpop.f32.mrf.mxu0
      %v1084 = vadd.f32 0.0, %v1083
      %v1085 = vpop.f32.mrf.mxu0
      %1086 = vmatprep.mubr.f32.mxu0 0.0
      %1087 = vmatmul.mubr.f32.gmra.mxu0 %v603
      %v1088 = vpop.f32.mrf.mxu0
      %v1089 = vadd.f32 0.0, %v1088
      %v1090 = vpop.f32.mrf.mxu0
      %1091 = vmatprep.mubr.f32.mxu0 0.0
      %1092 = vmatmul.mubr.f32.gmra.mxu0 %v606
      %v1093 = vpop.f32.mrf.mxu0
      %v1094 = vadd.f32 0.0, %v1093
      %v1095 = vpop.f32.mrf.mxu0
      %1096 = vmatprep.mubr.f32.mxu0 0.0
      %1097 = vmatmul.mubr.f32.gmra.mxu0 %v609
      %v1098 = vpop.f32.mrf.mxu0
      %v1099 = vadd.f32 0.0, %v1098
      %v1100 = vpop.f32.mrf.mxu0
      %1101 = vmatprep.mubr.f32.mxu0 0.0
      %1102 = vmatmul.mubr.f32.gmra.mxu0 %v612
      %v1103 = vpop.f32.mrf.mxu0
      %v1104 = vadd.f32 0.0, %v1103
      %v1105 = vpop.f32.mrf.mxu0
      %1106 = vmatprep.mubr.f32.mxu0 0.0
      %1107 = vmatmul.mubr.f32.gmra.mxu0 %v615
      %v1108 = vpop.f32.mrf.mxu0
      %v1109 = vadd.f32 0.0, %v1108
      %v1110 = vpop.f32.mrf.mxu0
      %1111 = vmatprep.mubr.f32.mxu0 0.0
      %1112 = vmatmul.mubr.f32.gmra.mxu0 %v618
      %v1113 = vpop.f32.mrf.mxu0
      %v1114 = vadd.f32 0.0, %v1113
      %v1115 = vpop.f32.mrf.mxu0
      %1116 = vmatprep.mubr.f32.mxu0 0.0
      %1117 = vmatmul.mubr.f32.gmra.mxu0 %v621
      %v1118 = vpop.f32.mrf.mxu0
      %v1119 = vadd.f32 0.0, %v1118
      %v1120 = vpop.f32.mrf.mxu0
      %1121 = vmatprep.mubr.f32.mxu0 0.0
      %1122 = vmatmul.mubr.f32.gmra.mxu0 %v624
      %v1123 = vpop.f32.mrf.mxu0
      %v1124 = vadd.f32 0.0, %v1123
      %v1125 = vpop.f32.mrf.mxu0
      %1126 = vmatprep.mubr.f32.mxu0 0.0
      %1127 = vmatmul.mubr.f32.gmra.mxu0 %v627
      %v1128 = vpop.f32.mrf.mxu0
      %v1129 = vadd.f32 0.0, %v1128
      %v1130 = vpop.f32.mrf.mxu0
      %1131 = vmatprep.mubr.f32.mxu0 0.0
      %1132 = vmatmul.mubr.f32.gmra.mxu0 %v630
      %v1133 = vpop.f32.mrf.mxu0
      %v1134 = vadd.f32 0.0, %v1133
      %v1135 = vpop.f32.mrf.mxu0
      %1136 = vmatprep.mubr.f32.mxu0 0.0
      %1137 = vmatmul.mubr.f32.gmra.mxu0 %v633
      %v1138 = vpop.f32.mrf.mxu0
      %v1139 = vadd.f32 0.0, %v1138
      %v1140 = vpop.f32.mrf.mxu0
      %1141 = vmatprep.mubr.f32.mxu0 0.0
      %1142 = vmatmul.mubr.f32.gmra.mxu0 %v636
      %v1143 = vpop.f32.mrf.mxu0
      %v1144 = vadd.f32 0.0, %v1143
      %v1145 = vpop.f32.mrf.mxu0
      %1146 = vmatprep.mubr.f32.mxu0 0.0
      %1147 = vmatmul.mubr.f32.gmra.mxu0 %v639
      %v1148 = vpop.f32.mrf.mxu0
      %v1149 = vadd.f32 0.0, %v1148
      %v1150 = vpop.f32.mrf.mxu0
      %1151 = vmatprep.mubr.f32.mxu0 0.0
      %1152 = vmatmul.mubr.f32.gmra.mxu0 %v642
      %v1153 = vpop.f32.mrf.mxu0
      %v1154 = vadd.f32 0.0, %v1153
      %v1155 = vpop.f32.mrf.mxu0
      %1156 = vmatprep.mubr.f32.mxu0 0.0
      %1157 = vmatmul.mubr.f32.gmra.mxu0 %v645
      %v1158 = vpop.f32.mrf.mxu0
      %v1159 = vadd.f32 0.0, %v1158
      %v1160 = vpop.f32.mrf.mxu0
      %1161 = vmatprep.mubr.f32.mxu0 0.0
      %1162 = vmatmul.mubr.f32.gmra.mxu0 %v648
      %v1163 = vpop.f32.mrf.mxu0
      %v1164 = vadd.f32 0.0, %v1163
      %v1165 = vpop.f32.mrf.mxu0
      %1166 = vmatprep.mubr.f32.mxu0 0.0
      %1167 = vmatmul.mubr.f32.gmra.mxu0 %v651
      %v1168 = vpop.f32.mrf.mxu0
      %v1169 = vadd.f32 0.0, %v1168
      %v1170 = vpop.f32.mrf.mxu0
      %1171 = vmatprep.mubr.f32.mxu0 0.0
      %1172 = vmatmul.mubr.f32.gmra.mxu0 %v654
      %v1173 = vpop.f32.mrf.mxu0
      %v1174 = vadd.f32 0.0, %v1173
      %v1175 = vpop.f32.mrf.mxu0
      %1176 = vmatprep.mubr.f32.mxu0 0.0
      %1177 = vmatmul.mubr.f32.gmra.mxu0 %v657
      %v1178 = vpop.f32.mrf.mxu0
      %v1179 = vadd.f32 0.0, %v1178
      %v1180 = vpop.f32.mrf.mxu0
      %1181 = vmatprep.mubr.f32.mxu0 0.0
      %1182 = vmatmul.mubr.f32.gmra.mxu0 %v660
      %v1183 = vpop.f32.mrf.mxu0
      %v1184 = vadd.f32 0.0, %v1183
      %v1185 = vpop.f32.mrf.mxu0
      %1186 = vmatprep.mubr.f32.mxu0 0.0
      %1187 = vmatmul.mubr.f32.gmra.mxu0 %v663
      %v1188 = vpop.f32.mrf.mxu0
      %v1189 = vadd.f32 0.0, %v1188
      %v1190 = vpop.f32.mrf.mxu0
      %1191 = vmatprep.mubr.f32.mxu0 0.0
      %1192 = vmatmul.mubr.f32.gmra.mxu0 %v666
      %v1193 = vpop.f32.mrf.mxu0
      %v1194 = vadd.f32 0.0, %v1193
      %v1195 = vpop.f32.mrf.mxu0
      %1196 = vmatprep.mubr.f32.mxu0 0.0
      %1197 = vmatmul.mubr.f32.gmra.mxu0 %v669
      %v1198 = vpop.f32.mrf.mxu0
      %v1199 = vadd.f32 0.0, %v1198
      %v1200 = vpop.f32.mrf.mxu0
      %1201 = vmatprep.mubr.f32.mxu0 0.0
      %1202 = vmatmul.mubr.f32.gmra.mxu0 %v672
      %v1203 = vpop.f32.mrf.mxu0
      %v1204 = vadd.f32 0.0, %v1203
      %v1205 = vpop.f32.mrf.mxu0
      %1206 = vmatprep.mubr.f32.mxu0 0.0
      %1207 = vmatmul.mubr.f32.gmra.mxu0 %v675
      %v1208 = vpop.f32.mrf.mxu0
      %v1209 = vadd.f32 0.0, %v1208
      %v1210 = vpop.f32.mrf.mxu0
      %1211 = vmatprep.mubr.f32.mxu0 0.0
      %1212 = vmatmul.mubr.f32.gmra.mxu0 %v678
      %v1213 = vpop.f32.mrf.mxu0
      %v1214 = vadd.f32 0.0, %v1213
      %v1215 = vpop.f32.mrf.mxu0
      %1216 = vmatprep.mubr.f32.mxu0 0.0
      %1217 = vmatmul.mubr.f32.gmra.mxu0 %v681
      %v1218 = vpop.f32.mrf.mxu0
      %v1219 = vadd.f32 0.0, %v1218
      %v1220 = vpop.f32.mrf.mxu0
      %1221 = vmatprep.mubr.f32.mxu0 0.0
      %1222 = vmatmul.mubr.f32.gmra.mxu0 %v684
      %v1223 = vpop.f32.mrf.mxu0
      %v1224 = vadd.f32 0.0, %v1223
      %v1225 = vpop.f32.mrf.mxu0
      %1226 = vmatprep.mubr.f32.mxu0 0.0
      %1227 = vmatmul.mubr.f32.gmra.mxu0 %v687
      %v1228 = vpop.f32.mrf.mxu0
      %v1229 = vadd.f32 0.0, %v1228
      %v1230 = vpop.f32.mrf.mxu0
      %1231 = vmatprep.mubr.f32.mxu0 0.0
      %1232 = vmatmul.mubr.f32.gmra.mxu0 %v690
      %v1233 = vpop.f32.mrf.mxu0
      %v1234 = vadd.f32 0.0, %v1233
      %v1235 = vpop.f32.mrf.mxu0
      %1236 = vmatprep.mubr.f32.mxu0 0.0
      %1237 = vmatmul.mubr.f32.gmra.mxu0 %v693
      %v1238 = vpop.f32.mrf.mxu0
      %v1239 = vadd.f32 0.0, %v1238
      %v1240 = vpop.f32.mrf.mxu0
      %1241 = vmatprep.mubr.f32.mxu0 0.0
      %1242 = vmatmul.mubr.f32.gmra.mxu0 %v696
      %v1243 = vpop.f32.mrf.mxu0
      %v1244 = vadd.f32 0.0, %v1243
      %v1245 = vpop.f32.mrf.mxu0
      %1246 = vmatprep.mubr.f32.mxu0 0.0
      %1247 = vmatmul.mubr.f32.gmra.mxu0 %v699
      %v1248 = vpop.f32.mrf.mxu0
      %v1249 = vadd.f32 0.0, %v1248
      %v1250 = vpop.f32.mrf.mxu0
      %1251 = vmatprep.mubr.f32.mxu0 0.0
      %1252 = vmatmul.mubr.f32.gmra.mxu0 %v702
      %v1253 = vpop.f32.mrf.mxu0
      %v1254 = vadd.f32 0.0, %v1253
      %v1255 = vpop.f32.mrf.mxu0
      %1256 = vmatprep.mubr.f32.mxu0 0.0
      %1257 = vmatmul.mubr.f32.gmra.mxu0 %v705
      %v1258 = vpop.f32.mrf.mxu0
      %v1259 = vadd.f32 0.0, %v1258
      %v1260 = vpop.f32.mrf.mxu0
      %1261 = vdwg.mxu0
      %v1262 = vmax.f32 %v774, 0.0
      %v1263 = vmax.f32 %v779, 0.0
      %v1264 = vmax.f32 %v784, 0.0
      %v1265 = vmax.f32 %v789, 0.0
      %v1266 = vmax.f32 %v794, 0.0
      %v1267 = vmax.f32 %v799, 0.0
      %v1268 = vmax.f32 %v804, 0.0
      %v1269 = vmax.f32 %v809, 0.0
      %v1270 = vmax.f32 %v814, 0.0
      %v1271 = vmax.f32 %v819, 0.0
      %v1272 = vmax.f32 %v824, 0.0
      %v1273 = vmax.f32 %v829, 0.0
      %v1274 = vmax.f32 %v834, 0.0
      %v1275 = vmax.f32 %v839, 0.0
      %v1276 = vmax.f32 %v844, 0.0
      %v1277 = vmax.f32 %v849, 0.0
      %v1278 = vmax.f32 %v854, 0.0
      %v1279 = vmax.f32 %v859, 0.0
      %v1280 = vmax.f32 %v864, 0.0
      %v1281 = vmax.f32 %v869, 0.0
      %v1282 = vmax.f32 %v874, 0.0
      %v1283 = vmax.f32 %v879, 0.0
      %v1284 = vmax.f32 %v884, 0.0
      %v1285 = vmax.f32 %v889, 0.0
      %v1286 = vmax.f32 %v894, 0.0
      %v1287 = vmax.f32 %v899, 0.0
      %v1288 = vmax.f32 %v904, 0.0
      %v1289 = vmax.f32 %v909, 0.0
      %v1290 = vmax.f32 %v914, 0.0
      %v1291 = vmax.f32 %v919, 0.0
      %v1292 = vmax.f32 %v924, 0.0
      %v1293 = vmax.f32 %v929, 0.0
      %v1294 = vmax.f32 %v934, 0.0
      %v1295 = vmax.f32 %v939, 0.0
      %v1296 = vmax.f32 %v944, 0.0
      %v1297 = vmax.f32 %v949, 0.0
      %v1298 = vmax.f32 %v954, 0.0
      %v1299 = vmax.f32 %v959, 0.0
      %v1300 = vmax.f32 %v964, 0.0
      %v1301 = vmax.f32 %v969, 0.0
      %v1302 = vmax.f32 %v974, 0.0
      %v1303 = vmax.f32 %v979, 0.0
      %v1304 = vmax.f32 %v984, 0.0
      %v1305 = vmax.f32 %v989, 0.0
      %v1306 = vmax.f32 %v994, 0.0
      %v1307 = vmax.f32 %v999, 0.0
      %v1308 = vmax.f32 %v1004, 0.0
      %v1309 = vmax.f32 %v1009, 0.0
      %v1310 = vmax.f32 %v1014, 0.0
      %v1311 = vmax.f32 %v1019, 0.0
      %v1312 = vmax.f32 %v1024, 0.0
      %v1313 = vmax.f32 %v1029, 0.0
      %v1314 = vmax.f32 %v1034, 0.0
      %v1315 = vmax.f32 %v1039, 0.0
      %v1316 = vmax.f32 %v1044, 0.0
      %v1317 = vmax.f32 %v1049, 0.0
      %v1318 = vmax.f32 %v1054, 0.0
      %v1319 = vmax.f32 %v1059, 0.0
      %v1320 = vmax.f32 %v1064, 0.0
      %v1321 = vmax.f32 %v1069, 0.0
      %v1322 = vmax.f32 %v1074, 0.0
      %v1323 = vmax.f32 %v1079, 0.0
      %v1324 = vmax.f32 %v1084, 0.0
      %v1325 = vmax.f32 %v1089, 0.0
      %v1326 = vmax.f32 %v1094, 0.0
      %v1327 = vmax.f32 %v1099, 0.0
      %v1328 = vmax.f32 %v1104, 0.0
      %v1329 = vmax.f32 %v1109, 0.0
      %v1330 = vmax.f32 %v1114, 0.0
      %v1331 = vmax.f32 %v1119, 0.0
      %v1332 = vmax.f32 %v1124, 0.0
      %v1333 = vmax.f32 %v1129, 0.0
      %v1334 = vmax.f32 %v1134, 0.0
      %v1335 = vmax.f32 %v1139, 0.0
      %v1336 = vmax.f32 %v1144, 0.0
      %v1337 = vmax.f32 %v1149, 0.0
      %v1338 = vmax.f32 %v1154, 0.0
      %v1339 = vmax.f32 %v1159, 0.0
      %v1340 = vmax.f32 %v1164, 0.0
      %v1341 = vmax.f32 %v1169, 0.0
      %v1342 = vmax.f32 %v1174, 0.0
      %v1343 = vmax.f32 %v1179, 0.0
      %v1344 = vmax.f32 %v1184, 0.0
      %v1345 = vmax.f32 %v1189, 0.0
      %v1346 = vmax.f32 %v1194, 0.0
      %v1347 = vmax.f32 %v1199, 0.0
      %v1348 = vmax.f32 %v1204, 0.0
      %v1349 = vmax.f32 %v1209, 0.0
      %v1350 = vmax.f32 %v1214, 0.0
      %v1351 = vmax.f32 %v1219, 0.0
      %v1352 = vmax.f32 %v1224, 0.0
      %v1353 = vmax.f32 %v1229, 0.0
      %v1354 = vmax.f32 %v1234, 0.0
      %v1355 = vmax.f32 %v1239, 0.0
      %v1356 = vmax.f32 %v1244, 0.0
      %v1357 = vmax.f32 %v1249, 0.0
      %v1358 = vmax.f32 %v1254, 0.0
      %v1359 = vmax.f32 %v1259, 0.0
      %v1360 = vld [vmem:[%s6] sm:$0xff]
      %v1361 = vld [vmem:[%s6 + $0x8] sm:$0xff]
      %v1362 = vld [vmem:[%s6 + $0x10] sm:$0xff]
      %v1363 = vld [vmem:[%s6 + $0x18] sm:$0xff]
      %v1364 = vld [vmem:[%s6 + $0x20] sm:$0xff]
      %v1365 = vld [vmem:[%s6 + $0x28] sm:$0xff]
      %v1366 = vld [vmem:[%s6 + $0x30] sm:$0xff]
      %v1367 = vld [vmem:[%s6 + $0x38] sm:$0xff]
      %v1368 = vld [vmem:[%s6 + $0x40] sm:$0xff]
      %v1369 = vld [vmem:[%s6 + $0x48] sm:$0xff]
      %v1370 = vld [vmem:[%s6 + $0x50] sm:$0xff]
      %v1371 = vld [vmem:[%s6 + $0x58] sm:$0xff]
      %v1372 = vld [vmem:[%s6 + $0x60] sm:$0xff]
      %v1373 = vld [vmem:[%s6 + $0x68] sm:$0xff]
      %v1374 = vld [vmem:[%s6 + $0x70] sm:$0xff]
      %v1375 = vld [vmem:[%s6 + $0x78] sm:$0xff]
      %v1376 = vld [vmem:[%s6 + $0x80] sm:$0xff]
      %v1377 = vld [vmem:[%s6 + $0x88] sm:$0xff]
      %v1378 = vld [vmem:[%s6 + $0x90] sm:$0xff]
      %v1379 = vld [vmem:[%s6 + $0x98] sm:$0xff]
      %v1380 = vld [vmem:[%s6 + $0xa0] sm:$0xff]
      %v1381 = vld [vmem:[%s6 + $0xa8] sm:$0xff]
      %v1382 = vld [vmem:[%s6 + $0xb0] sm:$0xff]
      %v1383 = vld [vmem:[%s6 + $0xb8] sm:$0xff]
      %v1384 = vld [vmem:[%s6 + $0xc0] sm:$0xff]
      %v1385 = vld [vmem:[%s6 + $0xc8] sm:$0xff]
      %v1386 = vld [vmem:[%s6 + $0xd0] sm:$0xff]
      %v1387 = vld [vmem:[%s6 + $0xd8] sm:$0xff]
      %v1388 = vld [vmem:[%s6 + $0xe0] sm:$0xff]
      %v1389 = vld [vmem:[%s6 + $0xe8] sm:$0xff]
      %v1390 = vld [vmem:[%s6 + $0xf0] sm:$0xff]
      %v1391 = vld [vmem:[%s6 + $0xf8] sm:$0xff]
      %v1392 = vld [vmem:[%s6 + $0x100] sm:$0xff]
      %v1393 = vld [vmem:[%s6 + $0x108] sm:$0xff]
      %v1394 = vld [vmem:[%s6 + $0x110] sm:$0xff]
      %v1395 = vld [vmem:[%s6 + $0x118] sm:$0xff]
      %v1396 = vld [vmem:[%s6 + $0x120] sm:$0xff]
      %v1397 = vld [vmem:[%s6 + $0x128] sm:$0xff]
      %v1398 = vld [vmem:[%s6 + $0x130] sm:$0xff]
      %v1399 = vld [vmem:[%s6 + $0x138] sm:$0xff]
      %v1400 = vld [vmem:[%s6 + $0x140] sm:$0xff]
      %v1401 = vld [vmem:[%s6 + $0x148] sm:$0xff]
      %v1402 = vld [vmem:[%s6 + $0x150] sm:$0xff]
      %v1403 = vld [vmem:[%s6 + $0x158] sm:$0xff]
      %v1404 = vld [vmem:[%s6 + $0x160] sm:$0xff]
      %v1405 = vld [vmem:[%s6 + $0x168] sm:$0xff]
      %v1406 = vld [vmem:[%s6 + $0x170] sm:$0xff]
      %v1407 = vld [vmem:[%s6 + $0x178] sm:$0xff]
      %v1408 = vld [vmem:[%s6 + $0x180] sm:$0xff]
      %v1409 = vld [vmem:[%s6 + $0x188] sm:$0xff]
      %v1410 = vld [vmem:[%s6 + $0x190] sm:$0xff]
      %v1411 = vld [vmem:[%s6 + $0x198] sm:$0xff]
      %v1412 = vld [vmem:[%s6 + $0x1a0] sm:$0xff]
      %v1413 = vld [vmem:[%s6 + $0x1a8] sm:$0xff]
      %v1414 = vld [vmem:[%s6 + $0x1b0] sm:$0xff]
      %v1415 = vld [vmem:[%s6 + $0x1b8] sm:$0xff]
      %v1416 = vld [vmem:[%s6 + $0x1c0] sm:$0xff]
      %v1417 = vld [vmem:[%s6 + $0x1c8] sm:$0xff]
      %v1418 = vld [vmem:[%s6 + $0x1d0] sm:$0xff]
      %v1419 = vld [vmem:[%s6 + $0x1d8] sm:$0xff]
      %v1420 = vld [vmem:[%s6 + $0x1e0] sm:$0xff]
      %v1421 = vld [vmem:[%s6 + $0x1e8] sm:$0xff]
      %v1422 = vld [vmem:[%s6 + $0x1f0] sm:$0xff]
      %v1423 = vld [vmem:[%s6 + $0x1f8] sm:$0xff]
      %v1424 = vld [vmem:[%s6 + $0x200] sm:$0xff]
      %v1425 = vld [vmem:[%s6 + $0x208] sm:$0xff]
      %v1426 = vld [vmem:[%s6 + $0x210] sm:$0xff]
      %v1427 = vld [vmem:[%s6 + $0x218] sm:$0xff]
      %v1428 = vld [vmem:[%s6 + $0x220] sm:$0xff]
      %v1429 = vld [vmem:[%s6 + $0x228] sm:$0xff]
      %v1430 = vld [vmem:[%s6 + $0x230] sm:$0xff]
      %v1431 = vld [vmem:[%s6 + $0x238] sm:$0xff]
      %v1432 = vld [vmem:[%s6 + $0x240] sm:$0xff]
      %v1433 = vld [vmem:[%s6 + $0x248] sm:$0xff]
      %v1434 = vld [vmem:[%s6 + $0x250] sm:$0xff]
      %v1435 = vld [vmem:[%s6 + $0x258] sm:$0xff]
      %v1436 = vld [vmem:[%s6 + $0x260] sm:$0xff]
      %v1437 = vld [vmem:[%s6 + $0x268] sm:$0xff]
      %v1438 = vld [vmem:[%s6 + $0x270] sm:$0xff]
      %v1439 = vld [vmem:[%s6 + $0x278] sm:$0xff]
      %v1440 = vld [vmem:[%s6 + $0x280] sm:$0xff]
      %v1441 = vld [vmem:[%s6 + $0x288] sm:$0xff]
      %v1442 = vld [vmem:[%s6 + $0x290] sm:$0xff]
      %v1443 = vld [vmem:[%s6 + $0x298] sm:$0xff]
      %v1444 = vld [vmem:[%s6 + $0x2a0] sm:$0xff]
      %v1445 = vld [vmem:[%s6 + $0x2a8] sm:$0xff]
      %v1446 = vld [vmem:[%s6 + $0x2b0] sm:$0xff]
      %v1447 = vld [vmem:[%s6 + $0x2b8] sm:$0xff]
      %v1448 = vld [vmem:[%s6 + $0x2c0] sm:$0xff]
      %v1449 = vld [vmem:[%s6 + $0x2c8] sm:$0xff]
      %v1450 = vld [vmem:[%s6 + $0x2d0] sm:$0xff]
      %v1451 = vld [vmem:[%s6 + $0x2d8] sm:$0xff]
      %v1452 = vld [vmem:[%s6 + $0x2e0] sm:$0xff]
      %v1453 = vld [vmem:[%s6 + $0x2e8] sm:$0xff]
      %v1454 = vld [vmem:[%s6 + $0x2f0] sm:$0xff]
      %v1455 = vld [vmem:[%s6 + $0x2f8] sm:$0xff]
      %v1456 = vld [vmem:[%s6 + $0x300] sm:$0xff]
      %v1457 = vld [vmem:[%s6 + $0x308] sm:$0xff]
      %v1458 = vld [vmem:[%s6 + $0x310] sm:$0xff]
      %v1459 = vld [vmem:[%s6 + $0x318] sm:$0xff]
      %v1460 = vld [vmem:[%s6 + $0x320] sm:$0xff]
      %v1461 = vld [vmem:[%s6 + $0x328] sm:$0xff]
      %v1462 = vld [vmem:[%s6 + $0x330] sm:$0xff]
      %v1463 = vld [vmem:[%s6 + $0x338] sm:$0xff]
      %v1464 = vld [vmem:[%s6 + $0x340] sm:$0xff]
      %v1465 = vld [vmem:[%s6 + $0x348] sm:$0xff]
      %v1466 = vld [vmem:[%s6 + $0x350] sm:$0xff]
      %v1467 = vld [vmem:[%s6 + $0x358] sm:$0xff]
      %v1468 = vld [vmem:[%s6 + $0x360] sm:$0xff]
      %v1469 = vld [vmem:[%s6 + $0x368] sm:$0xff]
      %v1470 = vld [vmem:[%s6 + $0x370] sm:$0xff]
      %v1471 = vld [vmem:[%s6 + $0x378] sm:$0xff]
      %v1472 = vld [vmem:[%s6 + $0x380] sm:$0xff]
      %v1473 = vld [vmem:[%s6 + $0x388] sm:$0xff]
      %v1474 = vld [vmem:[%s6 + $0x390] sm:$0xff]
      %v1475 = vld [vmem:[%s6 + $0x398] sm:$0xff]
      %v1476 = vld [vmem:[%s6 + $0x3a0] sm:$0xff]
      %v1477 = vld [vmem:[%s6 + $0x3a8] sm:$0xff]
      %v1478 = vld [vmem:[%s6 + $0x3b0] sm:$0xff]
      %v1479 = vld [vmem:[%s6 + $0x3b8] sm:$0xff]
      %v1480 = vld [vmem:[%s6 + $0x3c0] sm:$0xff]
      %v1481 = vld [vmem:[%s6 + $0x3c8] sm:$0xff]
      %v1482 = vld [vmem:[%s6 + $0x3d0] sm:$0xff]
      %v1483 = vld [vmem:[%s6 + $0x3d8] sm:$0xff]
      %v1484 = vld [vmem:[%s6 + $0x3e0] sm:$0xff]
      %v1485 = vld [vmem:[%s6 + $0x3e8] sm:$0xff]
      %v1486 = vld [vmem:[%s6 + $0x3f0] sm:$0xff]
      %v1487 = vld [vmem:[%s6 + $0x3f8] sm:$0xff]
      %v1488 = vld [vmem:[%s6 + $0x400] sm:$0xff]
      %v1489 = vld [vmem:[%s6 + $0x408] sm:$0xff]
      %v1490 = vld [vmem:[%s6 + $0x410] sm:$0xff]
      %v1491 = vld [vmem:[%s6 + $0x418] sm:$0xff]
      %v1492 = vld [vmem:[%s6 + $0x420] sm:$0xff]
      %v1493 = vld [vmem:[%s6 + $0x428] sm:$0xff]
      %v1494 = vld [vmem:[%s6 + $0x430] sm:$0xff]
      %v1495 = vld [vmem:[%s6 + $0x438] sm:$0xff]
      %v1496 = vld [vmem:[%s6 + $0x440] sm:$0xff]
      %v1497 = vld [vmem:[%s6 + $0x448] sm:$0xff]
      %v1498 = vld [vmem:[%s6 + $0x450] sm:$0xff]
      %v1499 = vld [vmem:[%s6 + $0x458] sm:$0xff]
      %v1500 = vld [vmem:[%s6 + $0x460] sm:$0xff]
      %v1501 = vld [vmem:[%s6 + $0x468] sm:$0xff]
      %v1502 = vld [vmem:[%s6 + $0x470] sm:$0xff]
      %v1503 = vld [vmem:[%s6 + $0x478] sm:$0xff]
      %v1504 = vld [vmem:[%s6 + $0x480] sm:$0xff]
      %v1505 = vld [vmem:[%s6 + $0x488] sm:$0xff]
      %v1506 = vld [vmem:[%s6 + $0x490] sm:$0xff]
      %v1507 = vld [vmem:[%s6 + $0x498] sm:$0xff]
      %v1508 = vld [vmem:[%s6 + $0x4a0] sm:$0xff]
      %v1509 = vld [vmem:[%s6 + $0x4a8] sm:$0xff]
      %v1510 = vld [vmem:[%s6 + $0x4b0] sm:$0xff]
      %v1511 = vld [vmem:[%s6 + $0x4b8] sm:$0xff]
      %v1512 = vld [vmem:[%s6 + $0x4c0] sm:$0xff]
      %v1513 = vld [vmem:[%s6 + $0x4c8] sm:$0xff]
      %v1514 = vld [vmem:[%s6 + $0x4d0] sm:$0xff]
      %v1515 = vld [vmem:[%s6 + $0x4d8] sm:$0xff]
      %v1516 = vld [vmem:[%s6 + $0x4e0] sm:$0xff]
      %v1517 = vld [vmem:[%s6 + $0x4e8] sm:$0xff]
      %v1518 = vld [vmem:[%s6 + $0x4f0] sm:$0xff]
      %v1519 = vld [vmem:[%s6 + $0x4f8] sm:$0xff]
      %v1520 = vld [vmem:[%s6 + $0x500] sm:$0xff]
      %v1521 = vld [vmem:[%s6 + $0x508] sm:$0xff]
      %v1522 = vld [vmem:[%s6 + $0x510] sm:$0xff]
      %v1523 = vld [vmem:[%s6 + $0x518] sm:$0xff]
      %v1524 = vld [vmem:[%s6 + $0x520] sm:$0xff]
      %v1525 = vld [vmem:[%s6 + $0x528] sm:$0xff]
      %v1526 = vld [vmem:[%s6 + $0x530] sm:$0xff]
      %v1527 = vld [vmem:[%s6 + $0x538] sm:$0xff]
      %v1528 = vld [vmem:[%s6 + $0x540] sm:$0xff]
      %v1529 = vld [vmem:[%s6 + $0x548] sm:$0xff]
      %v1530 = vld [vmem:[%s6 + $0x550] sm:$0xff]
      %v1531 = vld [vmem:[%s6 + $0x558] sm:$0xff]
      %v1532 = vld [vmem:[%s6 + $0x560] sm:$0xff]
      %v1533 = vld [vmem:[%s6 + $0x568] sm:$0xff]
      %v1534 = vld [vmem:[%s6 + $0x570] sm:$0xff]
      %v1535 = vld [vmem:[%s6 + $0x578] sm:$0xff]
      %v1536 = vld [vmem:[%s6 + $0x580] sm:$0xff]
      %v1537 = vld [vmem:[%s6 + $0x588] sm:$0xff]
      %v1538 = vld [vmem:[%s6 + $0x590] sm:$0xff]
      %v1539 = vld [vmem:[%s6 + $0x598] sm:$0xff]
      %v1540 = vld [vmem:[%s6 + $0x5a0] sm:$0xff]
      %v1541 = vld [vmem:[%s6 + $0x5a8] sm:$0xff]
      %vm1542 = vcmask 130048
      %v1544 = vsel %vm1542, %v1366, 0
      %v1547 = vsel %vm1542, %v1373, 0
      %v1550 = vsel %vm1542, %v1380, 0
      %v1553 = vsel %vm1542, %v1387, 0
      %v1556 = vsel %vm1542, %v1394, 0
      %v1559 = vsel %vm1542, %v1401, 0
      %v1562 = vsel %vm1542, %v1408, 0
      %v1565 = vsel %vm1542, %v1415, 0
      %v1568 = vsel %vm1542, %v1422, 0
      %v1571 = vsel %vm1542, %v1429, 0
      %v1574 = vsel %vm1542, %v1436, 0
      %v1577 = vsel %vm1542, %v1443, 0
      %v1580 = vsel %vm1542, %v1450, 0
      %v1583 = vsel %vm1542, %v1457, 0
      %v1586 = vsel %vm1542, %v1464, 0
      %v1589 = vsel %vm1542, %v1471, 0
      %v1592 = vsel %vm1542, %v1478, 0
      %v1595 = vsel %vm1542, %v1485, 0
      %v1598 = vsel %vm1542, %v1492, 0
      %v1601 = vsel %vm1542, %v1499, 0
      %v1604 = vsel %vm1542, %v1506, 0
      %v1607 = vsel %vm1542, %v1513, 0
      %v1610 = vsel %vm1542, %v1520, 0
      %v1613 = vsel %vm1542, %v1527, 0
      %v1616 = vsel %vm1542, %v1534, 0
      %v1619 = vsel %vm1542, %v1541, 0
      %1621 = vmatprep.subr.mxu0 0.0
      %1622 = vmatpush1.msra.mxu0 %v1277
      %1623 = vmatprep.subr.mxu0 0.0
      %1624 = vmatpush1.msra.mxu0 %v1276
      %1625 = vmatprep.subr.mxu0 0.0
      %1626 = vmatpush1.msra.mxu0 %v1275
      %1627 = vmatprep.subr.mxu0 0.0
      %1628 = vmatpush1.msra.mxu0 %v1274
      %1629 = vmatprep.subr.mxu0 0.0
      %1630 = vmatpush1.msra.mxu0 %v1273
      %1631 = vmatprep.subr.mxu0 0.0
      %1632 = vmatpush1.msra.mxu0 %v1272
      %1633 = vmatprep.subr.mxu0 0.0
      %1634 = vmatpush1.msra.mxu0 %v1271
      %1635 = vmatprep.subr.mxu0 0.0
      %1636 = vmatpush1.msra.mxu0 %v1270
      %1637 = vmatprep.subr.mxu0 0.0
      %1638 = vmatpush1.msra.mxu0 %v1269
      %1639 = vmatprep.subr.mxu0 0.0
      %1640 = vmatpush1.msra.mxu0 %v1268
      %1641 = vmatprep.subr.mxu0 0.0
      %1642 = vmatpush1.msra.mxu0 %v1267
      %1643 = vmatprep.subr.mxu0 0.0
      %1644 = vmatpush1.msra.mxu0 %v1266
      %1645 = vmatprep.subr.mxu0 0.0
      %1646 = vmatpush1.msra.mxu0 %v1265
      %1647 = vmatprep.subr.mxu0 0.0
      %1648 = vmatpush1.msra.mxu0 %v1264
      %1649 = vmatprep.subr.mxu0 0.0
      %1650 = vmatpush1.msra.mxu0 %v1263
      %1651 = vmatprep.subr.mxu0 0.0
      %1652 = vmatpush1.msra.mxu0 %v1262
      %1653 = vmatprep.subr.mxu0 0.0
      %1654 = vmatpush2.msra.mxu0 %v1293
      %1655 = vmatprep.subr.mxu0 0.0
      %1656 = vmatpush2.msra.mxu0 %v1292
      %1657 = vmatprep.subr.mxu0 0.0
      %1658 = vmatpush2.msra.mxu0 %v1291
      %1659 = vmatprep.subr.mxu0 0.0
      %1660 = vmatpush2.msra.mxu0 %v1290
      %1661 = vmatprep.subr.mxu0 0.0
      %1662 = vmatpush2.msra.mxu0 %v1289
      %1663 = vmatprep.subr.mxu0 0.0
      %1664 = vmatpush2.msra.mxu0 %v1288
      %1665 = vmatprep.subr.mxu0 0.0
      %1666 = vmatpush2.msra.mxu0 %v1287
      %1667 = vmatprep.subr.mxu0 0.0
      %1668 = vmatpush2.msra.mxu0 %v1286
      %1669 = vmatprep.subr.mxu0 0.0
      %1670 = vmatpush2.msra.mxu0 %v1285
      %1671 = vmatprep.subr.mxu0 0.0
      %1672 = vmatpush2.msra.mxu0 %v1284
      %1673 = vmatprep.subr.mxu0 0.0
      %1674 = vmatpush2.msra.mxu0 %v1283
      %1675 = vmatprep.subr.mxu0 0.0
      %1676 = vmatpush2.msra.mxu0 %v1282
      %1677 = vmatprep.subr.mxu0 0.0
      %1678 = vmatpush2.msra.mxu0 %v1281
      %1679 = vmatprep.subr.mxu0 0.0
      %1680 = vmatpush2.msra.mxu0 %v1280
      %1681 = vmatprep.subr.mxu0 0.0
      %1682 = vmatpush2.msra.mxu0 %v1279
      %1683 = vmatprep.subr.mxu0 0.0
      %1684 = vmatpush2.msra.mxu0 %v1278
      %1685 = vmatprep.mubr.f32.mxu0 %v1361
      %1686 = vmatmul.mubr.f32.gmra.mxu0 %v1360
      %v1687 = vpop.f32.mrf.mxu0
      %v1688 = vadd.f32 0.0, %v1687
      %v1689 = vpop.f32.mrf.mxu0
      %1690 = vmatprep.mubr.f32.mxu0 %v1368
      %1691 = vmatmul.mubr.f32.gmra.mxu0 %v1367
      %v1692 = vpop.f32.mrf.mxu0
      %v1693 = vadd.f32 0.0, %v1692
      %v1694 = vpop.f32.mrf.mxu0
      %1695 = vmatprep.mubr.f32.mxu0 %v1375
      %1696 = vmatmul.mubr.f32.gmra.mxu0 %v1374
      %v1697 = vpop.f32.mrf.mxu0
      %v1698 = vadd.f32 0.0, %v1697
      %v1699 = vpop.f32.mrf.mxu0
      %1700 = vmatprep.mubr.f32.mxu0 %v1382
      %1701 = vmatmul.mubr.f32.gmra.mxu0 %v1381
      %v1702 = vpop.f32.mrf.mxu0
      %v1703 = vadd.f32 0.0, %v1702
      %v1704 = vpop.f32.mrf.mxu0
      %1705 = vmatprep.mubr.f32.mxu0 %v1389
      %1706 = vmatmul.mubr.f32.gmra.mxu0 %v1388
      %v1707 = vpop.f32.mrf.mxu0
      %v1708 = vadd.f32 0.0, %v1707
      %v1709 = vpop.f32.mrf.mxu0
      %1710 = vmatprep.mubr.f32.mxu0 %v1396
      %1711 = vmatmul.mubr.f32.gmra.mxu0 %v1395
      %v1712 = vpop.f32.mrf.mxu0
      %v1713 = vadd.f32 0.0, %v1712
      %v1714 = vpop.f32.mrf.mxu0
      %1715 = vmatprep.mubr.f32.mxu0 %v1403
      %1716 = vmatmul.mubr.f32.gmra.mxu0 %v1402
      %v1717 = vpop.f32.mrf.mxu0
      %v1718 = vadd.f32 0.0, %v1717
      %v1719 = vpop.f32.mrf.mxu0
      %1720 = vmatprep.mubr.f32.mxu0 %v1410
      %1721 = vmatmul.mubr.f32.gmra.mxu0 %v1409
      %v1722 = vpop.f32.mrf.mxu0
      %v1723 = vadd.f32 0.0, %v1722
      %v1724 = vpop.f32.mrf.mxu0
      %1725 = vmatprep.mubr.f32.mxu0 %v1417
      %1726 = vmatmul.mubr.f32.gmra.mxu0 %v1416
      %v1727 = vpop.f32.mrf.mxu0
      %v1728 = vadd.f32 0.0, %v1727
      %v1729 = vpop.f32.mrf.mxu0
      %1730 = vmatprep.mubr.f32.mxu0 %v1424
      %1731 = vmatmul.mubr.f32.gmra.mxu0 %v1423
      %v1732 = vpop.f32.mrf.mxu0
      %v1733 = vadd.f32 0.0, %v1732
      %v1734 = vpop.f32.mrf.mxu0
      %1735 = vmatprep.mubr.f32.mxu0 %v1431
      %1736 = vmatmul.mubr.f32.gmra.mxu0 %v1430
      %v1737 = vpop.f32.mrf.mxu0
      %v1738 = vadd.f32 0.0, %v1737
      %v1739 = vpop.f32.mrf.mxu0
      %1740 = vmatprep.mubr.f32.mxu0 %v1438
      %1741 = vmatmul.mubr.f32.gmra.mxu0 %v1437
      %v1742 = vpop.f32.mrf.mxu0
      %v1743 = vadd.f32 0.0, %v1742
      %v1744 = vpop.f32.mrf.mxu0
      %1745 = vmatprep.mubr.f32.mxu0 %v1445
      %1746 = vmatmul.mubr.f32.gmra.mxu0 %v1444
      %v1747 = vpop.f32.mrf.mxu0
      %v1748 = vadd.f32 0.0, %v1747
      %v1749 = vpop.f32.mrf.mxu0
      %1750 = vmatprep.mubr.f32.mxu0 %v1452
      %1751 = vmatmul.mubr.f32.gmra.mxu0 %v1451
      %v1752 = vpop.f32.mrf.mxu0
      %v1753 = vadd.f32 0.0, %v1752
      %v1754 = vpop.f32.mrf.mxu0
      %1755 = vmatprep.mubr.f32.mxu0 %v1459
      %1756 = vmatmul.mubr.f32.gmra.mxu0 %v1458
      %v1757 = vpop.f32.mrf.mxu0
      %v1758 = vadd.f32 0.0, %v1757
      %v1759 = vpop.f32.mrf.mxu0
      %1760 = vmatprep.mubr.f32.mxu0 %v1466
      %1761 = vmatmul.mubr.f32.gmra.mxu0 %v1465
      %v1762 = vpop.f32.mrf.mxu0
      %v1763 = vadd.f32 0.0, %v1762
      %v1764 = vpop.f32.mrf.mxu0
      %1765 = vmatprep.mubr.f32.mxu0 %v1473
      %1766 = vmatmul.mubr.f32.gmra.mxu0 %v1472
      %v1767 = vpop.f32.mrf.mxu0
      %v1768 = vadd.f32 0.0, %v1767
      %v1769 = vpop.f32.mrf.mxu0
      %1770 = vmatprep.mubr.f32.mxu0 %v1480
      %1771 = vmatmul.mubr.f32.gmra.mxu0 %v1479
      %v1772 = vpop.f32.mrf.mxu0
      %v1773 = vadd.f32 0.0, %v1772
      %v1774 = vpop.f32.mrf.mxu0
      %1775 = vmatprep.mubr.f32.mxu0 %v1487
      %1776 = vmatmul.mubr.f32.gmra.mxu0 %v1486
      %v1777 = vpop.f32.mrf.mxu0
      %v1778 = vadd.f32 0.0, %v1777
      %v1779 = vpop.f32.mrf.mxu0
      %1780 = vmatprep.mubr.f32.mxu0 %v1494
      %1781 = vmatmul.mubr.f32.gmra.mxu0 %v1493
      %v1782 = vpop.f32.mrf.mxu0
      %v1783 = vadd.f32 0.0, %v1782
      %v1784 = vpop.f32.mrf.mxu0
      %1785 = vmatprep.mubr.f32.mxu0 %v1501
      %1786 = vmatmul.mubr.f32.gmra.mxu0 %v1500
      %v1787 = vpop.f32.mrf.mxu0
      %v1788 = vadd.f32 0.0, %v1787
      %v1789 = vpop.f32.mrf.mxu0
      %1790 = vmatprep.mubr.f32.mxu0 %v1508
      %1791 = vmatmul.mubr.f32.gmra.mxu0 %v1507
      %v1792 = vpop.f32.mrf.mxu0
      %v1793 = vadd.f32 0.0, %v1792
      %v1794 = vpop.f32.mrf.mxu0
      %1795 = vmatprep.mubr.f32.mxu0 %v1515
      %1796 = vmatmul.mubr.f32.gmra.mxu0 %v1514
      %v1797 = vpop.f32.mrf.mxu0
      %v1798 = vadd.f32 0.0, %v1797
      %v1799 = vpop.f32.mrf.mxu0
      %1800 = vmatprep.mubr.f32.mxu0 %v1522
      %1801 = vmatmul.mubr.f32.gmra.mxu0 %v1521
      %v1802 = vpop.f32.mrf.mxu0
      %v1803 = vadd.f32 0.0, %v1802
      %v1804 = vpop.f32.mrf.mxu0
      %1805 = vmatprep.mubr.f32.mxu0 %v1529
      %1806 = vmatmul.mubr.f32.gmra.mxu0 %v1528
      %v1807 = vpop.f32.mrf.mxu0
      %v1808 = vadd.f32 0.0, %v1807
      %v1809 = vpop.f32.mrf.mxu0
      %1810 = vmatprep.mubr.f32.mxu0 %v1536
      %1811 = vmatmul.mubr.f32.gmra.mxu0 %v1535
      %v1812 = vpop.f32.mrf.mxu0
      %v1813 = vpop.f32.mrf.mxu0
      %1814 = vdwg.mxu0
      %1815 = vmatprep.subr.mxu0 0.0
      %1816 = vmatpush1.msra.mxu0 %v1309
      %1817 = vmatprep.subr.mxu0 0.0
      %1818 = vmatpush1.msra.mxu0 %v1308
      %1819 = vmatprep.subr.mxu0 0.0
      %1820 = vmatpush1.msra.mxu0 %v1307
      %1821 = vmatprep.subr.mxu0 0.0
      %1822 = vmatpush1.msra.mxu0 %v1306
      %1823 = vmatprep.subr.mxu0 0.0
      %1824 = vmatpush1.msra.mxu0 %v1305
      %1825 = vmatprep.subr.mxu0 0.0
      %1826 = vmatpush1.msra.mxu0 %v1304
      %1827 = vmatprep.subr.mxu0 0.0
      %1828 = vmatpush1.msra.mxu0 %v1303
      %1829 = vmatprep.subr.mxu0 0.0
      %1830 = vmatpush1.msra.mxu0 %v1302
      %1831 = vmatprep.subr.mxu0 0.0
      %1832 = vmatpush1.msra.mxu0 %v1301
      %1833 = vmatprep.subr.mxu0 0.0
      %1834 = vmatpush1.msra.mxu0 %v1300
      %1835 = vmatprep.subr.mxu0 0.0
      %1836 = vmatpush1.msra.mxu0 %v1299
      %1837 = vmatprep.subr.mxu0 0.0
      %1838 = vmatpush1.msra.mxu0 %v1298
      %1839 = vmatprep.subr.mxu0 0.0
      %1840 = vmatpush1.msra.mxu0 %v1297
      %1841 = vmatprep.subr.mxu0 0.0
      %1842 = vmatpush1.msra.mxu0 %v1296
      %1843 = vmatprep.subr.mxu0 0.0
      %1844 = vmatpush1.msra.mxu0 %v1295
      %1845 = vmatprep.subr.mxu0 0.0
      %1846 = vmatpush1.msra.mxu0 %v1294
      %1847 = vmatprep.subr.mxu0 0.0
      %1848 = vmatpush2.msra.mxu0 %v1325
      %1849 = vmatprep.subr.mxu0 0.0
      %1850 = vmatpush2.msra.mxu0 %v1324
      %1851 = vmatprep.subr.mxu0 0.0
      %1852 = vmatpush2.msra.mxu0 %v1323
      %1853 = vmatprep.subr.mxu0 0.0
      %1854 = vmatpush2.msra.mxu0 %v1322
      %1855 = vmatprep.subr.mxu0 0.0
      %1856 = vmatpush2.msra.mxu0 %v1321
      %1857 = vmatprep.subr.mxu0 0.0
      %1858 = vmatpush2.msra.mxu0 %v1320
      %1859 = vmatprep.subr.mxu0 0.0
      %1860 = vmatpush2.msra.mxu0 %v1319
      %1861 = vmatprep.subr.mxu0 0.0
      %1862 = vmatpush2.msra.mxu0 %v1318
      %1863 = vmatprep.subr.mxu0 0.0
      %1864 = vmatpush2.msra.mxu0 %v1317
      %1865 = vmatprep.subr.mxu0 0.0
      %1866 = vmatpush2.msra.mxu0 %v1316
      %1867 = vmatprep.subr.mxu0 0.0
      %1868 = vmatpush2.msra.mxu0 %v1315
      %1869 = vmatprep.subr.mxu0 0.0
      %1870 = vmatpush2.msra.mxu0 %v1314
      %1871 = vmatprep.subr.mxu0 0.0
      %1872 = vmatpush2.msra.mxu0 %v1313
      %1873 = vmatprep.subr.mxu0 0.0
      %1874 = vmatpush2.msra.mxu0 %v1312
      %1875 = vmatprep.subr.mxu0 0.0
      %1876 = vmatpush2.msra.mxu0 %v1311
      %1877 = vmatprep.subr.mxu0 0.0
      %1878 = vmatpush2.msra.mxu0 %v1310
      %1879 = vmatprep.mubr.f32.mxu0 %v1363
      %1880 = vmatmul.mubr.f32.gmra.mxu0 %v1362
      %v1881 = vpop.f32.mrf.mxu0
      %v1882 = vadd.f32 %v1688, %v1881
      %v1883 = vpop.f32.mrf.mxu0
      %1884 = vmatprep.mubr.f32.mxu0 %v1370
      %1885 = vmatmul.mubr.f32.gmra.mxu0 %v1369
      %v1886 = vpop.f32.mrf.mxu0
      %v1887 = vadd.f32 %v1693, %v1886
      %v1888 = vpop.f32.mrf.mxu0
      %1889 = vmatprep.mubr.f32.mxu0 %v1377
      %1890 = vmatmul.mubr.f32.gmra.mxu0 %v1376
      %v1891 = vpop.f32.mrf.mxu0
      %v1892 = vadd.f32 %v1698, %v1891
      %v1893 = vpop.f32.mrf.mxu0
      %1894 = vmatprep.mubr.f32.mxu0 %v1384
      %1895 = vmatmul.mubr.f32.gmra.mxu0 %v1383
      %v1896 = vpop.f32.mrf.mxu0
      %v1897 = vadd.f32 %v1703, %v1896
      %v1898 = vpop.f32.mrf.mxu0
      %1899 = vmatprep.mubr.f32.mxu0 %v1391
      %1900 = vmatmul.mubr.f32.gmra.mxu0 %v1390
      %v1901 = vpop.f32.mrf.mxu0
      %v1902 = vadd.f32 %v1708, %v1901
      %v1903 = vpop.f32.mrf.mxu0
      %1904 = vmatprep.mubr.f32.mxu0 %v1398
      %1905 = vmatmul.mubr.f32.gmra.mxu0 %v1397
      %v1906 = vpop.f32.mrf.mxu0
      %v1907 = vadd.f32 %v1713, %v1906
      %v1908 = vpop.f32.mrf.mxu0
      %1909 = vmatprep.mubr.f32.mxu0 %v1405
      %1910 = vmatmul.mubr.f32.gmra.mxu0 %v1404
      %v1911 = vpop.f32.mrf.mxu0
      %v1912 = vadd.f32 %v1718, %v1911
      %v1913 = vpop.f32.mrf.mxu0
      %1914 = vmatprep.mubr.f32.mxu0 %v1412
      %1915 = vmatmul.mubr.f32.gmra.mxu0 %v1411
      %v1916 = vpop.f32.mrf.mxu0
      %v1917 = vadd.f32 %v1723, %v1916
      %v1918 = vpop.f32.mrf.mxu0
      %1919 = vmatprep.mubr.f32.mxu0 %v1419
      %1920 = vmatmul.mubr.f32.gmra.mxu0 %v1418
      %v1921 = vpop.f32.mrf.mxu0
      %v1922 = vadd.f32 %v1728, %v1921
      %v1923 = vpop.f32.mrf.mxu0
      %1924 = vmatprep.mubr.f32.mxu0 %v1426
      %1925 = vmatmul.mubr.f32.gmra.mxu0 %v1425
      %v1926 = vpop.f32.mrf.mxu0
      %v1927 = vadd.f32 %v1733, %v1926
      %v1928 = vpop.f32.mrf.mxu0
      %1929 = vmatprep.mubr.f32.mxu0 %v1433
      %1930 = vmatmul.mubr.f32.gmra.mxu0 %v1432
      %v1931 = vpop.f32.mrf.mxu0
      %v1932 = vadd.f32 %v1738, %v1931
      %v1933 = vpop.f32.mrf.mxu0
      %1934 = vmatprep.mubr.f32.mxu0 %v1440
      %1935 = vmatmul.mubr.f32.gmra.mxu0 %v1439
      %v1936 = vpop.f32.mrf.mxu0
      %v1937 = vadd.f32 %v1743, %v1936
      %v1938 = vpop.f32.mrf.mxu0
      %1939 = vmatprep.mubr.f32.mxu0 %v1447
      %1940 = vmatmul.mubr.f32.gmra.mxu0 %v1446
      %v1941 = vpop.f32.mrf.mxu0
      %v1942 = vadd.f32 %v1748, %v1941
      %v1943 = vpop.f32.mrf.mxu0
      %1944 = vmatprep.mubr.f32.mxu0 %v1454
      %1945 = vmatmul.mubr.f32.gmra.mxu0 %v1453
      %v1946 = vpop.f32.mrf.mxu0
      %v1947 = vadd.f32 %v1753, %v1946
      %v1948 = vpop.f32.mrf.mxu0
      %1949 = vmatprep.mubr.f32.mxu0 %v1461
      %1950 = vmatmul.mubr.f32.gmra.mxu0 %v1460
      %v1951 = vpop.f32.mrf.mxu0
      %v1952 = vadd.f32 %v1758, %v1951
      %v1953 = vpop.f32.mrf.mxu0
      %1954 = vmatprep.mubr.f32.mxu0 %v1468
      %1955 = vmatmul.mubr.f32.gmra.mxu0 %v1467
      %v1956 = vpop.f32.mrf.mxu0
      %v1957 = vadd.f32 %v1763, %v1956
      %v1958 = vpop.f32.mrf.mxu0
      %1959 = vmatprep.mubr.f32.mxu0 %v1475
      %1960 = vmatmul.mubr.f32.gmra.mxu0 %v1474
      %v1961 = vpop.f32.mrf.mxu0
      %v1962 = vadd.f32 %v1768, %v1961
      %v1963 = vpop.f32.mrf.mxu0
      %1964 = vmatprep.mubr.f32.mxu0 %v1482
      %1965 = vmatmul.mubr.f32.gmra.mxu0 %v1481
      %v1966 = vpop.f32.mrf.mxu0
      %v1967 = vadd.f32 %v1773, %v1966
      %v1968 = vpop.f32.mrf.mxu0
      %1969 = vmatprep.mubr.f32.mxu0 %v1489
      %1970 = vmatmul.mubr.f32.gmra.mxu0 %v1488
      %v1971 = vpop.f32.mrf.mxu0
      %v1972 = vadd.f32 %v1778, %v1971
      %v1973 = vpop.f32.mrf.mxu0
      %1974 = vmatprep.mubr.f32.mxu0 %v1496
      %1975 = vmatmul.mubr.f32.gmra.mxu0 %v1495
      %v1976 = vpop.f32.mrf.mxu0
      %v1977 = vadd.f32 %v1783, %v1976
      %v1978 = vpop.f32.mrf.mxu0
      %1979 = vmatprep.mubr.f32.mxu0 %v1503
      %1980 = vmatmul.mubr.f32.gmra.mxu0 %v1502
      %v1981 = vpop.f32.mrf.mxu0
      %v1982 = vadd.f32 %v1788, %v1981
      %v1983 = vpop.f32.mrf.mxu0
      %1984 = vmatprep.mubr.f32.mxu0 %v1510
      %1985 = vmatmul.mubr.f32.gmra.mxu0 %v1509
      %v1986 = vpop.f32.mrf.mxu0
      %v1987 = vadd.f32 %v1793, %v1986
      %v1988 = vpop.f32.mrf.mxu0
      %1989 = vmatprep.mubr.f32.mxu0 %v1517
      %1990 = vmatmul.mubr.f32.gmra.mxu0 %v1516
      %v1991 = vpop.f32.mrf.mxu0
      %v1992 = vadd.f32 %v1798, %v1991
      %v1993 = vpop.f32.mrf.mxu0
      %1994 = vmatprep.mubr.f32.mxu0 %v1524
      %1995 = vmatmul.mubr.f32.gmra.mxu0 %v1523
      %v1996 = vpop.f32.mrf.mxu0
      %v1997 = vadd.f32 %v1803, %v1996
      %v1998 = vpop.f32.mrf.mxu0
      %1999 = vmatprep.mubr.f32.mxu0 %v1531
      %2000 = vmatmul.mubr.f32.gmra.mxu0 %v1530
      %v2001 = vpop.f32.mrf.mxu0
      %v2002 = vadd.f32 %v1808, %v2001
      %v2003 = vpop.f32.mrf.mxu0
      %2004 = vmatprep.mubr.f32.mxu0 %v1538
      %2005 = vmatmul.mubr.f32.gmra.mxu0 %v1537
      %v2006 = vpop.f32.mrf.mxu0
      %v2007 = vpop.f32.mrf.mxu0
      %2008 = vdwg.mxu0
      %2009 = vmatprep.subr.mxu0 0.0
      %2010 = vmatpush1.msra.mxu0 %v1341
      %2011 = vmatprep.subr.mxu0 0.0
      %2012 = vmatpush1.msra.mxu0 %v1340
      %2013 = vmatprep.subr.mxu0 0.0
      %2014 = vmatpush1.msra.mxu0 %v1339
      %2015 = vmatprep.subr.mxu0 0.0
      %2016 = vmatpush1.msra.mxu0 %v1338
      %2017 = vmatprep.subr.mxu0 0.0
      %2018 = vmatpush1.msra.mxu0 %v1337
      %2019 = vmatprep.subr.mxu0 0.0
      %2020 = vmatpush1.msra.mxu0 %v1336
      %2021 = vmatprep.subr.mxu0 0.0
      %2022 = vmatpush1.msra.mxu0 %v1335
      %2023 = vmatprep.subr.mxu0 0.0
      %2024 = vmatpush1.msra.mxu0 %v1334
      %2025 = vmatprep.subr.mxu0 0.0
      %2026 = vmatpush1.msra.mxu0 %v1333
      %2027 = vmatprep.subr.mxu0 0.0
      %2028 = vmatpush1.msra.mxu0 %v1332
      %2029 = vmatprep.subr.mxu0 0.0
      %2030 = vmatpush1.msra.mxu0 %v1331
      %2031 = vmatprep.subr.mxu0 0.0
      %2032 = vmatpush1.msra.mxu0 %v1330
      %2033 = vmatprep.subr.mxu0 0.0
      %2034 = vmatpush1.msra.mxu0 %v1329
      %2035 = vmatprep.subr.mxu0 0.0
      %2036 = vmatpush1.msra.mxu0 %v1328
      %2037 = vmatprep.subr.mxu0 0.0
      %2038 = vmatpush1.msra.mxu0 %v1327
      %2039 = vmatprep.subr.mxu0 0.0
      %2040 = vmatpush1.msra.mxu0 %v1326
      %2041 = vmatprep.subr.mxu0 0.0
      %2042 = vmatpush2.msra.mxu0 %v1357
      %2043 = vmatprep.subr.mxu0 0.0
      %2044 = vmatpush2.msra.mxu0 %v1356
      %2045 = vmatprep.subr.mxu0 0.0
      %2046 = vmatpush2.msra.mxu0 %v1355
      %2047 = vmatprep.subr.mxu0 0.0
      %2048 = vmatpush2.msra.mxu0 %v1354
      %2049 = vmatprep.subr.mxu0 0.0
      %2050 = vmatpush2.msra.mxu0 %v1353
      %2051 = vmatprep.subr.mxu0 0.0
      %2052 = vmatpush2.msra.mxu0 %v1352
      %2053 = vmatprep.subr.mxu0 0.0
      %2054 = vmatpush2.msra.mxu0 %v1351
      %2055 = vmatprep.subr.mxu0 0.0
      %2056 = vmatpush2.msra.mxu0 %v1350
      %2057 = vmatprep.subr.mxu0 0.0
      %2058 = vmatpush2.msra.mxu0 %v1349
      %2059 = vmatprep.subr.mxu0 0.0
      %2060 = vmatpush2.msra.mxu0 %v1348
      %2061 = vmatprep.subr.mxu0 0.0
      %2062 = vmatpush2.msra.mxu0 %v1347
      %2063 = vmatprep.subr.mxu0 0.0
      %2064 = vmatpush2.msra.mxu0 %v1346
      %2065 = vmatprep.subr.mxu0 0.0
      %2066 = vmatpush2.msra.mxu0 %v1345
      %2067 = vmatprep.subr.mxu0 0.0
      %2068 = vmatpush2.msra.mxu0 %v1344
      %2069 = vmatprep.subr.mxu0 0.0
      %2070 = vmatpush2.msra.mxu0 %v1343
      %2071 = vmatprep.subr.mxu0 0.0
      %2072 = vmatpush2.msra.mxu0 %v1342
      %2073 = vmatprep.mubr.f32.mxu0 %v1365
      %2074 = vmatmul.mubr.f32.gmra.mxu0 %v1364
      %v2075 = vpop.f32.mrf.mxu0
      %v2076 = vadd.f32 %v1882, %v2075
      %v2077 = vpop.f32.mrf.mxu0
      %2078 = vmatprep.mubr.f32.mxu0 %v1372
      %2079 = vmatmul.mubr.f32.gmra.mxu0 %v1371
      %v2080 = vpop.f32.mrf.mxu0
      %v2081 = vadd.f32 %v1887, %v2080
      %v2082 = vpop.f32.mrf.mxu0
      %2083 = vmatprep.mubr.f32.mxu0 %v1379
      %2084 = vmatmul.mubr.f32.gmra.mxu0 %v1378
      %v2085 = vpop.f32.mrf.mxu0
      %v2086 = vadd.f32 %v1892, %v2085
      %v2087 = vpop.f32.mrf.mxu0
      %2088 = vmatprep.mubr.f32.mxu0 %v1386
      %2089 = vmatmul.mubr.f32.gmra.mxu0 %v1385
      %v2090 = vpop.f32.mrf.mxu0
      %v2091 = vadd.f32 %v1897, %v2090
      %v2092 = vpop.f32.mrf.mxu0
      %2093 = vmatprep.mubr.f32.mxu0 %v1393
      %2094 = vmatmul.mubr.f32.gmra.mxu0 %v1392
      %v2095 = vpop.f32.mrf.mxu0
      %v2096 = vadd.f32 %v1902, %v2095
      %v2097 = vpop.f32.mrf.mxu0
      %2098 = vmatprep.mubr.f32.mxu0 %v1400
      %2099 = vmatmul.mubr.f32.gmra.mxu0 %v1399
      %v2100 = vpop.f32.mrf.mxu0
      %v2101 = vadd.f32 %v1907, %v2100
      %v2102 = vpop.f32.mrf.mxu0
      %2103 = vmatprep.mubr.f32.mxu0 %v1407
      %2104 = vmatmul.mubr.f32.gmra.mxu0 %v1406
      %v2105 = vpop.f32.mrf.mxu0
      %v2106 = vadd.f32 %v1912, %v2105
      %v2107 = vpop.f32.mrf.mxu0
      %2108 = vmatprep.mubr.f32.mxu0 %v1414
      %2109 = vmatmul.mubr.f32.gmra.mxu0 %v1413
      %v2110 = vpop.f32.mrf.mxu0
      %v2111 = vadd.f32 %v1917, %v2110
      %v2112 = vpop.f32.mrf.mxu0
      %2113 = vmatprep.mubr.f32.mxu0 %v1421
      %2114 = vmatmul.mubr.f32.gmra.mxu0 %v1420
      %v2115 = vpop.f32.mrf.mxu0
      %v2116 = vadd.f32 %v1922, %v2115
      %v2117 = vpop.f32.mrf.mxu0
      %2118 = vmatprep.mubr.f32.mxu0 %v1428
      %2119 = vmatmul.mubr.f32.gmra.mxu0 %v1427
      %v2120 = vpop.f32.mrf.mxu0
      %v2121 = vadd.f32 %v1927, %v2120
      %v2122 = vpop.f32.mrf.mxu0
      %2123 = vmatprep.mubr.f32.mxu0 %v1435
      %2124 = vmatmul.mubr.f32.gmra.mxu0 %v1434
      %v2125 = vpop.f32.mrf.mxu0
      %v2126 = vadd.f32 %v1932, %v2125
      %v2127 = vpop.f32.mrf.mxu0
      %2128 = vmatprep.mubr.f32.mxu0 %v1442
      %2129 = vmatmul.mubr.f32.gmra.mxu0 %v1441
      %v2130 = vpop.f32.mrf.mxu0
      %v2131 = vadd.f32 %v1937, %v2130
      %v2132 = vpop.f32.mrf.mxu0
      %2133 = vmatprep.mubr.f32.mxu0 %v1449
      %2134 = vmatmul.mubr.f32.gmra.mxu0 %v1448
      %v2135 = vpop.f32.mrf.mxu0
      %v2136 = vadd.f32 %v1942, %v2135
      %v2137 = vpop.f32.mrf.mxu0
      %2138 = vmatprep.mubr.f32.mxu0 %v1456
      %2139 = vmatmul.mubr.f32.gmra.mxu0 %v1455
      %v2140 = vpop.f32.mrf.mxu0
      %v2141 = vadd.f32 %v1947, %v2140
      %v2142 = vpop.f32.mrf.mxu0
      %2143 = vmatprep.mubr.f32.mxu0 %v1463
      %2144 = vmatmul.mubr.f32.gmra.mxu0 %v1462
      %v2145 = vpop.f32.mrf.mxu0
      %v2146 = vadd.f32 %v1952, %v2145
      %v2147 = vpop.f32.mrf.mxu0
      %2148 = vmatprep.mubr.f32.mxu0 %v1470
      %2149 = vmatmul.mubr.f32.gmra.mxu0 %v1469
      %v2150 = vpop.f32.mrf.mxu0
      %v2151 = vadd.f32 %v1957, %v2150
      %v2152 = vpop.f32.mrf.mxu0
      %2153 = vmatprep.mubr.f32.mxu0 %v1477
      %2154 = vmatmul.mubr.f32.gmra.mxu0 %v1476
      %v2155 = vpop.f32.mrf.mxu0
      %v2156 = vadd.f32 %v1962, %v2155
      %v2157 = vpop.f32.mrf.mxu0
      %2158 = vmatprep.mubr.f32.mxu0 %v1484
      %2159 = vmatmul.mubr.f32.gmra.mxu0 %v1483
      %v2160 = vpop.f32.mrf.mxu0
      %v2161 = vadd.f32 %v1967, %v2160
      %v2162 = vpop.f32.mrf.mxu0
      %2163 = vmatprep.mubr.f32.mxu0 %v1491
      %2164 = vmatmul.mubr.f32.gmra.mxu0 %v1490
      %v2165 = vpop.f32.mrf.mxu0
      %v2166 = vadd.f32 %v1972, %v2165
      %v2167 = vpop.f32.mrf.mxu0
      %2168 = vmatprep.mubr.f32.mxu0 %v1498
      %2169 = vmatmul.mubr.f32.gmra.mxu0 %v1497
      %v2170 = vpop.f32.mrf.mxu0
      %v2171 = vadd.f32 %v1977, %v2170
      %v2172 = vpop.f32.mrf.mxu0
      %2173 = vmatprep.mubr.f32.mxu0 %v1505
      %2174 = vmatmul.mubr.f32.gmra.mxu0 %v1504
      %v2175 = vpop.f32.mrf.mxu0
      %v2176 = vadd.f32 %v1982, %v2175
      %v2177 = vpop.f32.mrf.mxu0
      %2178 = vmatprep.mubr.f32.mxu0 %v1512
      %2179 = vmatmul.mubr.f32.gmra.mxu0 %v1511
      %v2180 = vpop.f32.mrf.mxu0
      %v2181 = vadd.f32 %v1987, %v2180
      %v2182 = vpop.f32.mrf.mxu0
      %2183 = vmatprep.mubr.f32.mxu0 %v1519
      %2184 = vmatmul.mubr.f32.gmra.mxu0 %v1518
      %v2185 = vpop.f32.mrf.mxu0
      %v2186 = vadd.f32 %v1992, %v2185
      %v2187 = vpop.f32.mrf.mxu0
      %2188 = vmatprep.mubr.f32.mxu0 %v1526
      %2189 = vmatmul.mubr.f32.gmra.mxu0 %v1525
      %v2190 = vpop.f32.mrf.mxu0
      %v2191 = vadd.f32 %v1997, %v2190
      %v2192 = vpop.f32.mrf.mxu0
      %2193 = vmatprep.mubr.f32.mxu0 %v1533
      %2194 = vmatmul.mubr.f32.gmra.mxu0 %v1532
      %v2195 = vpop.f32.mrf.mxu0
      %v2196 = vadd.f32 %v2002, %v2195
      %v2197 = vpop.f32.mrf.mxu0
      %2198 = vmatprep.mubr.f32.mxu0 %v1540
      %2199 = vmatmul.mubr.f32.gmra.mxu0 %v1539
      %v2200 = vpop.f32.mrf.mxu0
      %v2201 = vpop.f32.mrf.mxu0
      %2202 = vdwg.mxu0
      %2203 = vmatprep.subr.mxu0 0.0
      %2204 = vmatpush1.msra.mxu0 0.0
      %2205 = vmatprep.subr.mxu0 0.0
      %2206 = vmatpush1.msra.mxu0 0.0
      %2207 = vmatprep.subr.mxu0 0.0
      %2208 = vmatpush1.msra.mxu0 0.0
      %2209 = vmatprep.subr.mxu0 0.0
      %2210 = vmatpush1.msra.mxu0 0.0
      %2211 = vmatprep.subr.mxu0 0.0
      %2212 = vmatpush1.msra.mxu0 0.0
      %2213 = vmatprep.subr.mxu0 0.0
      %2214 = vmatpush1.msra.mxu0 0.0
      %2215 = vmatprep.subr.mxu0 0.0
      %2216 = vmatpush1.msra.mxu0 0.0
      %2217 = vmatprep.subr.mxu0 0.0
      %2218 = vmatpush1.msra.mxu0 0.0
      %2219 = vmatprep.subr.mxu0 0.0
      %2220 = vmatpush1.msra.mxu0 0.0
      %2221 = vmatprep.subr.mxu0 0.0
      %2222 = vmatpush1.msra.mxu0 0.0
      %2223 = vmatprep.subr.mxu0 0.0
      %2224 = vmatpush1.msra.mxu0 0.0
      %2225 = vmatprep.subr.mxu0 0.0
      %2226 = vmatpush1.msra.mxu0 0.0
      %2227 = vmatprep.subr.mxu0 0.0
      %2228 = vmatpush1.msra.mxu0 0.0
      %2229 = vmatprep.subr.mxu0 0.0
      %2230 = vmatpush1.msra.mxu0 0.0
      %2231 = vmatprep.subr.mxu0 0.0
      %2232 = vmatpush1.msra.mxu0 %v1359
      %2233 = vmatprep.subr.mxu0 0.0
      %2234 = vmatpush1.msra.mxu0 %v1358
      %2235 = vmatprep.subr.mxu0 0.0
      %2236 = vmatpush2.msra.mxu0 0.0
      %2237 = vmatprep.subr.mxu0 0.0
      %2238 = vmatpush2.msra.mxu0 0.0
      %2239 = vmatprep.subr.mxu0 0.0
      %2240 = vmatpush2.msra.mxu0 0.0
      %2241 = vmatprep.subr.mxu0 0.0
      %2242 = vmatpush2.msra.mxu0 0.0
      %2243 = vmatprep.subr.mxu0 0.0
      %2244 = vmatpush2.msra.mxu0 0.0
      %2245 = vmatprep.subr.mxu0 0.0
      %2246 = vmatpush2.msra.mxu0 0.0
      %2247 = vmatprep.subr.mxu0 0.0
      %2248 = vmatpush2.msra.mxu0 0.0
      %2249 = vmatprep.subr.mxu0 0.0
      %2250 = vmatpush2.msra.mxu0 0.0
      %2251 = vmatprep.subr.mxu0 0.0
      %2252 = vmatpush2.msra.mxu0 0.0
      %2253 = vmatprep.subr.mxu0 0.0
      %2254 = vmatpush2.msra.mxu0 0.0
      %2255 = vmatprep.subr.mxu0 0.0
      %2256 = vmatpush2.msra.mxu0 0.0
      %2257 = vmatprep.subr.mxu0 0.0
      %2258 = vmatpush2.msra.mxu0 0.0
      %2259 = vmatprep.subr.mxu0 0.0
      %2260 = vmatpush2.msra.mxu0 0.0
      %2261 = vmatprep.subr.mxu0 0.0
      %2262 = vmatpush2.msra.mxu0 0.0
      %2263 = vmatprep.subr.mxu0 0.0
      %2264 = vmatpush2.msra.mxu0 0.0
      %2265 = vmatprep.subr.mxu0 0.0
      %2266 = vmatpush2.msra.mxu0 0.0
      %2267 = vmatprep.mubr.f32.mxu0 0.0
      %2268 = vmatmul.mubr.f32.gmra.mxu0 %v1544
      %v2269 = vpop.f32.mrf.mxu0
      %v2270 = vadd.f32 %v2076, %v2269
      %v2271 = vpop.f32.mrf.mxu0
      %2272 = vmatprep.mubr.f32.mxu0 0.0
      %2273 = vmatmul.mubr.f32.gmra.mxu0 %v1547
      %v2274 = vpop.f32.mrf.mxu0
      %v2275 = vadd.f32 %v2081, %v2274
      %v2276 = vpop.f32.mrf.mxu0
      %2277 = vmatprep.mubr.f32.mxu0 0.0
      %2278 = vmatmul.mubr.f32.gmra.mxu0 %v1550
      %v2279 = vpop.f32.mrf.mxu0
      %v2280 = vadd.f32 %v2086, %v2279
      %v2281 = vpop.f32.mrf.mxu0
      %2282 = vmatprep.mubr.f32.mxu0 0.0
      %2283 = vmatmul.mubr.f32.gmra.mxu0 %v1553
      %v2284 = vpop.f32.mrf.mxu0
      %v2285 = vadd.f32 %v2091, %v2284
      %v2286 = vpop.f32.mrf.mxu0
      %2287 = vmatprep.mubr.f32.mxu0 0.0
      %2288 = vmatmul.mubr.f32.gmra.mxu0 %v1556
      %v2289 = vpop.f32.mrf.mxu0
      %v2290 = vadd.f32 %v2096, %v2289
      %v2291 = vpop.f32.mrf.mxu0
      %2292 = vmatprep.mubr.f32.mxu0 0.0
      %2293 = vmatmul.mubr.f32.gmra.mxu0 %v1559
      %v2294 = vpop.f32.mrf.mxu0
      %v2295 = vadd.f32 %v2101, %v2294
      %v2296 = vpop.f32.mrf.mxu0
      %2297 = vmatprep.mubr.f32.mxu0 0.0
      %2298 = vmatmul.mubr.f32.gmra.mxu0 %v1562
      %v2299 = vpop.f32.mrf.mxu0
      %v2300 = vadd.f32 %v2106, %v2299
      %v2301 = vpop.f32.mrf.mxu0
      %2302 = vmatprep.mubr.f32.mxu0 0.0
      %2303 = vmatmul.mubr.f32.gmra.mxu0 %v1565
      %v2304 = vpop.f32.mrf.mxu0
      %v2305 = vadd.f32 %v2111, %v2304
      %v2306 = vpop.f32.mrf.mxu0
      %2307 = vmatprep.mubr.f32.mxu0 0.0
      %2308 = vmatmul.mubr.f32.gmra.mxu0 %v1568
      %v2309 = vpop.f32.mrf.mxu0
      %v2310 = vadd.f32 %v2116, %v2309
      %v2311 = vpop.f32.mrf.mxu0
      %2312 = vmatprep.mubr.f32.mxu0 0.0
      %2313 = vmatmul.mubr.f32.gmra.mxu0 %v1571
      %v2314 = vpop.f32.mrf.mxu0
      %v2315 = vadd.f32 %v2121, %v2314
      %v2316 = vpop.f32.mrf.mxu0
      %2317 = vmatprep.mubr.f32.mxu0 0.0
      %2318 = vmatmul.mubr.f32.gmra.mxu0 %v1574
      %v2319 = vpop.f32.mrf.mxu0
      %v2320 = vadd.f32 %v2126, %v2319
      %v2321 = vpop.f32.mrf.mxu0
      %2322 = vmatprep.mubr.f32.mxu0 0.0
      %2323 = vmatmul.mubr.f32.gmra.mxu0 %v1577
      %v2324 = vpop.f32.mrf.mxu0
      %v2325 = vadd.f32 %v2131, %v2324
      %v2326 = vpop.f32.mrf.mxu0
      %2327 = vmatprep.mubr.f32.mxu0 0.0
      %2328 = vmatmul.mubr.f32.gmra.mxu0 %v1580
      %v2329 = vpop.f32.mrf.mxu0
      %v2330 = vadd.f32 %v2136, %v2329
      %v2331 = vpop.f32.mrf.mxu0
      %2332 = vmatprep.mubr.f32.mxu0 0.0
      %2333 = vmatmul.mubr.f32.gmra.mxu0 %v1583
      %v2334 = vpop.f32.mrf.mxu0
      %v2335 = vadd.f32 %v2141, %v2334
      %v2336 = vpop.f32.mrf.mxu0
      %2337 = vmatprep.mubr.f32.mxu0 0.0
      %2338 = vmatmul.mubr.f32.gmra.mxu0 %v1586
      %v2339 = vpop.f32.mrf.mxu0
      %v2340 = vadd.f32 %v2146, %v2339
      %v2341 = vpop.f32.mrf.mxu0
      %2342 = vmatprep.mubr.f32.mxu0 0.0
      %2343 = vmatmul.mubr.f32.gmra.mxu0 %v1589
      %v2344 = vpop.f32.mrf.mxu0
      %v2345 = vadd.f32 %v2151, %v2344
      %v2346 = vpop.f32.mrf.mxu0
      %2347 = vmatprep.mubr.f32.mxu0 0.0
      %2348 = vmatmul.mubr.f32.gmra.mxu0 %v1592
      %v2349 = vpop.f32.mrf.mxu0
      %v2350 = vadd.f32 %v2156, %v2349
      %v2351 = vpop.f32.mrf.mxu0
      %2352 = vmatprep.mubr.f32.mxu0 0.0
      %2353 = vmatmul.mubr.f32.gmra.mxu0 %v1595
      %v2354 = vpop.f32.mrf.mxu0
      %v2355 = vadd.f32 %v2161, %v2354
      %v2356 = vpop.f32.mrf.mxu0
      %2357 = vmatprep.mubr.f32.mxu0 0.0
      %2358 = vmatmul.mubr.f32.gmra.mxu0 %v1598
      %v2359 = vpop.f32.mrf.mxu0
      %v2360 = vadd.f32 %v2166, %v2359
      %v2361 = vpop.f32.mrf.mxu0
      %2362 = vmatprep.mubr.f32.mxu0 0.0
      %2363 = vmatmul.mubr.f32.gmra.mxu0 %v1601
      %v2364 = vpop.f32.mrf.mxu0
      %v2365 = vadd.f32 %v2171, %v2364
      %v2366 = vpop.f32.mrf.mxu0
      %2367 = vmatprep.mubr.f32.mxu0 0.0
      %2368 = vmatmul.mubr.f32.gmra.mxu0 %v1604
      %v2369 = vpop.f32.mrf.mxu0
      %v2370 = vadd.f32 %v2176, %v2369
      %v2371 = vpop.f32.mrf.mxu0
      %2372 = vmatprep.mubr.f32.mxu0 0.0
      %2373 = vmatmul.mubr.f32.gmra.mxu0 %v1607
      %v2374 = vpop.f32.mrf.mxu0
      %v2375 = vadd.f32 %v2181, %v2374
      %v2376 = vpop.f32.mrf.mxu0
      %2377 = vmatprep.mubr.f32.mxu0 0.0
      %2378 = vmatmul.mubr.f32.gmra.mxu0 %v1610
      %v2379 = vpop.f32.mrf.mxu0
      %v2380 = vadd.f32 %v2186, %v2379
      %v2381 = vpop.f32.mrf.mxu0
      %2382 = vmatprep.mubr.f32.mxu0 0.0
      %2383 = vmatmul.mubr.f32.gmra.mxu0 %v1613
      %v2384 = vpop.f32.mrf.mxu0
      %v2385 = vadd.f32 %v2191, %v2384
      %v2386 = vpop.f32.mrf.mxu0
      %2387 = vmatprep.mubr.f32.mxu0 0.0
      %2388 = vmatmul.mubr.f32.gmra.mxu0 %v1616
      %v2389 = vpop.f32.mrf.mxu0
      %v2390 = vadd.f32 %v2196, %v2389
      %v2391 = vpop.f32.mrf.mxu0
      %2392 = vmatprep.mubr.f32.mxu0 0.0
      %2393 = vmatmul.mubr.f32.gmra.mxu0 %v1619
      %v2394 = vpop.f32.mrf.mxu0
      %v2395 = vpop.f32.mrf.mxu0
      %2396 = vdwg.mxu0
      %vm2415 = vcmask 1046528
      %v2416 = vrot.slane %v2270, 1
      %v2417 = vrot.slane %v2275, 1
      %v2418 = vsel %vm2415, %v2416, %v2417
      %v2419 = vrot.slane %v2280, 1
      %v2420 = vsel %vm2415, %v2417, %v2419
      %v2421 = vrot.slane %v2285, 1
      %v2422 = vsel %vm2415, %v2419, %v2421
      %v2423 = vrot.slane %v2290, 1
      %v2424 = vsel %vm2415, %v2421, %v2423
      %v2425 = vrot.slane %v2295, 1
      %v2426 = vsel %vm2415, %v2423, %v2425
      %v2427 = vrot.slane %v2300, 1
      %v2428 = vsel %vm2415, %v2425, %v2427
      %v2429 = vrot.slane %v2305, 1
      %v2430 = vsel %vm2415, %v2427, %v2429
      %v2431 = vrot.slane %v2310, 1
      %v2432 = vsel %vm2415, %v2429, %v2431
      %v2433 = vrot.slane %v2315, 1
      %v2434 = vsel %vm2415, %v2431, %v2433
      %v2435 = vrot.slane %v2320, 1
      %v2436 = vsel %vm2415, %v2433, %v2435
      %v2437 = vrot.slane %v2325, 1
      %v2438 = vsel %vm2415, %v2435, %v2437
      %v2439 = vrot.slane %v2330, 1
      %v2440 = vsel %vm2415, %v2437, %v2439
      %v2441 = vrot.slane %v2335, 1
      %v2442 = vsel %vm2415, %v2439, %v2441
      %v2443 = vrot.slane %v2340, 1
      %v2444 = vsel %vm2415, %v2441, %v2443
      %v2445 = vrot.slane %v2345, 1
      %v2446 = vsel %vm2415, %v2443, %v2445
      %v2447 = vrot.slane %v2350, 1
      %v2448 = vsel %vm2415, %v2445, %v2447
      %v2449 = vrot.slane %v2355, 1
      %v2450 = vsel %vm2415, %v2447, %v2449
      %2451 = vrot.lane.b32.xlu0 %v2418, 8
      %v2452 = vpop.permute.xlu0 %2451
      %2453 = vrot.lane.b32.xlu0 %v2420, 8
      %v2454 = vpop.permute.xlu0 %2453
      %2455 = vrot.lane.b32.xlu0 %v2422, 8
      %v2456 = vpop.permute.xlu0 %2455
      %2457 = vrot.lane.b32.xlu0 %v2424, 8
      %v2458 = vpop.permute.xlu0 %2457
      %2459 = vrot.lane.b32.xlu0 %v2426, 8
      %v2460 = vpop.permute.xlu0 %2459
      %2461 = vrot.lane.b32.xlu0 %v2428, 8
      %v2462 = vpop.permute.xlu0 %2461
      %2463 = vrot.lane.b32.xlu0 %v2430, 8
      %v2464 = vpop.permute.xlu0 %2463
      %2465 = vrot.lane.b32.xlu0 %v2432, 8
      %v2466 = vpop.permute.xlu0 %2465
      %2467 = vrot.lane.b32.xlu0 %v2434, 8
      %v2468 = vpop.permute.xlu0 %2467
      %2469 = vrot.lane.b32.xlu0 %v2436, 8
      %v2470 = vpop.permute.xlu0 %2469
      %2471 = vrot.lane.b32.xlu0 %v2438, 8
      %v2472 = vpop.permute.xlu0 %2471
      %2473 = vrot.lane.b32.xlu0 %v2440, 8
      %v2474 = vpop.permute.xlu0 %2473
      %2475 = vrot.lane.b32.xlu0 %v2442, 8
      %v2476 = vpop.permute.xlu0 %2475
      %2477 = vrot.lane.b32.xlu0 %v2444, 8
      %v2478 = vpop.permute.xlu0 %2477
      %2479 = vrot.lane.b32.xlu0 %v2446, 8
      %v2480 = vpop.permute.xlu0 %2479
      %2481 = vrot.lane.b32.xlu0 %v2448, 8
      %v2482 = vpop.permute.xlu0 %2481
      %2483 = vrot.lane.b32.xlu0 %v2450, 8
      %v2484 = vpop.permute.xlu0 %2483
      %2485 = vrot.lane.b32.xlu0 %v2449, 8
      %v2486 = vpop.permute.xlu0 %2485
      %vm2505 = vcmask 1045504
      %v2506 = vrot.slane %v2270, 2
      %v2507 = vrot.slane %v2275, 2
      %v2508 = vsel %vm2505, %v2506, %v2507
      %v2509 = vrot.slane %v2280, 2
      %v2510 = vsel %vm2505, %v2507, %v2509
      %v2511 = vrot.slane %v2285, 2
      %v2512 = vsel %vm2505, %v2509, %v2511
      %v2513 = vrot.slane %v2290, 2
      %v2514 = vsel %vm2505, %v2511, %v2513
      %v2515 = vrot.slane %v2295, 2
      %v2516 = vsel %vm2505, %v2513, %v2515
      %v2517 = vrot.slane %v2300, 2
      %v2518 = vsel %vm2505, %v2515, %v2517
      %v2519 = vrot.slane %v2305, 2
      %v2520 = vsel %vm2505, %v2517, %v2519
      %v2521 = vrot.slane %v2310, 2
      %v2522 = vsel %vm2505, %v2519, %v2521
      %v2523 = vrot.slane %v2315, 2
      %v2524 = vsel %vm2505, %v2521, %v2523
      %v2525 = vrot.slane %v2320, 2
      %v2526 = vsel %vm2505, %v2523, %v2525
      %v2527 = vrot.slane %v2325, 2
      %v2528 = vsel %vm2505, %v2525, %v2527
      %v2529 = vrot.slane %v2330, 2
      %v2530 = vsel %vm2505, %v2527, %v2529
      %v2531 = vrot.slane %v2335, 2
      %v2532 = vsel %vm2505, %v2529, %v2531
      %v2533 = vrot.slane %v2340, 2
      %v2534 = vsel %vm2505, %v2531, %v2533
      %v2535 = vrot.slane %v2345, 2
      %v2536 = vsel %vm2505, %v2533, %v2535
      %v2537 = vrot.slane %v2350, 2
      %v2538 = vsel %vm2505, %v2535, %v2537
      %v2539 = vrot.slane %v2355, 2
      %v2540 = vsel %vm2505, %v2537, %v2539
      %2541 = vrot.lane.b32.xlu0 %v2508, 16
      %v2542 = vpop.permute.xlu0 %2541
      %2543 = vrot.lane.b32.xlu0 %v2510, 16
      %v2544 = vpop.permute.xlu0 %2543
      %2545 = vrot.lane.b32.xlu0 %v2512, 16
      %v2546 = vpop.permute.xlu0 %2545
      %2547 = vrot.lane.b32.xlu0 %v2514, 16
      %v2548 = vpop.permute.xlu0 %2547
      %2549 = vrot.lane.b32.xlu0 %v2516, 16
      %v2550 = vpop.permute.xlu0 %2549
      %2551 = vrot.lane.b32.xlu0 %v2518, 16
      %v2552 = vpop.permute.xlu0 %2551
      %2553 = vrot.lane.b32.xlu0 %v2520, 16
      %v2554 = vpop.permute.xlu0 %2553
      %2555 = vrot.lane.b32.xlu0 %v2522, 16
      %v2556 = vpop.permute.xlu0 %2555
      %2557 = vrot.lane.b32.xlu0 %v2524, 16
      %v2558 = vpop.permute.xlu0 %2557
      %2559 = vrot.lane.b32.xlu0 %v2526, 16
      %v2560 = vpop.permute.xlu0 %2559
      %2561 = vrot.lane.b32.xlu0 %v2528, 16
      %v2562 = vpop.permute.xlu0 %2561
      %2563 = vrot.lane.b32.xlu0 %v2530, 16
      %v2564 = vpop.permute.xlu0 %2563
      %2565 = vrot.lane.b32.xlu0 %v2532, 16
      %v2566 = vpop.permute.xlu0 %2565
      %2567 = vrot.lane.b32.xlu0 %v2534, 16
      %v2568 = vpop.permute.xlu0 %2567
      %2569 = vrot.lane.b32.xlu0 %v2536, 16
      %v2570 = vpop.permute.xlu0 %2569
      %2571 = vrot.lane.b32.xlu0 %v2538, 16
      %v2572 = vpop.permute.xlu0 %2571
      %2573 = vrot.lane.b32.xlu0 %v2540, 16
      %v2574 = vpop.permute.xlu0 %2573
      %2575 = vrot.lane.b32.xlu0 %v2539, 16
      %v2576 = vpop.permute.xlu0 %2575
      %vm2595 = vcmask 1044480
      %v2596 = vrot.slane %v2270, 3
      %v2597 = vrot.slane %v2275, 3
      %v2598 = vsel %vm2595, %v2596, %v2597
      %v2599 = vrot.slane %v2280, 3
      %v2600 = vsel %vm2595, %v2597, %v2599
      %v2601 = vrot.slane %v2285, 3
      %v2602 = vsel %vm2595, %v2599, %v2601
      %v2603 = vrot.slane %v2290, 3
      %v2604 = vsel %vm2595, %v2601, %v2603
      %v2605 = vrot.slane %v2295, 3
      %v2606 = vsel %vm2595, %v2603, %v2605
      %v2607 = vrot.slane %v2300, 3
      %v2608 = vsel %vm2595, %v2605, %v2607
      %v2609 = vrot.slane %v2305, 3
      %v2610 = vsel %vm2595, %v2607, %v2609
      %v2611 = vrot.slane %v2310, 3
      %v2612 = vsel %vm2595, %v2609, %v2611
      %v2613 = vrot.slane %v2315, 3
      %v2614 = vsel %vm2595, %v2611, %v2613
      %v2615 = vrot.slane %v2320, 3
      %v2616 = vsel %vm2595, %v2613, %v2615
      %v2617 = vrot.slane %v2325, 3
      %v2618 = vsel %vm2595, %v2615, %v2617
      %v2619 = vrot.slane %v2330, 3
      %v2620 = vsel %vm2595, %v2617, %v2619
      %v2621 = vrot.slane %v2335, 3
      %v2622 = vsel %vm2595, %v2619, %v2621
      %v2623 = vrot.slane %v2340, 3
      %v2624 = vsel %vm2595, %v2621, %v2623
      %v2625 = vrot.slane %v2345, 3
      %v2626 = vsel %vm2595, %v2623, %v2625
      %v2627 = vrot.slane %v2350, 3
      %v2628 = vsel %vm2595, %v2625, %v2627
      %v2629 = vrot.slane %v2355, 3
      %v2630 = vsel %vm2595, %v2627, %v2629
      %2631 = vrot.lane.b32.xlu0 %v2598, 24
      %v2632 = vpop.permute.xlu0 %2631
      %2633 = vrot.lane.b32.xlu0 %v2600, 24
      %v2634 = vpop.permute.xlu0 %2633
      %2635 = vrot.lane.b32.xlu0 %v2602, 24
      %v2636 = vpop.permute.xlu0 %2635
      %2637 = vrot.lane.b32.xlu0 %v2604, 24
      %v2638 = vpop.permute.xlu0 %2637
      %2639 = vrot.lane.b32.xlu0 %v2606, 24
      %v2640 = vpop.permute.xlu0 %2639
      %2641 = vrot.lane.b32.xlu0 %v2608, 24
      %v2642 = vpop.permute.xlu0 %2641
      %2643 = vrot.lane.b32.xlu0 %v2610, 24
      %v2644 = vpop.permute.xlu0 %2643
      %2645 = vrot.lane.b32.xlu0 %v2612, 24
      %v2646 = vpop.permute.xlu0 %2645
      %2647 = vrot.lane.b32.xlu0 %v2614, 24
      %v2648 = vpop.permute.xlu0 %2647
      %2649 = vrot.lane.b32.xlu0 %v2616, 24
      %v2650 = vpop.permute.xlu0 %2649
      %2651 = vrot.lane.b32.xlu0 %v2618, 24
      %v2652 = vpop.permute.xlu0 %2651
      %2653 = vrot.lane.b32.xlu0 %v2620, 24
      %v2654 = vpop.permute.xlu0 %2653
      %2655 = vrot.lane.b32.xlu0 %v2622, 24
      %v2656 = vpop.permute.xlu0 %2655
      %2657 = vrot.lane.b32.xlu0 %v2624, 24
      %v2658 = vpop.permute.xlu0 %2657
      %2659 = vrot.lane.b32.xlu0 %v2626, 24
      %v2660 = vpop.permute.xlu0 %2659
      %2661 = vrot.lane.b32.xlu0 %v2628, 24
      %v2662 = vpop.permute.xlu0 %2661
      %2663 = vrot.lane.b32.xlu0 %v2630, 24
      %v2664 = vpop.permute.xlu0 %2663
      %2665 = vrot.lane.b32.xlu0 %v2629, 24
      %v2666 = vpop.permute.xlu0 %2665
      %vm2685 = vcmask 1043456
      %v2686 = vrot.slane %v2270, 4
      %v2687 = vrot.slane %v2275, 4
      %v2688 = vsel %vm2685, %v2686, %v2687
      %v2689 = vrot.slane %v2280, 4
      %v2690 = vsel %vm2685, %v2687, %v2689
      %v2691 = vrot.slane %v2285, 4
      %v2692 = vsel %vm2685, %v2689, %v2691
      %v2693 = vrot.slane %v2290, 4
      %v2694 = vsel %vm2685, %v2691, %v2693
      %v2695 = vrot.slane %v2295, 4
      %v2696 = vsel %vm2685, %v2693, %v2695
      %v2697 = vrot.slane %v2300, 4
      %v2698 = vsel %vm2685, %v2695, %v2697
      %v2699 = vrot.slane %v2305, 4
      %v2700 = vsel %vm2685, %v2697, %v2699
      %v2701 = vrot.slane %v2310, 4
      %v2702 = vsel %vm2685, %v2699, %v2701
      %v2703 = vrot.slane %v2315, 4
      %v2704 = vsel %vm2685, %v2701, %v2703
      %v2705 = vrot.slane %v2320, 4
      %v2706 = vsel %vm2685, %v2703, %v2705
      %v2707 = vrot.slane %v2325, 4
      %v2708 = vsel %vm2685, %v2705, %v2707
      %v2709 = vrot.slane %v2330, 4
      %v2710 = vsel %vm2685, %v2707, %v2709
      %v2711 = vrot.slane %v2335, 4
      %v2712 = vsel %vm2685, %v2709, %v2711
      %v2713 = vrot.slane %v2340, 4
      %v2714 = vsel %vm2685, %v2711, %v2713
      %v2715 = vrot.slane %v2345, 4
      %v2716 = vsel %vm2685, %v2713, %v2715
      %v2717 = vrot.slane %v2350, 4
      %v2718 = vsel %vm2685, %v2715, %v2717
      %v2719 = vrot.slane %v2355, 4
      %v2720 = vsel %vm2685, %v2717, %v2719
      %2721 = vrot.lane.b32.xlu0 %v2688, 32
      %v2722 = vpop.permute.xlu0 %2721
      %2723 = vrot.lane.b32.xlu0 %v2690, 32
      %v2724 = vpop.permute.xlu0 %2723
      %2725 = vrot.lane.b32.xlu0 %v2692, 32
      %v2726 = vpop.permute.xlu0 %2725
      %2727 = vrot.lane.b32.xlu0 %v2694, 32
      %v2728 = vpop.permute.xlu0 %2727
      %2729 = vrot.lane.b32.xlu0 %v2696, 32
      %v2730 = vpop.permute.xlu0 %2729
      %2731 = vrot.lane.b32.xlu0 %v2698, 32
      %v2732 = vpop.permute.xlu0 %2731
      %2733 = vrot.lane.b32.xlu0 %v2700, 32
      %v2734 = vpop.permute.xlu0 %2733
      %2735 = vrot.lane.b32.xlu0 %v2702, 32
      %v2736 = vpop.permute.xlu0 %2735
      %2737 = vrot.lane.b32.xlu0 %v2704, 32
      %v2738 = vpop.permute.xlu0 %2737
      %2739 = vrot.lane.b32.xlu0 %v2706, 32
      %v2740 = vpop.permute.xlu0 %2739
      %2741 = vrot.lane.b32.xlu0 %v2708, 32
      %v2742 = vpop.permute.xlu0 %2741
      %2743 = vrot.lane.b32.xlu0 %v2710, 32
      %v2744 = vpop.permute.xlu0 %2743
      %2745 = vrot.lane.b32.xlu0 %v2712, 32
      %v2746 = vpop.permute.xlu0 %2745
      %2747 = vrot.lane.b32.xlu0 %v2714, 32
      %v2748 = vpop.permute.xlu0 %2747
      %2749 = vrot.lane.b32.xlu0 %v2716, 32
      %v2750 = vpop.permute.xlu0 %2749
      %2751 = vrot.lane.b32.xlu0 %v2718, 32
      %v2752 = vpop.permute.xlu0 %2751
      %2753 = vrot.lane.b32.xlu0 %v2720, 32
      %v2754 = vpop.permute.xlu0 %2753
      %2755 = vrot.lane.b32.xlu0 %v2719, 32
      %v2756 = vpop.permute.xlu0 %2755
      %vm2777 = vcmask 1041408
      %v2778 = vrot.slane %v2275, 6
      %v2779 = vrot.slane %v2280, 6
      %v2780 = vsel %vm2777, %v2778, %v2779
      %v2781 = vrot.slane %v2285, 6
      %v2782 = vsel %vm2777, %v2779, %v2781
      %v2783 = vrot.slane %v2290, 6
      %v2784 = vsel %vm2777, %v2781, %v2783
      %v2785 = vrot.slane %v2295, 6
      %v2786 = vsel %vm2777, %v2783, %v2785
      %v2787 = vrot.slane %v2300, 6
      %v2788 = vsel %vm2777, %v2785, %v2787
      %v2789 = vrot.slane %v2305, 6
      %v2790 = vsel %vm2777, %v2787, %v2789
      %v2791 = vrot.slane %v2310, 6
      %v2792 = vsel %vm2777, %v2789, %v2791
      %v2793 = vrot.slane %v2315, 6
      %v2794 = vsel %vm2777, %v2791, %v2793
      %v2795 = vrot.slane %v2320, 6
      %v2796 = vsel %vm2777, %v2793, %v2795
      %v2797 = vrot.slane %v2325, 6
      %v2798 = vsel %vm2777, %v2795, %v2797
      %v2799 = vrot.slane %v2330, 6
      %v2800 = vsel %vm2777, %v2797, %v2799
      %v2801 = vrot.slane %v2335, 6
      %v2802 = vsel %vm2777, %v2799, %v2801
      %v2803 = vrot.slane %v2340, 6
      %v2804 = vsel %vm2777, %v2801, %v2803
      %v2805 = vrot.slane %v2345, 6
      %v2806 = vsel %vm2777, %v2803, %v2805
      %v2807 = vrot.slane %v2350, 6
      %v2808 = vsel %vm2777, %v2805, %v2807
      %v2809 = vrot.slane %v2355, 6
      %v2810 = vsel %vm2777, %v2807, %v2809
      %v2811 = vrot.slane %v2360, 6
      %v2812 = vsel %vm2777, %v2809, %v2811
      %v2813 = vrot.slane %v2365, 6
      %v2814 = vsel %vm2777, %v2811, %v2813
      %2815 = vrot.lane.b32.xlu0 %v2780, 40
      %v2816 = vpop.permute.xlu0 %2815
      %2817 = vrot.lane.b32.xlu0 %v2782, 40
      %v2818 = vpop.permute.xlu0 %2817
      %2819 = vrot.lane.b32.xlu0 %v2784, 40
      %v2820 = vpop.permute.xlu0 %2819
      %2821 = vrot.lane.b32.xlu0 %v2786, 40
      %v2822 = vpop.permute.xlu0 %2821
      %2823 = vrot.lane.b32.xlu0 %v2788, 40
      %v2824 = vpop.permute.xlu0 %2823
      %2825 = vrot.lane.b32.xlu0 %v2790, 40
      %v2826 = vpop.permute.xlu0 %2825
      %2827 = vrot.lane.b32.xlu0 %v2792, 40
      %v2828 = vpop.permute.xlu0 %2827
      %2829 = vrot.lane.b32.xlu0 %v2794, 40
      %v2830 = vpop.permute.xlu0 %2829
      %2831 = vrot.lane.b32.xlu0 %v2796, 40
      %v2832 = vpop.permute.xlu0 %2831
      %2833 = vrot.lane.b32.xlu0 %v2798, 40
      %v2834 = vpop.permute.xlu0 %2833
      %2835 = vrot.lane.b32.xlu0 %v2800, 40
      %v2836 = vpop.permute.xlu0 %2835
      %2837 = vrot.lane.b32.xlu0 %v2802, 40
      %v2838 = vpop.permute.xlu0 %2837
      %2839 = vrot.lane.b32.xlu0 %v2804, 40
      %v2840 = vpop.permute.xlu0 %2839
      %2841 = vrot.lane.b32.xlu0 %v2806, 40
      %v2842 = vpop.permute.xlu0 %2841
      %2843 = vrot.lane.b32.xlu0 %v2808, 40
      %v2844 = vpop.permute.xlu0 %2843
      %2845 = vrot.lane.b32.xlu0 %v2810, 40
      %v2846 = vpop.permute.xlu0 %2845
      %2847 = vrot.lane.b32.xlu0 %v2812, 40
      %v2848 = vpop.permute.xlu0 %2847
      %2849 = vrot.lane.b32.xlu0 %v2814, 40
      %v2850 = vpop.permute.xlu0 %2849
      %vm2869 = vcmask 1040384
      %v2870 = vrot.slane %v2275, 7
      %v2871 = vrot.slane %v2280, 7
      %v2872 = vsel %vm2869, %v2870, %v2871
      %v2873 = vrot.slane %v2285, 7
      %v2874 = vsel %vm2869, %v2871, %v2873
      %v2875 = vrot.slane %v2290, 7
      %v2876 = vsel %vm2869, %v2873, %v2875
      %v2877 = vrot.slane %v2295, 7
      %v2878 = vsel %vm2869, %v2875, %v2877
      %v2879 = vrot.slane %v2300, 7
      %v2880 = vsel %vm2869, %v2877, %v2879
      %v2881 = vrot.slane %v2305, 7
      %v2882 = vsel %vm2869, %v2879, %v2881
      %v2883 = vrot.slane %v2310, 7
      %v2884 = vsel %vm2869, %v2881, %v2883
      %v2885 = vrot.slane %v2315, 7
      %v2886 = vsel %vm2869, %v2883, %v2885
      %v2887 = vrot.slane %v2320, 7
      %v2888 = vsel %vm2869, %v2885, %v2887
      %v2889 = vrot.slane %v2325, 7
      %v2890 = vsel %vm2869, %v2887, %v2889
      %v2891 = vrot.slane %v2330, 7
      %v2892 = vsel %vm2869, %v2889, %v2891
      %v2893 = vrot.slane %v2335, 7
      %v2894 = vsel %vm2869, %v2891, %v2893
      %v2895 = vrot.slane %v2340, 7
      %v2896 = vsel %vm2869, %v2893, %v2895
      %v2897 = vrot.slane %v2345, 7
      %v2898 = vsel %vm2869, %v2895, %v2897
      %v2899 = vrot.slane %v2350, 7
      %v2900 = vsel %vm2869, %v2897, %v2899
      %v2901 = vrot.slane %v2355, 7
      %v2902 = vsel %vm2869, %v2899, %v2901
      %v2903 = vrot.slane %v2360, 7
      %v2904 = vsel %vm2869, %v2901, %v2903
      %v2905 = vrot.slane %v2365, 7
      %v2906 = vsel %vm2869, %v2903, %v2905
      %2907 = vrot.lane.b32.xlu0 %v2872, 48
      %v2908 = vpop.permute.xlu0 %2907
      %2909 = vrot.lane.b32.xlu0 %v2874, 48
      %v2910 = vpop.permute.xlu0 %2909
      %2911 = vrot.lane.b32.xlu0 %v2876, 48
      %v2912 = vpop.permute.xlu0 %2911
      %2913 = vrot.lane.b32.xlu0 %v2878, 48
      %v2914 = vpop.permute.xlu0 %2913
      %2915 = vrot.lane.b32.xlu0 %v2880, 48
      %v2916 = vpop.permute.xlu0 %2915
      %2917 = vrot.lane.b32.xlu0 %v2882, 48
      %v2918 = vpop.permute.xlu0 %2917
      %2919 = vrot.lane.b32.xlu0 %v2884, 48
      %v2920 = vpop.permute.xlu0 %2919
      %2921 = vrot.lane.b32.xlu0 %v2886, 48
      %v2922 = vpop.permute.xlu0 %2921
      %2923 = vrot.lane.b32.xlu0 %v2888, 48
      %v2924 = vpop.permute.xlu0 %2923
      %2925 = vrot.lane.b32.xlu0 %v2890, 48
      %v2926 = vpop.permute.xlu0 %2925
      %2927 = vrot.lane.b32.xlu0 %v2892, 48
      %v2928 = vpop.permute.xlu0 %2927
      %2929 = vrot.lane.b32.xlu0 %v2894, 48
      %v2930 = vpop.permute.xlu0 %2929
      %2931 = vrot.lane.b32.xlu0 %v2896, 48
      %v2932 = vpop.permute.xlu0 %2931
      %2933 = vrot.lane.b32.xlu0 %v2898, 48
      %v2934 = vpop.permute.xlu0 %2933
      %2935 = vrot.lane.b32.xlu0 %v2900, 48
      %v2936 = vpop.permute.xlu0 %2935
      %2937 = vrot.lane.b32.xlu0 %v2902, 48
      %v2938 = vpop.permute.xlu0 %2937
      %2939 = vrot.lane.b32.xlu0 %v2904, 48
      %v2940 = vpop.permute.xlu0 %2939
      %2941 = vrot.lane.b32.xlu0 %v2906, 48
      %v2942 = vpop.permute.xlu0 %2941
      %2961 = vrot.lane.b32.xlu0 %v2280, 56
      %v2962 = vpop.permute.xlu0 %2961
      %2963 = vrot.lane.b32.xlu0 %v2285, 56
      %v2964 = vpop.permute.xlu0 %2963
      %2965 = vrot.lane.b32.xlu0 %v2290, 56
      %v2966 = vpop.permute.xlu0 %2965
      %2967 = vrot.lane.b32.xlu0 %v2295, 56
      %v2968 = vpop.permute.xlu0 %2967
      %2969 = vrot.lane.b32.xlu0 %v2300, 56
      %v2970 = vpop.permute.xlu0 %2969
      %2971 = vrot.lane.b32.xlu0 %v2305, 56
      %v2972 = vpop.permute.xlu0 %2971
      %2973 = vrot.lane.b32.xlu0 %v2310, 56
      %v2974 = vpop.permute.xlu0 %2973
      %2975 = vrot.lane.b32.xlu0 %v2315, 56
      %v2976 = vpop.permute.xlu0 %2975
      %2977 = vrot.lane.b32.xlu0 %v2320, 56
      %v2978 = vpop.permute.xlu0 %2977
      %2979 = vrot.lane.b32.xlu0 %v2325, 56
      %v2980 = vpop.permute.xlu0 %2979
      %2981 = vrot.lane.b32.xlu0 %v2330, 56
      %v2982 = vpop.permute.xlu0 %2981
      %2983 = vrot.lane.b32.xlu0 %v2335, 56
      %v2984 = vpop.permute.xlu0 %2983
      %2985 = vrot.lane.b32.xlu0 %v2340, 56
      %v2986 = vpop.permute.xlu0 %2985
      %2987 = vrot.lane.b32.xlu0 %v2345, 56
      %v2988 = vpop.permute.xlu0 %2987
      %2989 = vrot.lane.b32.xlu0 %v2350, 56
      %v2990 = vpop.permute.xlu0 %2989
      %2991 = vrot.lane.b32.xlu0 %v2355, 56
      %v2992 = vpop.permute.xlu0 %2991
      %2993 = vrot.lane.b32.xlu0 %v2360, 56
      %v2994 = vpop.permute.xlu0 %2993
      %2995 = vrot.lane.b32.xlu0 %v2365, 56
      %v2996 = vpop.permute.xlu0 %2995
      %v3015 = vrot.slane %v2360, 1
      %v3016 = vsel %vm2415, %v2449, %v3015
      %v3017 = vrot.slane %v2365, 1
      %v3018 = vsel %vm2415, %v3015, %v3017
      %3019 = vrot.lane.b32.xlu0 %v2422, 64
      %v3020 = vpop.permute.xlu0 %3019
      %3021 = vrot.lane.b32.xlu0 %v2424, 64
      %v3022 = vpop.permute.xlu0 %3021
      %3023 = vrot.lane.b32.xlu0 %v2426, 64
      %v3024 = vpop.permute.xlu0 %3023
      %3025 = vrot.lane.b32.xlu0 %v2428, 64
      %v3026 = vpop.permute.xlu0 %3025
      %3027 = vrot.lane.b32.xlu0 %v2430, 64
      %v3028 = vpop.permute.xlu0 %3027
      %3029 = vrot.lane.b32.xlu0 %v2432, 64
      %v3030 = vpop.permute.xlu0 %3029
      %3031 = vrot.lane.b32.xlu0 %v2434, 64
      %v3032 = vpop.permute.xlu0 %3031
      %3033 = vrot.lane.b32.xlu0 %v2436, 64
      %v3034 = vpop.permute.xlu0 %3033
      %3035 = vrot.lane.b32.xlu0 %v2438, 64
      %v3036 = vpop.permute.xlu0 %3035
      %3037 = vrot.lane.b32.xlu0 %v2440, 64
      %v3038 = vpop.permute.xlu0 %3037
      %3039 = vrot.lane.b32.xlu0 %v2442, 64
      %v3040 = vpop.permute.xlu0 %3039
      %3041 = vrot.lane.b32.xlu0 %v2444, 64
      %v3042 = vpop.permute.xlu0 %3041
      %3043 = vrot.lane.b32.xlu0 %v2446, 64
      %v3044 = vpop.permute.xlu0 %3043
      %3045 = vrot.lane.b32.xlu0 %v2448, 64
      %v3046 = vpop.permute.xlu0 %3045
      %3047 = vrot.lane.b32.xlu0 %v2450, 64
      %v3048 = vpop.permute.xlu0 %3047
      %3049 = vrot.lane.b32.xlu0 %v3016, 64
      %v3050 = vpop.permute.xlu0 %3049
      %3051 = vrot.lane.b32.xlu0 %v3018, 64
      %v3052 = vpop.permute.xlu0 %3051
      %3053 = vrot.lane.b32.xlu0 %v3017, 64
      %v3054 = vpop.permute.xlu0 %3053
      %v3073 = vrot.slane %v2360, 2
      %v3074 = vsel %vm2505, %v2539, %v3073
      %v3075 = vrot.slane %v2365, 2
      %v3076 = vsel %vm2505, %v3073, %v3075
      %3077 = vrot.lane.b32.xlu0 %v2512, 72
      %v3078 = vpop.permute.xlu0 %3077
      %3079 = vrot.lane.b32.xlu0 %v2514, 72
      %v3080 = vpop.permute.xlu0 %3079
      %3081 = vrot.lane.b32.xlu0 %v2516, 72
      %v3082 = vpop.permute.xlu0 %3081
      %3083 = vrot.lane.b32.xlu0 %v2518, 72
      %v3084 = vpop.permute.xlu0 %3083
      %3085 = vrot.lane.b32.xlu0 %v2520, 72
      %v3086 = vpop.permute.xlu0 %3085
      %3087 = vrot.lane.b32.xlu0 %v2522, 72
      %v3088 = vpop.permute.xlu0 %3087
      %3089 = vrot.lane.b32.xlu0 %v2524, 72
      %v3090 = vpop.permute.xlu0 %3089
      %3091 = vrot.lane.b32.xlu0 %v2526, 72
      %v3092 = vpop.permute.xlu0 %3091
      %3093 = vrot.lane.b32.xlu0 %v2528, 72
      %v3094 = vpop.permute.xlu0 %3093
      %3095 = vrot.lane.b32.xlu0 %v2530, 72
      %v3096 = vpop.permute.xlu0 %3095
      %3097 = vrot.lane.b32.xlu0 %v2532, 72
      %v3098 = vpop.permute.xlu0 %3097
      %3099 = vrot.lane.b32.xlu0 %v2534, 72
      %v3100 = vpop.permute.xlu0 %3099
      %3101 = vrot.lane.b32.xlu0 %v2536, 72
      %v3102 = vpop.permute.xlu0 %3101
      %3103 = vrot.lane.b32.xlu0 %v2538, 72
      %v3104 = vpop.permute.xlu0 %3103
      %3105 = vrot.lane.b32.xlu0 %v2540, 72
      %v3106 = vpop.permute.xlu0 %3105
      %3107 = vrot.lane.b32.xlu0 %v3074, 72
      %v3108 = vpop.permute.xlu0 %3107
      %3109 = vrot.lane.b32.xlu0 %v3076, 72
      %v3110 = vpop.permute.xlu0 %3109
      %3111 = vrot.lane.b32.xlu0 %v3075, 72
      %v3112 = vpop.permute.xlu0 %3111
      %v3132 = vrot.slane %v2360, 4
      %v3133 = vsel %vm2685, %v2719, %v3132
      %v3134 = vrot.slane %v2365, 4
      %v3135 = vsel %vm2685, %v3132, %v3134
      %v3136 = vrot.slane %v2370, 4
      %v3137 = vsel %vm2685, %v3134, %v3136
      %3138 = vrot.lane.b32.xlu0 %v2694, 80
      %v3139 = vpop.permute.xlu0 %3138
      %3140 = vrot.lane.b32.xlu0 %v2696, 80
      %v3141 = vpop.permute.xlu0 %3140
      %3142 = vrot.lane.b32.xlu0 %v2698, 80
      %v3143 = vpop.permute.xlu0 %3142
      %3144 = vrot.lane.b32.xlu0 %v2700, 80
      %v3145 = vpop.permute.xlu0 %3144
      %3146 = vrot.lane.b32.xlu0 %v2702, 80
      %v3147 = vpop.permute.xlu0 %3146
      %3148 = vrot.lane.b32.xlu0 %v2704, 80
      %v3149 = vpop.permute.xlu0 %3148
      %3150 = vrot.lane.b32.xlu0 %v2706, 80
      %v3151 = vpop.permute.xlu0 %3150
      %3152 = vrot.lane.b32.xlu0 %v2708, 80
      %v3153 = vpop.permute.xlu0 %3152
      %3154 = vrot.lane.b32.xlu0 %v2710, 80
      %v3155 = vpop.permute.xlu0 %3154
      %3156 = vrot.lane.b32.xlu0 %v2712, 80
      %v3157 = vpop.permute.xlu0 %3156
      %3158 = vrot.lane.b32.xlu0 %v2714, 80
      %v3159 = vpop.permute.xlu0 %3158
      %3160 = vrot.lane.b32.xlu0 %v2716, 80
      %v3161 = vpop.permute.xlu0 %3160
      %3162 = vrot.lane.b32.xlu0 %v2718, 80
      %v3163 = vpop.permute.xlu0 %3162
      %3164 = vrot.lane.b32.xlu0 %v2720, 80
      %v3165 = vpop.permute.xlu0 %3164
      %3166 = vrot.lane.b32.xlu0 %v3133, 80
      %v3167 = vpop.permute.xlu0 %3166
      %3168 = vrot.lane.b32.xlu0 %v3135, 80
      %v3169 = vpop.permute.xlu0 %3168
      %3170 = vrot.lane.b32.xlu0 %v3137, 80
      %v3171 = vpop.permute.xlu0 %3170
      %3172 = vrot.lane.b32.xlu0 %v3136, 80
      %v3173 = vpop.permute.xlu0 %3172
      %vm3193 = vcmask 1042432
      %v3194 = vrot.slane %v2285, 5
      %v3195 = vrot.slane %v2290, 5
      %v3196 = vsel %vm3193, %v3194, %v3195
      %v3197 = vrot.slane %v2295, 5
      %v3198 = vsel %vm3193, %v3195, %v3197
      %v3199 = vrot.slane %v2300, 5
      %v3200 = vsel %vm3193, %v3197, %v3199
      %v3201 = vrot.slane %v2305, 5
      %v3202 = vsel %vm3193, %v3199, %v3201
      %v3203 = vrot.slane %v2310, 5
      %v3204 = vsel %vm3193, %v3201, %v3203
      %v3205 = vrot.slane %v2315, 5
      %v3206 = vsel %vm3193, %v3203, %v3205
      %v3207 = vrot.slane %v2320, 5
      %v3208 = vsel %vm3193, %v3205, %v3207
      %v3209 = vrot.slane %v2325, 5
      %v3210 = vsel %vm3193, %v3207, %v3209
      %v3211 = vrot.slane %v2330, 5
      %v3212 = vsel %vm3193, %v3209, %v3211
      %v3213 = vrot.slane %v2335, 5
      %v3214 = vsel %vm3193, %v3211, %v3213
      %v3215 = vrot.slane %v2340, 5
      %v3216 = vsel %vm3193, %v3213, %v3215
      %v3217 = vrot.slane %v2345, 5
      %v3218 = vsel %vm3193, %v3215, %v3217
      %v3219 = vrot.slane %v2350, 5
      %v3220 = vsel %vm3193, %v3217, %v3219
      %v3221 = vrot.slane %v2355, 5
      %v3222 = vsel %vm3193, %v3219, %v3221
      %v3223 = vrot.slane %v2360, 5
      %v3224 = vsel %vm3193, %v3221, %v3223
      %v3225 = vrot.slane %v2365, 5
      %v3226 = vsel %vm3193, %v3223, %v3225
      %v3227 = vrot.slane %v2370, 5
      %v3228 = vsel %vm3193, %v3225, %v3227
      %v3229 = vrot.slane %v2375, 5
      %v3230 = vsel %vm3193, %v3227, %v3229
      %3231 = vrot.lane.b32.xlu0 %v3196, 88
      %v3232 = vpop.permute.xlu0 %3231
      %3233 = vrot.lane.b32.xlu0 %v3198, 88
      %v3234 = vpop.permute.xlu0 %3233
      %3235 = vrot.lane.b32.xlu0 %v3200, 88
      %v3236 = vpop.permute.xlu0 %3235
      %3237 = vrot.lane.b32.xlu0 %v3202, 88
      %v3238 = vpop.permute.xlu0 %3237
      %3239 = vrot.lane.b32.xlu0 %v3204, 88
      %v3240 = vpop.permute.xlu0 %3239
      %3241 = vrot.lane.b32.xlu0 %v3206, 88
      %v3242 = vpop.permute.xlu0 %3241
      %3243 = vrot.lane.b32.xlu0 %v3208, 88
      %v3244 = vpop.permute.xlu0 %3243
      %3245 = vrot.lane.b32.xlu0 %v3210, 88
      %v3246 = vpop.permute.xlu0 %3245
      %3247 = vrot.lane.b32.xlu0 %v3212, 88
      %v3248 = vpop.permute.xlu0 %3247
      %3249 = vrot.lane.b32.xlu0 %v3214, 88
      %v3250 = vpop.permute.xlu0 %3249
      %3251 = vrot.lane.b32.xlu0 %v3216, 88
      %v3252 = vpop.permute.xlu0 %3251
      %3253 = vrot.lane.b32.xlu0 %v3218, 88
      %v3254 = vpop.permute.xlu0 %3253
      %3255 = vrot.lane.b32.xlu0 %v3220, 88
      %v3256 = vpop.permute.xlu0 %3255
      %3257 = vrot.lane.b32.xlu0 %v3222, 88
      %v3258 = vpop.permute.xlu0 %3257
      %3259 = vrot.lane.b32.xlu0 %v3224, 88
      %v3260 = vpop.permute.xlu0 %3259
      %3261 = vrot.lane.b32.xlu0 %v3226, 88
      %v3262 = vpop.permute.xlu0 %3261
      %3263 = vrot.lane.b32.xlu0 %v3228, 88
      %v3264 = vpop.permute.xlu0 %3263
      %3265 = vrot.lane.b32.xlu0 %v3230, 88
      %v3266 = vpop.permute.xlu0 %3265
      %v3285 = vrot.slane %v2370, 6
      %v3286 = vsel %vm2777, %v2813, %v3285
      %v3287 = vrot.slane %v2375, 6
      %v3288 = vsel %vm2777, %v3285, %v3287
      %3289 = vrot.lane.b32.xlu0 %v2784, 96
      %v3290 = vpop.permute.xlu0 %3289
      %3291 = vrot.lane.b32.xlu0 %v2786, 96
      %v3292 = vpop.permute.xlu0 %3291
      %3293 = vrot.lane.b32.xlu0 %v2788, 96
      %v3294 = vpop.permute.xlu0 %3293
      %3295 = vrot.lane.b32.xlu0 %v2790, 96
      %v3296 = vpop.permute.xlu0 %3295
      %3297 = vrot.lane.b32.xlu0 %v2792, 96
      %v3298 = vpop.permute.xlu0 %3297
      %3299 = vrot.lane.b32.xlu0 %v2794, 96
      %v3300 = vpop.permute.xlu0 %3299
      %3301 = vrot.lane.b32.xlu0 %v2796, 96
      %v3302 = vpop.permute.xlu0 %3301
      %3303 = vrot.lane.b32.xlu0 %v2798, 96
      %v3304 = vpop.permute.xlu0 %3303
      %3305 = vrot.lane.b32.xlu0 %v2800, 96
      %v3306 = vpop.permute.xlu0 %3305
      %3307 = vrot.lane.b32.xlu0 %v2802, 96
      %v3308 = vpop.permute.xlu0 %3307
      %3309 = vrot.lane.b32.xlu0 %v2804, 96
      %v3310 = vpop.permute.xlu0 %3309
      %3311 = vrot.lane.b32.xlu0 %v2806, 96
      %v3312 = vpop.permute.xlu0 %3311
      %3313 = vrot.lane.b32.xlu0 %v2808, 96
      %v3314 = vpop.permute.xlu0 %3313
      %3315 = vrot.lane.b32.xlu0 %v2810, 96
      %v3316 = vpop.permute.xlu0 %3315
      %3317 = vrot.lane.b32.xlu0 %v2812, 96
      %v3318 = vpop.permute.xlu0 %3317
      %3319 = vrot.lane.b32.xlu0 %v2814, 96
      %v3320 = vpop.permute.xlu0 %3319
      %3321 = vrot.lane.b32.xlu0 %v3286, 96
      %v3322 = vpop.permute.xlu0 %3321
      %3323 = vrot.lane.b32.xlu0 %v3288, 96
      %v3324 = vpop.permute.xlu0 %3323
      %v3343 = vrot.slane %v2370, 7
      %v3344 = vsel %vm2869, %v2905, %v3343
      %v3345 = vrot.slane %v2375, 7
      %v3346 = vsel %vm2869, %v3343, %v3345
      %3347 = vrot.lane.b32.xlu0 %v2876, 104
      %v3348 = vpop.permute.xlu0 %3347
      %3349 = vrot.lane.b32.xlu0 %v2878, 104
      %v3350 = vpop.permute.xlu0 %3349
      %3351 = vrot.lane.b32.xlu0 %v2880, 104
      %v3352 = vpop.permute.xlu0 %3351
      %3353 = vrot.lane.b32.xlu0 %v2882, 104
      %v3354 = vpop.permute.xlu0 %3353
      %3355 = vrot.lane.b32.xlu0 %v2884, 104
      %v3356 = vpop.permute.xlu0 %3355
      %3357 = vrot.lane.b32.xlu0 %v2886, 104
      %v3358 = vpop.permute.xlu0 %3357
      %3359 = vrot.lane.b32.xlu0 %v2888, 104
      %v3360 = vpop.permute.xlu0 %3359
      %3361 = vrot.lane.b32.xlu0 %v2890, 104
      %v3362 = vpop.permute.xlu0 %3361
      %3363 = vrot.lane.b32.xlu0 %v2892, 104
      %v3364 = vpop.permute.xlu0 %3363
      %3365 = vrot.lane.b32.xlu0 %v2894, 104
      %v3366 = vpop.permute.xlu0 %3365
      %3367 = vrot.lane.b32.xlu0 %v2896, 104
      %v3368 = vpop.permute.xlu0 %3367
      %3369 = vrot.lane.b32.xlu0 %v2898, 104
      %v3370 = vpop.permute.xlu0 %3369
      %3371 = vrot.lane.b32.xlu0 %v2900, 104
      %v3372 = vpop.permute.xlu0 %3371
      %3373 = vrot.lane.b32.xlu0 %v2902, 104
      %v3374 = vpop.permute.xlu0 %3373
      %3375 = vrot.lane.b32.xlu0 %v2904, 104
      %v3376 = vpop.permute.xlu0 %3375
      %3377 = vrot.lane.b32.xlu0 %v2906, 104
      %v3378 = vpop.permute.xlu0 %3377
      %3379 = vrot.lane.b32.xlu0 %v3344, 104
      %v3380 = vpop.permute.xlu0 %3379
      %3381 = vrot.lane.b32.xlu0 %v3346, 104
      %v3382 = vpop.permute.xlu0 %3381
      %3401 = vrot.lane.b32.xlu0 %v2290, 112
      %v3402 = vpop.permute.xlu0 %3401
      %3403 = vrot.lane.b32.xlu0 %v2295, 112
      %v3404 = vpop.permute.xlu0 %3403
      %3405 = vrot.lane.b32.xlu0 %v2300, 112
      %v3406 = vpop.permute.xlu0 %3405
      %3407 = vrot.lane.b32.xlu0 %v2305, 112
      %v3408 = vpop.permute.xlu0 %3407
      %3409 = vrot.lane.b32.xlu0 %v2310, 112
      %v3410 = vpop.permute.xlu0 %3409
      %3411 = vrot.lane.b32.xlu0 %v2315, 112
      %v3412 = vpop.permute.xlu0 %3411
      %3413 = vrot.lane.b32.xlu0 %v2320, 112
      %v3414 = vpop.permute.xlu0 %3413
      %3415 = vrot.lane.b32.xlu0 %v2325, 112
      %v3416 = vpop.permute.xlu0 %3415
      %3417 = vrot.lane.b32.xlu0 %v2330, 112
      %v3418 = vpop.permute.xlu0 %3417
      %3419 = vrot.lane.b32.xlu0 %v2335, 112
      %v3420 = vpop.permute.xlu0 %3419
      %3421 = vrot.lane.b32.xlu0 %v2340, 112
      %v3422 = vpop.permute.xlu0 %3421
      %3423 = vrot.lane.b32.xlu0 %v2345, 112
      %v3424 = vpop.permute.xlu0 %3423
      %3425 = vrot.lane.b32.xlu0 %v2350, 112
      %v3426 = vpop.permute.xlu0 %3425
      %3427 = vrot.lane.b32.xlu0 %v2355, 112
      %v3428 = vpop.permute.xlu0 %3427
      %3429 = vrot.lane.b32.xlu0 %v2360, 112
      %v3430 = vpop.permute.xlu0 %3429
      %3431 = vrot.lane.b32.xlu0 %v2365, 112
      %v3432 = vpop.permute.xlu0 %3431
      %3433 = vrot.lane.b32.xlu0 %v2370, 112
      %v3434 = vpop.permute.xlu0 %3433
      %3435 = vrot.lane.b32.xlu0 %v2375, 112
      %v3436 = vpop.permute.xlu0 %3435
      %v3456 = vrot.slane %v2370, 2
      %v3457 = vsel %vm2505, %v3075, %v3456
      %v3458 = vrot.slane %v2375, 2
      %v3459 = vsel %vm2505, %v3456, %v3458
      %v3460 = vrot.slane %v2380, 2
      %v3461 = vsel %vm2505, %v3458, %v3460
      %3462 = vrot.lane.b32.xlu0 %v2518, 120
      %v3463 = vpop.permute.xlu0 %3462
      %3464 = vrot.lane.b32.xlu0 %v2520, 120
      %v3465 = vpop.permute.xlu0 %3464
      %3466 = vrot.lane.b32.xlu0 %v2522, 120
      %v3467 = vpop.permute.xlu0 %3466
      %3468 = vrot.lane.b32.xlu0 %v2524, 120
      %v3469 = vpop.permute.xlu0 %3468
      %3470 = vrot.lane.b32.xlu0 %v2526, 120
      %v3471 = vpop.permute.xlu0 %3470
      %3472 = vrot.lane.b32.xlu0 %v2528, 120
      %v3473 = vpop.permute.xlu0 %3472
      %3474 = vrot.lane.b32.xlu0 %v2530, 120
      %v3475 = vpop.permute.xlu0 %3474
      %3476 = vrot.lane.b32.xlu0 %v2532, 120
      %v3477 = vpop.permute.xlu0 %3476
      %3478 = vrot.lane.b32.xlu0 %v2534, 120
      %v3479 = vpop.permute.xlu0 %3478
      %3480 = vrot.lane.b32.xlu0 %v2536, 120
      %v3481 = vpop.permute.xlu0 %3480
      %3482 = vrot.lane.b32.xlu0 %v2538, 120
      %v3483 = vpop.permute.xlu0 %3482
      %3484 = vrot.lane.b32.xlu0 %v2540, 120
      %v3485 = vpop.permute.xlu0 %3484
      %3486 = vrot.lane.b32.xlu0 %v3074, 120
      %v3487 = vpop.permute.xlu0 %3486
      %3488 = vrot.lane.b32.xlu0 %v3076, 120
      %v3489 = vpop.permute.xlu0 %3488
      %3490 = vrot.lane.b32.xlu0 %v3457, 120
      %v3491 = vpop.permute.xlu0 %3490
      %3492 = vrot.lane.b32.xlu0 %v3459, 120
      %v3493 = vpop.permute.xlu0 %3492
      %3494 = vrot.lane.b32.xlu0 %v3461, 120
      %v3495 = vpop.permute.xlu0 %3494
      %3496 = vrot.lane.b32.xlu0 %v3460, 120
      %v3497 = vpop.permute.xlu0 %3496
      %vm3516 = vcmask 64512
      %v3517 = vsel %vm3516, %v2270, %v2452
      %v3518 = vsel %vm3516, %v2275, %v2454
      %v3519 = vsel %vm3516, %v2280, %v2456
      %v3520 = vsel %vm3516, %v2285, %v2458
      %v3521 = vsel %vm3516, %v2290, %v2460
      %v3522 = vsel %vm3516, %v2295, %v2462
      %v3523 = vsel %vm3516, %v2300, %v2464
      %v3524 = vsel %vm3516, %v2305, %v2466
      %v3525 = vsel %vm3516, %v2310, %v2468
      %v3526 = vsel %vm3516, %v2315, %v2470
      %v3527 = vsel %vm3516, %v2320, %v2472
      %v3528 = vsel %vm3516, %v2325, %v2474
      %v3529 = vsel %vm3516, %v2330, %v2476
      %v3530 = vsel %vm3516, %v2335, %v2478
      %v3531 = vsel %vm3516, %v2340, %v2480
      %v3532 = vsel %vm3516, %v2345, %v2482
      %v3533 = vsel %vm3516, %v2350, %v2484
      %v3534 = vsel %vm3516, %v2355, %v2486
      %v3535 = vsel %vm1542, %v3517, %v2542
      %v3536 = vsel %vm1542, %v3518, %v2544
      %v3537 = vsel %vm1542, %v3519, %v2546
      %v3538 = vsel %vm1542, %v3520, %v2548
      %v3539 = vsel %vm1542, %v3521, %v2550
      %v3540 = vsel %vm1542, %v3522, %v2552
      %v3541 = vsel %vm1542, %v3523, %v2554
      %v3542 = vsel %vm1542, %v3524, %v2556
      %v3543 = vsel %vm1542, %v3525, %v2558
      %v3544 = vsel %vm1542, %v3526, %v2560
      %v3545 = vsel %vm1542, %v3527, %v2562
      %v3546 = vsel %vm1542, %v3528, %v2564
      %v3547 = vsel %vm1542, %v3529, %v2566
      %v3548 = vsel %vm1542, %v3530, %v2568
      %v3549 = vsel %vm1542, %v3531, %v2570
      %v3550 = vsel %vm1542, %v3532, %v2572
      %v3551 = vsel %vm1542, %v3533, %v2574
      %v3552 = vsel %vm1542, %v3534, %v2576
      %vm3553 = vcmask 195584
      %v3554 = vsel %vm3553, %v3535, %v2632
      %v3555 = vsel %vm3553, %v3536, %v2634
      %v3556 = vsel %vm3553, %v3537, %v2636
      %v3557 = vsel %vm3553, %v3538, %v2638
      %v3558 = vsel %vm3553, %v3539, %v2640
      %v3559 = vsel %vm3553, %v3540, %v2642
      %v3560 = vsel %vm3553, %v3541, %v2644
      %v3561 = vsel %vm3553, %v3542, %v2646
      %v3562 = vsel %vm3553, %v3543, %v2648
      %v3563 = vsel %vm3553, %v3544, %v2650
      %v3564 = vsel %vm3553, %v3545, %v2652
      %v3565 = vsel %vm3553, %v3546, %v2654
      %v3566 = vsel %vm3553, %v3547, %v2656
      %v3567 = vsel %vm3553, %v3548, %v2658
      %v3568 = vsel %vm3553, %v3549, %v2660
      %v3569 = vsel %vm3553, %v3550, %v2662
      %v3570 = vsel %vm3553, %v3551, %v2664
      %v3571 = vsel %vm3553, %v3552, %v2666
      %vm3572 = vcmask 261120
      %v3573 = vsel %vm3572, %v3554, %v2722
      %v3574 = vsel %vm3572, %v3555, %v2724
      %v3575 = vsel %vm3572, %v3556, %v2726
      %v3576 = vsel %vm3572, %v3557, %v2728
      %v3577 = vsel %vm3572, %v3558, %v2730
      %v3578 = vsel %vm3572, %v3559, %v2732
      %v3579 = vsel %vm3572, %v3560, %v2734
      %v3580 = vsel %vm3572, %v3561, %v2736
      %v3581 = vsel %vm3572, %v3562, %v2738
      %v3582 = vsel %vm3572, %v3563, %v2740
      %v3583 = vsel %vm3572, %v3564, %v2742
      %v3584 = vsel %vm3572, %v3565, %v2744
      %v3585 = vsel %vm3572, %v3566, %v2746
      %v3586 = vsel %vm3572, %v3567, %v2748
      %v3587 = vsel %vm3572, %v3568, %v2750
      %v3588 = vsel %vm3572, %v3569, %v2752
      %v3589 = vsel %vm3572, %v3570, %v2754
      %v3590 = vsel %vm3572, %v3571, %v2756
      %vm3591 = vcmask 326656
      %v3592 = vsel %vm3591, %v3573, %v2816
      %v3593 = vsel %vm3591, %v3574, %v2818
      %v3594 = vsel %vm3591, %v3575, %v2820
      %v3595 = vsel %vm3591, %v3576, %v2822
      %v3596 = vsel %vm3591, %v3577, %v2824
      %v3597 = vsel %vm3591, %v3578, %v2826
      %v3598 = vsel %vm3591, %v3579, %v2828
      %v3599 = vsel %vm3591, %v3580, %v2830
      %v3600 = vsel %vm3591, %v3581, %v2832
      %v3601 = vsel %vm3591, %v3582, %v2834
      %v3602 = vsel %vm3591, %v3583, %v2836
      %v3603 = vsel %vm3591, %v3584, %v2838
      %v3604 = vsel %vm3591, %v3585, %v2840
      %v3605 = vsel %vm3591, %v3586, %v2842
      %v3606 = vsel %vm3591, %v3587, %v2844
      %v3607 = vsel %vm3591, %v3588, %v2846
      %v3608 = vsel %vm3591, %v3589, %v2848
      %v3609 = vsel %vm3591, %v3590, %v2850
      %vm3610 = vcmask 392192
      %v3611 = vsel %vm3610, %v3592, %v2908
      %v3612 = vsel %vm3610, %v3593, %v2910
      %v3613 = vsel %vm3610, %v3594, %v2912
      %v3614 = vsel %vm3610, %v3595, %v2914
      %v3615 = vsel %vm3610, %v3596, %v2916
      %v3616 = vsel %vm3610, %v3597, %v2918
      %v3617 = vsel %vm3610, %v3598, %v2920
      %v3618 = vsel %vm3610, %v3599, %v2922
      %v3619 = vsel %vm3610, %v3600, %v2924
      %v3620 = vsel %vm3610, %v3601, %v2926
      %v3621 = vsel %vm3610, %v3602, %v2928
      %v3622 = vsel %vm3610, %v3603, %v2930
      %v3623 = vsel %vm3610, %v3604, %v2932
      %v3624 = vsel %vm3610, %v3605, %v2934
      %v3625 = vsel %vm3610, %v3606, %v2936
      %v3626 = vsel %vm3610, %v3607, %v2938
      %v3627 = vsel %vm3610, %v3608, %v2940
      %v3628 = vsel %vm3610, %v3609, %v2942
      %vm3629 = vcmask 457728
      %v3630 = vsel %vm3629, %v3611, %v2962
      %v3631 = vsel %vm3629, %v3612, %v2964
      %v3632 = vsel %vm3629, %v3613, %v2966
      %v3633 = vsel %vm3629, %v3614, %v2968
      %v3634 = vsel %vm3629, %v3615, %v2970
      %v3635 = vsel %vm3629, %v3616, %v2972
      %v3636 = vsel %vm3629, %v3617, %v2974
      %v3637 = vsel %vm3629, %v3618, %v2976
      %v3638 = vsel %vm3629, %v3619, %v2978
      %v3639 = vsel %vm3629, %v3620, %v2980
      %v3640 = vsel %vm3629, %v3621, %v2982
      %v3641 = vsel %vm3629, %v3622, %v2984
      %v3642 = vsel %vm3629, %v3623, %v2986
      %v3643 = vsel %vm3629, %v3624, %v2988
      %v3644 = vsel %vm3629, %v3625, %v2990
      %v3645 = vsel %vm3629, %v3626, %v2992
      %v3646 = vsel %vm3629, %v3627, %v2994
      %v3647 = vsel %vm3629, %v3628, %v2996
      %v3648 = vsel %vm412, %v3630, %v3020
      %v3649 = vsel %vm412, %v3631, %v3022
      %v3650 = vsel %vm412, %v3632, %v3024
      %v3651 = vsel %vm412, %v3633, %v3026
      %v3652 = vsel %vm412, %v3634, %v3028
      %v3653 = vsel %vm412, %v3635, %v3030
      %v3654 = vsel %vm412, %v3636, %v3032
      %v3655 = vsel %vm412, %v3637, %v3034
      %v3656 = vsel %vm412, %v3638, %v3036
      %v3657 = vsel %vm412, %v3639, %v3038
      %v3658 = vsel %vm412, %v3640, %v3040
      %v3659 = vsel %vm412, %v3641, %v3042
      %v3660 = vsel %vm412, %v3642, %v3044
      %v3661 = vsel %vm412, %v3643, %v3046
      %v3662 = vsel %vm412, %v3644, %v3048
      %v3663 = vsel %vm412, %v3645, %v3050
      %v3664 = vsel %vm412, %v3646, %v3052
      %v3665 = vsel %vm412, %v3647, %v3054
      %vm3666 = vcmask 588800
      %v3667 = vsel %vm3666, %v3648, %v3078
      %v3668 = vsel %vm3666, %v3649, %v3080
      %v3669 = vsel %vm3666, %v3650, %v3082
      %v3670 = vsel %vm3666, %v3651, %v3084
      %v3671 = vsel %vm3666, %v3652, %v3086
      %v3672 = vsel %vm3666, %v3653, %v3088
      %v3673 = vsel %vm3666, %v3654, %v3090
      %v3674 = vsel %vm3666, %v3655, %v3092
      %v3675 = vsel %vm3666, %v3656, %v3094
      %v3676 = vsel %vm3666, %v3657, %v3096
      %v3677 = vsel %vm3666, %v3658, %v3098
      %v3678 = vsel %vm3666, %v3659, %v3100
      %v3679 = vsel %vm3666, %v3660, %v3102
      %v3680 = vsel %vm3666, %v3661, %v3104
      %v3681 = vsel %vm3666, %v3662, %v3106
      %v3682 = vsel %vm3666, %v3663, %v3108
      %v3683 = vsel %vm3666, %v3664, %v3110
      %v3684 = vsel %vm3666, %v3665, %v3112
      %vm3685 = vcmask 654336
      %v3686 = vsel %vm3685, %v3667, %v3139
      %v3687 = vsel %vm3685, %v3668, %v3141
      %v3688 = vsel %vm3685, %v3669, %v3143
      %v3689 = vsel %vm3685, %v3670, %v3145
      %v3690 = vsel %vm3685, %v3671, %v3147
      %v3691 = vsel %vm3685, %v3672, %v3149
      %v3692 = vsel %vm3685, %v3673, %v3151
      %v3693 = vsel %vm3685, %v3674, %v3153
      %v3694 = vsel %vm3685, %v3675, %v3155
      %v3695 = vsel %vm3685, %v3676, %v3157
      %v3696 = vsel %vm3685, %v3677, %v3159
      %v3697 = vsel %vm3685, %v3678, %v3161
      %v3698 = vsel %vm3685, %v3679, %v3163
      %v3699 = vsel %vm3685, %v3680, %v3165
      %v3700 = vsel %vm3685, %v3681, %v3167
      %v3701 = vsel %vm3685, %v3682, %v3169
      %v3702 = vsel %vm3685, %v3683, %v3171
      %v3703 = vsel %vm3685, %v3684, %v3173
      %vm3704 = vcmask 719872
      %v3705 = vsel %vm3704, %v3686, %v3232
      %v3706 = vsel %vm3704, %v3687, %v3234
      %v3707 = vsel %vm3704, %v3688, %v3236
      %v3708 = vsel %vm3704, %v3689, %v3238
      %v3709 = vsel %vm3704, %v3690, %v3240
      %v3710 = vsel %vm3704, %v3691, %v3242
      %v3711 = vsel %vm3704, %v3692, %v3244
      %v3712 = vsel %vm3704, %v3693, %v3246
      %v3713 = vsel %vm3704, %v3694, %v3248
      %v3714 = vsel %vm3704, %v3695, %v3250
      %v3715 = vsel %vm3704, %v3696, %v3252
      %v3716 = vsel %vm3704, %v3697, %v3254
      %v3717 = vsel %vm3704, %v3698, %v3256
      %v3718 = vsel %vm3704, %v3699, %v3258
      %v3719 = vsel %vm3704, %v3700, %v3260
      %v3720 = vsel %vm3704, %v3701, %v3262
      %v3721 = vsel %vm3704, %v3702, %v3264
      %v3722 = vsel %vm3704, %v3703, %v3266
      %vm3723 = vcmask 785408
      %v3724 = vsel %vm3723, %v3705, %v3290
      %v3725 = vsel %vm3723, %v3706, %v3292
      %v3726 = vsel %vm3723, %v3707, %v3294
      %v3727 = vsel %vm3723, %v3708, %v3296
      %v3728 = vsel %vm3723, %v3709, %v3298
      %v3729 = vsel %vm3723, %v3710, %v3300
      %v3730 = vsel %vm3723, %v3711, %v3302
      %v3731 = vsel %vm3723, %v3712, %v3304
      %v3732 = vsel %vm3723, %v3713, %v3306
      %v3733 = vsel %vm3723, %v3714, %v3308
      %v3734 = vsel %vm3723, %v3715, %v3310
      %v3735 = vsel %vm3723, %v3716, %v3312
      %v3736 = vsel %vm3723, %v3717, %v3314
      %v3737 = vsel %vm3723, %v3718, %v3316
      %v3738 = vsel %vm3723, %v3719, %v3318
      %v3739 = vsel %vm3723, %v3720, %v3320
      %v3740 = vsel %vm3723, %v3721, %v3322
      %v3741 = vsel %vm3723, %v3722, %v3324
      %vm3742 = vcmask 850944
      %v3743 = vsel %vm3742, %v3724, %v3348
      %v3744 = vsel %vm3742, %v3725, %v3350
      %v3745 = vsel %vm3742, %v3726, %v3352
      %v3746 = vsel %vm3742, %v3727, %v3354
      %v3747 = vsel %vm3742, %v3728, %v3356
      %v3748 = vsel %vm3742, %v3729, %v3358
      %v3749 = vsel %vm3742, %v3730, %v3360
      %v3750 = vsel %vm3742, %v3731, %v3362
      %v3751 = vsel %vm3742, %v3732, %v3364
      %v3752 = vsel %vm3742, %v3733, %v3366
      %v3753 = vsel %vm3742, %v3734, %v3368
      %v3754 = vsel %vm3742, %v3735, %v3370
      %v3755 = vsel %vm3742, %v3736, %v3372
      %v3756 = vsel %vm3742, %v3737, %v3374
      %v3757 = vsel %vm3742, %v3738, %v3376
      %v3758 = vsel %vm3742, %v3739, %v3378
      %v3759 = vsel %vm3742, %v3740, %v3380
      %v3760 = vsel %vm3742, %v3741, %v3382
      %vm3761 = vcmask 916480
      %v3762 = vsel %vm3761, %v3743, %v3402
      %v3763 = vsel %vm3761, %v3744, %v3404
      %v3764 = vsel %vm3761, %v3745, %v3406
      %v3765 = vsel %vm3761, %v3746, %v3408
      %v3766 = vsel %vm3761, %v3747, %v3410
      %v3767 = vsel %vm3761, %v3748, %v3412
      %v3768 = vsel %vm3761, %v3749, %v3414
      %v3769 = vsel %vm3761, %v3750, %v3416
      %v3770 = vsel %vm3761, %v3751, %v3418
      %v3771 = vsel %vm3761, %v3752, %v3420
      %v3772 = vsel %vm3761, %v3753, %v3422
      %v3773 = vsel %vm3761, %v3754, %v3424
      %v3774 = vsel %vm3761, %v3755, %v3426
      %v3775 = vsel %vm3761, %v3756, %v3428
      %v3776 = vsel %vm3761, %v3757, %v3430
      %v3777 = vsel %vm3761, %v3758, %v3432
      %v3778 = vsel %vm3761, %v3759, %v3434
      %v3779 = vsel %vm3761, %v3760, %v3436
      %vm3780 = vcmask 982016
      %v3781 = vsel %vm3780, %v3762, %v3463
      %v3782 = vsel %vm3780, %v3763, %v3465
      %v3783 = vsel %vm3780, %v3764, %v3467
      %v3784 = vsel %vm3780, %v3765, %v3469
      %v3785 = vsel %vm3780, %v3766, %v3471
      %v3786 = vsel %vm3780, %v3767, %v3473
      %v3787 = vsel %vm3780, %v3768, %v3475
      %v3788 = vsel %vm3780, %v3769, %v3477
      %v3789 = vsel %vm3780, %v3770, %v3479
      %v3790 = vsel %vm3780, %v3771, %v3481
      %v3791 = vsel %vm3780, %v3772, %v3483
      %v3792 = vsel %vm3780, %v3773, %v3485
      %v3793 = vsel %vm3780, %v3774, %v3487
      %v3794 = vsel %vm3780, %v3775, %v3489
      %v3795 = vsel %vm3780, %v3776, %v3491
      %v3796 = vsel %vm3780, %v3777, %v3493
      %v3797 = vsel %vm3780, %v3778, %v3495
      %v3798 = vsel %vm3780, %v3779, %v3497
      %v3799 = vrot.slane %v2370, 1
      %v3800 = vsel %vm2415, %v3017, %v3799
      %v3801 = vrot.slane %v2375, 1
      %v3802 = vsel %vm2415, %v3799, %v3801
      %v3803 = vrot.slane %v2380, 1
      %v3804 = vsel %vm2415, %v3801, %v3803
      %3805 = vrot.lane.b32.xlu0 %v3016, 8
      %v3806 = vpop.permute.xlu0 %3805
      %3807 = vrot.lane.b32.xlu0 %v3018, 8
      %v3808 = vpop.permute.xlu0 %3807
      %3809 = vrot.lane.b32.xlu0 %v3800, 8
      %v3810 = vpop.permute.xlu0 %3809
      %3811 = vrot.lane.b32.xlu0 %v3802, 8
      %v3812 = vpop.permute.xlu0 %3811
      %3813 = vrot.lane.b32.xlu0 %v3804, 8
      %v3814 = vpop.permute.xlu0 %3813
      %3815 = vrot.lane.b32.xlu0 %v3803, 8
      %v3816 = vpop.permute.xlu0 %3815
      %v3824 = vrot.slane %v2385, 2
      %v3825 = vsel %vm2505, %v3460, %v3824
      %3826 = vrot.lane.b32.xlu0 %v3074, 16
      %v3827 = vpop.permute.xlu0 %3826
      %3828 = vrot.lane.b32.xlu0 %v3076, 16
      %v3829 = vpop.permute.xlu0 %3828
      %3830 = vrot.lane.b32.xlu0 %v3457, 16
      %v3831 = vpop.permute.xlu0 %3830
      %3832 = vrot.lane.b32.xlu0 %v3459, 16
      %v3833 = vpop.permute.xlu0 %3832
      %3834 = vrot.lane.b32.xlu0 %v3461, 16
      %v3835 = vpop.permute.xlu0 %3834
      %3836 = vrot.lane.b32.xlu0 %v3825, 16
      %v3837 = vpop.permute.xlu0 %3836
      %v3844 = vrot.slane %v2360, 3
      %v3845 = vsel %vm2595, %v2629, %v3844
      %v3846 = vrot.slane %v2365, 3
      %v3847 = vsel %vm2595, %v3844, %v3846
      %v3848 = vrot.slane %v2370, 3
      %v3849 = vsel %vm2595, %v3846, %v3848
      %v3850 = vrot.slane %v2375, 3
      %v3851 = vsel %vm2595, %v3848, %v3850
      %v3852 = vrot.slane %v2380, 3
      %v3853 = vsel %vm2595, %v3850, %v3852
      %v3854 = vrot.slane %v2385, 3
      %v3855 = vsel %vm2595, %v3852, %v3854
      %3856 = vrot.lane.b32.xlu0 %v3845, 24
      %v3857 = vpop.permute.xlu0 %3856
      %3858 = vrot.lane.b32.xlu0 %v3847, 24
      %v3859 = vpop.permute.xlu0 %3858
      %3860 = vrot.lane.b32.xlu0 %v3849, 24
      %v3861 = vpop.permute.xlu0 %3860
      %3862 = vrot.lane.b32.xlu0 %v3851, 24
      %v3863 = vpop.permute.xlu0 %3862
      %3864 = vrot.lane.b32.xlu0 %v3853, 24
      %v3865 = vpop.permute.xlu0 %3864
      %3866 = vrot.lane.b32.xlu0 %v3855, 24
      %v3867 = vpop.permute.xlu0 %3866
      %v3875 = vrot.slane %v2380, 5
      %v3876 = vsel %vm3193, %v3229, %v3875
      %v3877 = vrot.slane %v2385, 5
      %v3878 = vsel %vm3193, %v3875, %v3877
      %v3879 = vrot.slane %v2390, 5
      %v3880 = vsel %vm3193, %v3877, %v3879
      %3881 = vrot.lane.b32.xlu0 %v3201, 32
      %v3882 = vpop.permute.xlu0 %3881
      %3883 = vrot.lane.b32.xlu0 %v3204, 32
      %v3884 = vpop.permute.xlu0 %3883
      %3885 = vrot.lane.b32.xlu0 %v3206, 32
      %v3886 = vpop.permute.xlu0 %3885
      %3887 = vrot.lane.b32.xlu0 %v3208, 32
      %v3888 = vpop.permute.xlu0 %3887
      %3889 = vrot.lane.b32.xlu0 %v3210, 32
      %v3890 = vpop.permute.xlu0 %3889
      %3891 = vrot.lane.b32.xlu0 %v3212, 32
      %v3892 = vpop.permute.xlu0 %3891
      %3893 = vrot.lane.b32.xlu0 %v3214, 32
      %v3894 = vpop.permute.xlu0 %3893
      %3895 = vrot.lane.b32.xlu0 %v3216, 32
      %v3896 = vpop.permute.xlu0 %3895
      %3897 = vrot.lane.b32.xlu0 %v3218, 32
      %v3898 = vpop.permute.xlu0 %3897
      %3899 = vrot.lane.b32.xlu0 %v3220, 32
      %v3900 = vpop.permute.xlu0 %3899
      %3901 = vrot.lane.b32.xlu0 %v3222, 32
      %v3902 = vpop.permute.xlu0 %3901
      %3903 = vrot.lane.b32.xlu0 %v3224, 32
      %v3904 = vpop.permute.xlu0 %3903
      %3905 = vrot.lane.b32.xlu0 %v3226, 32
      %v3906 = vpop.permute.xlu0 %3905
      %3907 = vrot.lane.b32.xlu0 %v3228, 32
      %v3908 = vpop.permute.xlu0 %3907
      %3909 = vrot.lane.b32.xlu0 %v3230, 32
      %v3910 = vpop.permute.xlu0 %3909
      %3911 = vrot.lane.b32.xlu0 %v3876, 32
      %v3912 = vpop.permute.xlu0 %3911
      %3913 = vrot.lane.b32.xlu0 %v3878, 32
      %v3914 = vpop.permute.xlu0 %3913
      %3915 = vrot.lane.b32.xlu0 %v3880, 32
      %v3916 = vpop.permute.xlu0 %3915
      %v3935 = vrot.slane %v2380, 6
      %v3936 = vsel %vm2777, %v3287, %v3935
      %v3937 = vrot.slane %v2385, 6
      %v3938 = vsel %vm2777, %v3935, %v3937
      %v3939 = vrot.slane %v2390, 6
      %v3940 = vsel %vm2777, %v3937, %v3939
      %3941 = vrot.lane.b32.xlu0 %v2789, 40
      %v3942 = vpop.permute.xlu0 %3941
      %3943 = vrot.lane.b32.xlu0 %v3286, 40
      %v3944 = vpop.permute.xlu0 %3943
      %3945 = vrot.lane.b32.xlu0 %v3288, 40
      %v3946 = vpop.permute.xlu0 %3945
      %3947 = vrot.lane.b32.xlu0 %v3936, 40
      %v3948 = vpop.permute.xlu0 %3947
      %3949 = vrot.lane.b32.xlu0 %v3938, 40
      %v3950 = vpop.permute.xlu0 %3949
      %3951 = vrot.lane.b32.xlu0 %v3940, 40
      %v3952 = vpop.permute.xlu0 %3951
      %v3959 = vrot.slane %v2380, 7
      %v3960 = vsel %vm2869, %v3345, %v3959
      %v3961 = vrot.slane %v2385, 7
      %v3962 = vsel %vm2869, %v3959, %v3961
      %v3963 = vrot.slane %v2390, 7
      %v3964 = vsel %vm2869, %v3961, %v3963
      %3965 = vrot.lane.b32.xlu0 %v2881, 48
      %v3966 = vpop.permute.xlu0 %3965
      %3967 = vrot.lane.b32.xlu0 %v3344, 48
      %v3968 = vpop.permute.xlu0 %3967
      %3969 = vrot.lane.b32.xlu0 %v3346, 48
      %v3970 = vpop.permute.xlu0 %3969
      %3971 = vrot.lane.b32.xlu0 %v3960, 48
      %v3972 = vpop.permute.xlu0 %3971
      %3973 = vrot.lane.b32.xlu0 %v3962, 48
      %v3974 = vpop.permute.xlu0 %3973
      %3975 = vrot.lane.b32.xlu0 %v3964, 48
      %v3976 = vpop.permute.xlu0 %3975
      %3983 = vrot.lane.b32.xlu0 %v2370, 56
      %v3984 = vpop.permute.xlu0 %3983
      %3985 = vrot.lane.b32.xlu0 %v2375, 56
      %v3986 = vpop.permute.xlu0 %3985
      %3987 = vrot.lane.b32.xlu0 %v2380, 56
      %v3988 = vpop.permute.xlu0 %3987
      %3989 = vrot.lane.b32.xlu0 %v2385, 56
      %v3990 = vpop.permute.xlu0 %3989
      %3991 = vrot.lane.b32.xlu0 %v2390, 56
      %v3992 = vpop.permute.xlu0 %3991
      %v3998 = vrot.slane %v2385, 1
      %v3999 = vsel %vm2415, %v3803, %v3998
      %v4000 = vrot.slane %v2390, 1
      %v4001 = vsel %vm2415, %v3998, %v4000
      %4002 = vrot.lane.b32.xlu0 %v3800, 64
      %v4003 = vpop.permute.xlu0 %4002
      %4004 = vrot.lane.b32.xlu0 %v3802, 64
      %v4005 = vpop.permute.xlu0 %4004
      %4006 = vrot.lane.b32.xlu0 %v3804, 64
      %v4007 = vpop.permute.xlu0 %4006
      %4008 = vrot.lane.b32.xlu0 %v3999, 64
      %v4009 = vpop.permute.xlu0 %4008
      %4010 = vrot.lane.b32.xlu0 %v4001, 64
      %v4011 = vpop.permute.xlu0 %4010
      %4012 = vrot.lane.b32.xlu0 %v4000, 64
      %v4013 = vpop.permute.xlu0 %4012
      %v4020 = vsel %vm3516, %v2355, %v3806
      %v4021 = vsel %vm3516, %v2360, %v3808
      %v4022 = vsel %vm3516, %v2365, %v3810
      %v4023 = vsel %vm3516, %v2370, %v3812
      %v4024 = vsel %vm3516, %v2375, %v3814
      %v4025 = vsel %vm3516, %v2380, %v3816
      %v4026 = vsel %vm1542, %v4020, %v3827
      %v4027 = vsel %vm1542, %v4021, %v3829
      %v4028 = vsel %vm1542, %v4022, %v3831
      %v4029 = vsel %vm1542, %v4023, %v3833
      %v4030 = vsel %vm1542, %v4024, %v3835
      %v4031 = vsel %vm1542, %v4025, %v3837
      %v4032 = vsel %vm3553, %v4026, %v3857
      %v4033 = vsel %vm3553, %v4027, %v3859
      %v4034 = vsel %vm3553, %v4028, %v3861
      %v4035 = vsel %vm3553, %v4029, %v3863
      %v4036 = vsel %vm3553, %v4030, %v3865
      %v4037 = vsel %vm3553, %v4031, %v3867
      %v4038 = vsel %vm3572, %v3559, %v3882
      %v4039 = vsel %vm3572, %v3560, %v3884
      %v4040 = vsel %vm3572, %v3561, %v3886
      %v4041 = vsel %vm3572, %v3562, %v3888
      %v4042 = vsel %vm3572, %v3563, %v3890
      %v4043 = vsel %vm3572, %v3564, %v3892
      %v4044 = vsel %vm3572, %v3565, %v3894
      %v4045 = vsel %vm3572, %v3566, %v3896
      %v4046 = vsel %vm3572, %v3567, %v3898
      %v4047 = vsel %vm3572, %v3568, %v3900
      %v4048 = vsel %vm3572, %v3569, %v3902
      %v4049 = vsel %vm3572, %v3570, %v3904
      %v4050 = vsel %vm3572, %v4032, %v3906
      %v4051 = vsel %vm3572, %v4033, %v3908
      %v4052 = vsel %vm3572, %v4034, %v3910
      %v4053 = vsel %vm3572, %v4035, %v3912
      %v4054 = vsel %vm3572, %v4036, %v3914
      %v4055 = vsel %vm3572, %v4037, %v3916
      %v4056 = vsel %vm3591, %v4038, %v3942
      %v4057 = vsel %vm3591, %v4039, %v2828
      %v4058 = vsel %vm3591, %v4040, %v2830
      %v4059 = vsel %vm3591, %v4041, %v2832
      %v4060 = vsel %vm3591, %v4042, %v2834
      %v4061 = vsel %vm3591, %v4043, %v2836
      %v4062 = vsel %vm3591, %v4044, %v2838
      %v4063 = vsel %vm3591, %v4045, %v2840
      %v4064 = vsel %vm3591, %v4046, %v2842
      %v4065 = vsel %vm3591, %v4047, %v2844
      %v4066 = vsel %vm3591, %v4048, %v2846
      %v4067 = vsel %vm3591, %v4049, %v2848
      %v4068 = vsel %vm3591, %v4050, %v2850
      %v4069 = vsel %vm3591, %v4051, %v3944
      %v4070 = vsel %vm3591, %v4052, %v3946
      %v4071 = vsel %vm3591, %v4053, %v3948
      %v4072 = vsel %vm3591, %v4054, %v3950
      %v4073 = vsel %vm3591, %v4055, %v3952
      %v4074 = vsel %vm3610, %v4056, %v3966
      %v4075 = vsel %vm3610, %v4057, %v2920
      %v4076 = vsel %vm3610, %v4058, %v2922
      %v4077 = vsel %vm3610, %v4059, %v2924
      %v4078 = vsel %vm3610, %v4060, %v2926
      %v4079 = vsel %vm3610, %v4061, %v2928
      %v4080 = vsel %vm3610, %v4062, %v2930
      %v4081 = vsel %vm3610, %v4063, %v2932
      %v4082 = vsel %vm3610, %v4064, %v2934
      %v4083 = vsel %vm3610, %v4065, %v2936
      %v4084 = vsel %vm3610, %v4066, %v2938
      %v4085 = vsel %vm3610, %v4067, %v2940
      %v4086 = vsel %vm3610, %v4068, %v2942
      %v4087 = vsel %vm3610, %v4069, %v3968
      %v4088 = vsel %vm3610, %v4070, %v3970
      %v4089 = vsel %vm3610, %v4071, %v3972
      %v4090 = vsel %vm3610, %v4072, %v3974
      %v4091 = vsel %vm3610, %v4073, %v3976
      %v4092 = vsel %vm3629, %v4074, %v2972
      %v4093 = vsel %vm3629, %v4075, %v2974
      %v4094 = vsel %vm3629, %v4076, %v2976
      %v4095 = vsel %vm3629, %v4077, %v2978
      %v4096 = vsel %vm3629, %v4078, %v2980
      %v4097 = vsel %vm3629, %v4079, %v2982
      %v4098 = vsel %vm3629, %v4080, %v2984
      %v4099 = vsel %vm3629, %v4081, %v2986
      %v4100 = vsel %vm3629, %v4082, %v2988
      %v4101 = vsel %vm3629, %v4083, %v2990
      %v4102 = vsel %vm3629, %v4084, %v2992
      %v4103 = vsel %vm3629, %v4085, %v2994
      %v4104 = vsel %vm3629, %v4086, %v2996
      %v4105 = vsel %vm3629, %v4087, %v3984
      %v4106 = vsel %vm3629, %v4088, %v3986
      %v4107 = vsel %vm3629, %v4089, %v3988
      %v4108 = vsel %vm3629, %v4090, %v3990
      %v4109 = vsel %vm3629, %v4091, %v3992
      %v4110 = vsel %vm412, %v4092, %v3030
      %v4111 = vsel %vm412, %v4093, %v3032
      %v4112 = vsel %vm412, %v4094, %v3034
      %v4113 = vsel %vm412, %v4095, %v3036
      %v4114 = vsel %vm412, %v4096, %v3038
      %v4115 = vsel %vm412, %v4097, %v3040
      %v4116 = vsel %vm412, %v4098, %v3042
      %v4117 = vsel %vm412, %v4099, %v3044
      %v4118 = vsel %vm412, %v4100, %v3046
      %v4119 = vsel %vm412, %v4101, %v3048
      %v4120 = vsel %vm412, %v4102, %v3050
      %v4121 = vsel %vm412, %v4103, %v3052
      %v4122 = vsel %vm412, %v4104, %v4003
      %v4123 = vsel %vm412, %v4105, %v4005
      %v4124 = vsel %vm412, %v4106, %v4007
      %v4125 = vsel %vm412, %v4107, %v4009
      %v4126 = vsel %vm412, %v4108, %v4011
      %v4127 = vsel %vm412, %v4109, %v4013
      %v4146 = vrot.slane %v4110, 3
      %v4147 = vrot.slane %v4111, 3
      %v4148 = vsel %vm2595, %v4146, %v4147
      %v4149 = vrot.slane %v4112, 3
      %v4150 = vsel %vm2595, %v4147, %v4149
      %v4151 = vrot.slane %v4113, 3
      %v4152 = vsel %vm2595, %v4149, %v4151
      %v4153 = vrot.slane %v4114, 3
      %v4154 = vsel %vm2595, %v4151, %v4153
      %v4155 = vrot.slane %v4115, 3
      %v4156 = vsel %vm2595, %v4153, %v4155
      %v4157 = vrot.slane %v4116, 3
      %v4158 = vsel %vm2595, %v4155, %v4157
      %v4159 = vrot.slane %v4117, 3
      %v4160 = vsel %vm2595, %v4157, %v4159
      %v4161 = vrot.slane %v4118, 3
      %v4162 = vsel %vm2595, %v4159, %v4161
      %v4163 = vrot.slane %v4119, 3
      %v4164 = vsel %vm2595, %v4161, %v4163
      %v4165 = vrot.slane %v4120, 3
      %v4166 = vsel %vm2595, %v4163, %v4165
      %v4167 = vrot.slane %v4121, 3
      %v4168 = vsel %vm2595, %v4165, %v4167
      %v4169 = vrot.slane %v4122, 3
      %v4170 = vsel %vm2595, %v4167, %v4169
      %v4171 = vrot.slane %v4123, 3
      %v4172 = vsel %vm2595, %v4169, %v4171
      %v4173 = vrot.slane %v4124, 3
      %v4174 = vsel %vm2595, %v4171, %v4173
      %v4175 = vrot.slane %v4125, 3
      %v4176 = vsel %vm2595, %v4173, %v4175
      %v4177 = vrot.slane %v4126, 3
      %v4178 = vsel %vm2595, %v4175, %v4177
      %v4179 = vrot.slane %v4127, 3
      %v4180 = vsel %vm2595, %v4177, %v4179
      %v4181 = vld [vmem:[%s2] sm:$0xff]
      %v4182 = vld [vmem:[%s2 + $0x8] sm:$0xff]
      %v4183 = vld [vmem:[%s2 + $0x10] sm:$0xff]
      %v4184 = vld [vmem:[%s2 + $0x18] sm:$0xff]
      %v4185 = vld [vmem:[%s2 + $0x20] sm:$0xff]
      %v4186 = vld [vmem:[%s2 + $0x28] sm:$0xff]
      %v4187 = vld [vmem:[%s2 + $0x30] sm:$0xff]
      %v4188 = vld [vmem:[%s2 + $0x38] sm:$0xff]
      %v4189 = vld [vmem:[%s2 + $0x40] sm:$0xff]
      %v4190 = vld [vmem:[%s2 + $0x48] sm:$0xff]
      %v4191 = vld [vmem:[%s2 + $0x50] sm:$0xff]
      %v4192 = vld [vmem:[%s2 + $0x58] sm:$0xff]
      %v4193 = vld [vmem:[%s2 + $0x60] sm:$0xff]
      %v4194 = vld [vmem:[%s2 + $0x68] sm:$0xff]
      %v4195 = vld [vmem:[%s2 + $0x70] sm:$0xff]
      %v4196 = vld [vmem:[%s2 + $0x78] sm:$0xff]
      %v4197 = vld [vmem:[%s2 + $0x80] sm:$0xff]
      %v4198 = vld [vmem:[%s2 + $0x88] sm:$0xff]
      %v4199 = vld [vmem:[%s2 + $0x90] sm:$0xff]
      %v4200 = vld [vmem:[%s2 + $0x98] sm:$0xff]
      %v4201 = vld [vmem:[%s2 + $0xa0] sm:$0xff]
      %v4202 = vld [vmem:[%s2 + $0xa8] sm:$0xff]
      %v4203 = vld [vmem:[%s2 + $0xb0] sm:$0xff]
      %v4204 = vld [vmem:[%s2 + $0xb8] sm:$0xff]
      %v4205 = vld [vmem:[%s2 + $0xc0] sm:$0xff]
      %v4206 = vsel %vm3666, %v4148, 0
      %v4208 = vsel %vm3666, %v4150, 0
      %v4210 = vsel %vm3666, %v4152, 0
      %v4212 = vsel %vm3666, %v4154, 0
      %v4214 = vsel %vm3666, %v4156, 0
      %v4216 = vsel %vm3666, %v4158, 0
      %v4218 = vsel %vm3666, %v4160, 0
      %v4220 = vsel %vm3666, %v4162, 0
      %v4222 = vsel %vm3666, %v4164, 0
      %v4224 = vsel %vm3666, %v4166, 0
      %v4226 = vsel %vm3666, %v4168, 0
      %v4228 = vsel %vm3666, %v4170, 0
      %v4230 = vsel %vm3666, %v4172, 0
      %v4232 = vsel %vm3666, %v4174, 0
      %v4234 = vsel %vm3666, %v4176, 0
      %v4236 = vsel %vm3666, %v4178, 0
      %v4238 = vsel %vm3666, %v4180, 0
      %v4240 = vsel %vm3666, %v4179, 0
      %4242 = vmatprep.subr.mxu0 0.0
      %4243 = vmatpush1.msra.mxu0 %v4196
      %4244 = vmatprep.subr.mxu0 0.0
      %4245 = vmatpush1.msra.mxu0 %v4195
      %4246 = vmatprep.subr.mxu0 0.0
      %4247 = vmatpush1.msra.mxu0 %v4194
      %4248 = vmatprep.subr.mxu0 0.0
      %4249 = vmatpush1.msra.mxu0 %v4193
      %4250 = vmatprep.subr.mxu0 0.0
      %4251 = vmatpush1.msra.mxu0 %v4192
      %4252 = vmatprep.subr.mxu0 0.0
      %4253 = vmatpush1.msra.mxu0 %v4191
      %4254 = vmatprep.subr.mxu0 0.0
      %4255 = vmatpush1.msra.mxu0 %v4190
      %4256 = vmatprep.subr.mxu0 0.0
      %4257 = vmatpush1.msra.mxu0 %v4189
      %4258 = vmatprep.subr.mxu0 0.0
      %4259 = vmatpush1.msra.mxu0 %v4188
      %4260 = vmatprep.subr.mxu0 0.0
      %4261 = vmatpush1.msra.mxu0 %v4187
      %4262 = vmatprep.subr.mxu0 0.0
      %4263 = vmatpush1.msra.mxu0 %v4186
      %4264 = vmatprep.subr.mxu0 0.0
      %4265 = vmatpush1.msra.mxu0 %v4185
      %4266 = vmatprep.subr.mxu0 0.0
      %4267 = vmatpush1.msra.mxu0 %v4184
      %4268 = vmatprep.subr.mxu0 0.0
      %4269 = vmatpush1.msra.mxu0 %v4183
      %4270 = vmatprep.subr.mxu0 0.0
      %4271 = vmatpush1.msra.mxu0 %v4182
      %4272 = vmatprep.subr.mxu0 0.0
      %4273 = vmatpush1.msra.mxu0 %v4181
      %4274 = vmatprep.subr.mxu0 0.0
      %4275 = vmatpush2.msra.mxu0 0.0
      %4276 = vmatprep.subr.mxu0 0.0
      %4277 = vmatpush2.msra.mxu0 0.0
      %4278 = vmatprep.subr.mxu0 0.0
      %4279 = vmatpush2.msra.mxu0 0.0
      %4280 = vmatprep.subr.mxu0 0.0
      %4281 = vmatpush2.msra.mxu0 0.0
      %4282 = vmatprep.subr.mxu0 0.0
      %4283 = vmatpush2.msra.mxu0 0.0
      %4284 = vmatprep.subr.mxu0 0.0
      %4285 = vmatpush2.msra.mxu0 0.0
      %4286 = vmatprep.subr.mxu0 0.0
      %4287 = vmatpush2.msra.mxu0 0.0
      %4288 = vmatprep.subr.mxu0 0.0
      %4289 = vmatpush2.msra.mxu0 %v4205
      %4290 = vmatprep.subr.mxu0 0.0
      %4291 = vmatpush2.msra.mxu0 %v4204
      %4292 = vmatprep.subr.mxu0 0.0
      %4293 = vmatpush2.msra.mxu0 %v4203
      %4294 = vmatprep.subr.mxu0 0.0
      %4295 = vmatpush2.msra.mxu0 %v4202
      %4296 = vmatprep.subr.mxu0 0.0
      %4297 = vmatpush2.msra.mxu0 %v4201
      %4298 = vmatprep.subr.mxu0 0.0
      %4299 = vmatpush2.msra.mxu0 %v4200
      %4300 = vmatprep.subr.mxu0 0.0
      %4301 = vmatpush2.msra.mxu0 %v4199
      %4302 = vmatprep.subr.mxu0 0.0
      %4303 = vmatpush2.msra.mxu0 %v4198
      %4304 = vmatprep.subr.mxu0 0.0
      %4305 = vmatpush2.msra.mxu0 %v4197
      %4306 = vmatprep.mubr.f32.mxu0 %v4206
      %4307 = vmatmul.mubr.f32.gmra.mxu0 %v3781
      %v4308 = vpop.f32.mrf.mxu0
      %v4309 = vadd.f32 0.0, %v4308
      %v4310 = vpop.f32.mrf.mxu0
      %4311 = vmatprep.mubr.f32.mxu0 %v4208
      %4312 = vmatmul.mubr.f32.gmra.mxu0 %v3782
      %v4313 = vpop.f32.mrf.mxu0
      %v4314 = vadd.f32 0.0, %v4313
      %v4315 = vpop.f32.mrf.mxu0
      %4316 = vmatprep.mubr.f32.mxu0 %v4210
      %4317 = vmatmul.mubr.f32.gmra.mxu0 %v3783
      %v4318 = vpop.f32.mrf.mxu0
      %v4319 = vadd.f32 0.0, %v4318
      %v4320 = vpop.f32.mrf.mxu0
      %4321 = vmatprep.mubr.f32.mxu0 %v4212
      %4322 = vmatmul.mubr.f32.gmra.mxu0 %v3784
      %v4323 = vpop.f32.mrf.mxu0
      %v4324 = vadd.f32 0.0, %v4323
      %v4325 = vpop.f32.mrf.mxu0
      %4326 = vmatprep.mubr.f32.mxu0 %v4214
      %4327 = vmatmul.mubr.f32.gmra.mxu0 %v3785
      %v4328 = vpop.f32.mrf.mxu0
      %v4329 = vadd.f32 0.0, %v4328
      %v4330 = vpop.f32.mrf.mxu0
      %4331 = vmatprep.mubr.f32.mxu0 %v4216
      %4332 = vmatmul.mubr.f32.gmra.mxu0 %v3786
      %v4333 = vpop.f32.mrf.mxu0
      %v4334 = vadd.f32 0.0, %v4333
      %v4335 = vpop.f32.mrf.mxu0
      %4336 = vmatprep.mubr.f32.mxu0 %v4218
      %4337 = vmatmul.mubr.f32.gmra.mxu0 %v3787
      %v4338 = vpop.f32.mrf.mxu0
      %v4339 = vadd.f32 0.0, %v4338
      %v4340 = vpop.f32.mrf.mxu0
      %4341 = vmatprep.mubr.f32.mxu0 %v4220
      %4342 = vmatmul.mubr.f32.gmra.mxu0 %v3788
      %v4343 = vpop.f32.mrf.mxu0
      %v4344 = vadd.f32 0.0, %v4343
      %v4345 = vpop.f32.mrf.mxu0
      %4346 = vmatprep.mubr.f32.mxu0 %v4222
      %4347 = vmatmul.mubr.f32.gmra.mxu0 %v3789
      %v4348 = vpop.f32.mrf.mxu0
      %v4349 = vadd.f32 0.0, %v4348
      %v4350 = vpop.f32.mrf.mxu0
      %4351 = vmatprep.mubr.f32.mxu0 %v4224
      %4352 = vmatmul.mubr.f32.gmra.mxu0 %v3790
      %v4353 = vpop.f32.mrf.mxu0
      %v4354 = vadd.f32 0.0, %v4353
      %v4355 = vpop.f32.mrf.mxu0
      %4356 = vmatprep.mubr.f32.mxu0 %v4226
      %4357 = vmatmul.mubr.f32.gmra.mxu0 %v3791
      %v4358 = vpop.f32.mrf.mxu0
      %v4359 = vadd.f32 0.0, %v4358
      %v4360 = vpop.f32.mrf.mxu0
      %4361 = vmatprep.mubr.f32.mxu0 %v4228
      %4362 = vmatmul.mubr.f32.gmra.mxu0 %v3792
      %v4363 = vpop.f32.mrf.mxu0
      %v4364 = vadd.f32 0.0, %v4363
      %v4365 = vpop.f32.mrf.mxu0
      %4366 = vmatprep.mubr.f32.mxu0 %v4230
      %4367 = vmatmul.mubr.f32.gmra.mxu0 %v3793
      %v4368 = vpop.f32.mrf.mxu0
      %v4369 = vadd.f32 0.0, %v4368
      %v4370 = vpop.f32.mrf.mxu0
      %4371 = vmatprep.mubr.f32.mxu0 %v4232
      %4372 = vmatmul.mubr.f32.gmra.mxu0 %v3794
      %v4373 = vpop.f32.mrf.mxu0
      %v4374 = vadd.f32 0.0, %v4373
      %v4375 = vpop.f32.mrf.mxu0
      %4376 = vmatprep.mubr.f32.mxu0 %v4234
      %4377 = vmatmul.mubr.f32.gmra.mxu0 %v3795
      %v4378 = vpop.f32.mrf.mxu0
      %v4379 = vadd.f32 0.0, %v4378
      %v4380 = vpop.f32.mrf.mxu0
      %4381 = vmatprep.mubr.f32.mxu0 %v4236
      %4382 = vmatmul.mubr.f32.gmra.mxu0 %v3796
      %v4383 = vpop.f32.mrf.mxu0
      %v4384 = vadd.f32 0.0, %v4383
      %v4385 = vpop.f32.mrf.mxu0
      %4386 = vmatprep.mubr.f32.mxu0 %v4238
      %4387 = vmatmul.mubr.f32.gmra.mxu0 %v3797
      %v4388 = vpop.f32.mrf.mxu0
      %v4389 = vadd.f32 0.0, %v4388
      %v4390 = vpop.f32.mrf.mxu0
      %4391 = vmatprep.mubr.f32.mxu0 %v4240
      %4392 = vmatmul.mubr.f32.gmra.mxu0 %v3798
      %v4393 = vpop.f32.mrf.mxu0
      %v4394 = vadd.f32 0.0, %v4393
      %v4395 = vpop.f32.mrf.mxu0
      %4396 = vdwg.mxu0
      %v4397 = vmax.f32 %v4309, 0.0
      %v4398 = vmax.f32 %v4314, 0.0
      %v4399 = vmax.f32 %v4319, 0.0
      %v4400 = vmax.f32 %v4324, 0.0
      %v4401 = vmax.f32 %v4329, 0.0
      %v4402 = vmax.f32 %v4334, 0.0
      %v4403 = vmax.f32 %v4339, 0.0
      %v4404 = vmax.f32 %v4344, 0.0
      %v4405 = vmax.f32 %v4349, 0.0
      %v4406 = vmax.f32 %v4354, 0.0
      %v4407 = vmax.f32 %v4359, 0.0
      %v4408 = vmax.f32 %v4364, 0.0
      %v4409 = vmax.f32 %v4369, 0.0
      %v4410 = vmax.f32 %v4374, 0.0
      %v4411 = vmax.f32 %v4379, 0.0
      %v4412 = vmax.f32 %v4384, 0.0
      %v4413 = vmax.f32 %v4389, 0.0
      %v4414 = vmax.f32 %v4394, 0.0
      %v4415 = vld [vmem:[%s7] sm:$0xff]
      %v4416 = vld [vmem:[%s7 + $0x8] sm:$0xff]
      %v4417 = vld [vmem:[%s7 + $0x10] sm:$0xff]
      %v4418 = vld [vmem:[%s7 + $0x18] sm:$0xff]
      %v4419 = vld [vmem:[%s7 + $0x20] sm:$0xff]
      %v4420 = vld [vmem:[%s7 + $0x28] sm:$0xff]
      %v4421 = vld [vmem:[%s7 + $0x30] sm:$0xff]
      %v4422 = vld [vmem:[%s7 + $0x38] sm:$0xff]
      %vm4423 = vcmask 97280
      %v4425 = vsel %vm4423, %v4416, 0
      %v4428 = vsel %vm4423, %v4418, 0
      %v4431 = vsel %vm4423, %v4420, 0
      %v4434 = vsel %vm4423, %v4422, 0
      %v4437 = vsel %vm2685, %v4414, 0
      %4439 = vmatprep.subr.mxu0 0.0
      %4440 = vmatpush1.msra.mxu0 %v4412
      %4441 = vmatprep.subr.mxu0 0.0
      %4442 = vmatpush1.msra.mxu0 %v4411
      %4443 = vmatprep.subr.mxu0 0.0
      %4444 = vmatpush1.msra.mxu0 %v4410
      %4445 = vmatprep.subr.mxu0 0.0
      %4446 = vmatpush1.msra.mxu0 %v4409
      %4447 = vmatprep.subr.mxu0 0.0
      %4448 = vmatpush1.msra.mxu0 %v4408
      %4449 = vmatprep.subr.mxu0 0.0
      %4450 = vmatpush1.msra.mxu0 %v4407
      %4451 = vmatprep.subr.mxu0 0.0
      %4452 = vmatpush1.msra.mxu0 %v4406
      %4453 = vmatprep.subr.mxu0 0.0
      %4454 = vmatpush1.msra.mxu0 %v4405
      %4455 = vmatprep.subr.mxu0 0.0
      %4456 = vmatpush1.msra.mxu0 %v4404
      %4457 = vmatprep.subr.mxu0 0.0
      %4458 = vmatpush1.msra.mxu0 %v4403
      %4459 = vmatprep.subr.mxu0 0.0
      %4460 = vmatpush1.msra.mxu0 %v4402
      %4461 = vmatprep.subr.mxu0 0.0
      %4462 = vmatpush1.msra.mxu0 %v4401
      %4463 = vmatprep.subr.mxu0 0.0
      %4464 = vmatpush1.msra.mxu0 %v4400
      %4465 = vmatprep.subr.mxu0 0.0
      %4466 = vmatpush1.msra.mxu0 %v4399
      %4467 = vmatprep.subr.mxu0 0.0
      %4468 = vmatpush1.msra.mxu0 %v4398
      %4469 = vmatprep.subr.mxu0 0.0
      %4470 = vmatpush1.msra.mxu0 %v4397
      %4471 = vmatprep.subr.mxu0 0.0
      %4472 = vmatpush2.msra.mxu0 0.0
      %4473 = vmatprep.subr.mxu0 0.0
      %4474 = vmatpush2.msra.mxu0 0.0
      %4475 = vmatprep.subr.mxu0 0.0
      %4476 = vmatpush2.msra.mxu0 0.0
      %4477 = vmatprep.subr.mxu0 0.0
      %4478 = vmatpush2.msra.mxu0 0.0
      %4479 = vmatprep.subr.mxu0 0.0
      %4480 = vmatpush2.msra.mxu0 0.0
      %4481 = vmatprep.subr.mxu0 0.0
      %4482 = vmatpush2.msra.mxu0 0.0
      %4483 = vmatprep.subr.mxu0 0.0
      %4484 = vmatpush2.msra.mxu0 0.0
      %4485 = vmatprep.subr.mxu0 0.0
      %4486 = vmatpush2.msra.mxu0 0.0
      %4487 = vmatprep.subr.mxu0 0.0
      %4488 = vmatpush2.msra.mxu0 0.0
      %4489 = vmatprep.subr.mxu0 0.0
      %4490 = vmatpush2.msra.mxu0 0.0
      %4491 = vmatprep.subr.mxu0 0.0
      %4492 = vmatpush2.msra.mxu0 0.0
      %4493 = vmatprep.subr.mxu0 0.0
      %4494 = vmatpush2.msra.mxu0 0.0
      %4495 = vmatprep.subr.mxu0 0.0
      %4496 = vmatpush2.msra.mxu0 0.0
      %4497 = vmatprep.subr.mxu0 0.0
      %4498 = vmatpush2.msra.mxu0 0.0
      %4499 = vmatprep.subr.mxu0 0.0
      %4500 = vmatpush2.msra.mxu0 %v4437
      %4501 = vmatprep.subr.mxu0 0.0
      %4502 = vmatpush2.msra.mxu0 %v4413
      %4503 = vmatprep.mubr.f32.mxu0 %v4425
      %4504 = vmatmul.mubr.f32.gmra.mxu0 %v4415
      %v4505 = vpop.f32.mrf.mxu0
      %v4506 = vadd.f32 0.0, %v4505
      %v4507 = vpop.f32.mrf.mxu0
      %4508 = vmatprep.mubr.f32.mxu0 %v4428
      %4509 = vmatmul.mubr.f32.gmra.mxu0 %v4417
      %v4510 = vpop.f32.mrf.mxu0
      %v4511 = vadd.f32 0.0, %v4510
      %v4512 = vpop.f32.mrf.mxu0
      %4513 = vmatprep.mubr.f32.mxu0 %v4431
      %4514 = vmatmul.mubr.f32.gmra.mxu0 %v4419
      %v4515 = vpop.f32.mrf.mxu0
      %v4516 = vadd.f32 0.0, %v4515
      %v4517 = vpop.f32.mrf.mxu0
      %4518 = vmatprep.mubr.f32.mxu0 %v4434
      %4519 = vmatmul.mubr.f32.gmra.mxu0 %v4421
      %v4520 = vpop.f32.mrf.mxu0
      %v4521 = vadd.f32 0.0, %v4520
      %v4522 = vpop.f32.mrf.mxu0
      %4523 = vdwg.mxu0
      %v4526 = vrot.slane %v4506, 1
      %v4527 = vrot.slane %v4511, 1
      %v4528 = vsel %vm2415, %v4526, %v4527
      %4529 = vrot.lane.b32.xlu0 %v4528, 16
      %v4530 = vpop.permute.xlu0 %4529
      %v4532 = vrot.slane %v4506, 2
      %v4533 = vrot.slane %v4511, 2
      %v4534 = vsel %vm2505, %v4532, %v4533
      %4535 = vrot.lane.b32.xlu0 %v4534, 32
      %v4536 = vpop.permute.xlu0 %4535
      %v4538 = vrot.slane %v4506, 3
      %v4539 = vrot.slane %v4511, 3
      %v4540 = vsel %vm2595, %v4538, %v4539
      %4541 = vrot.lane.b32.xlu0 %v4540, 48
      %v4542 = vpop.permute.xlu0 %4541
      %v4544 = vrot.slane %v4506, 4
      %v4545 = vrot.slane %v4511, 4
      %v4546 = vsel %vm2685, %v4544, %v4545
      %4547 = vrot.lane.b32.xlu0 %v4546, 64
      %v4548 = vpop.permute.xlu0 %4547
      %v4550 = vrot.slane %v4506, 5
      %v4551 = vrot.slane %v4511, 5
      %v4552 = vsel %vm3193, %v4550, %v4551
      %4553 = vrot.lane.b32.xlu0 %v4552, 80
      %v4554 = vpop.permute.xlu0 %4553
      %v4556 = vrot.slane %v4506, 6
      %v4557 = vrot.slane %v4511, 6
      %v4558 = vsel %vm2777, %v4556, %v4557
      %4559 = vrot.lane.b32.xlu0 %v4558, 96
      %v4560 = vpop.permute.xlu0 %4559
      %v4562 = vrot.slane %v4506, 7
      %v4563 = vrot.slane %v4511, 7
      %v4564 = vsel %vm2869, %v4562, %v4563
      %4565 = vrot.lane.b32.xlu0 %v4564, 112
      %v4566 = vpop.permute.xlu0 %4565
      %v4569 = vrot.slane %v4516, 1
      %v4570 = vsel %vm2415, %v4527, %v4569
      %4571 = vrot.lane.b32.xlu0 %v4570, 16
      %v4572 = vpop.permute.xlu0 %4571
      %v4574 = vrot.slane %v4516, 2
      %v4575 = vsel %vm2505, %v4533, %v4574
      %4576 = vrot.lane.b32.xlu0 %v4575, 32
      %v4577 = vpop.permute.xlu0 %4576
      %v4579 = vrot.slane %v4516, 3
      %v4580 = vsel %vm2595, %v4539, %v4579
      %4581 = vrot.lane.b32.xlu0 %v4580, 48
      %v4582 = vpop.permute.xlu0 %4581
      %v4584 = vrot.slane %v4516, 4
      %v4585 = vsel %vm2685, %v4545, %v4584
      %4586 = vrot.lane.b32.xlu0 %v4585, 64
      %v4587 = vpop.permute.xlu0 %4586
      %v4589 = vrot.slane %v4516, 5
      %v4590 = vsel %vm3193, %v4551, %v4589
      %4591 = vrot.lane.b32.xlu0 %v4590, 80
      %v4592 = vpop.permute.xlu0 %4591
      %v4594 = vrot.slane %v4516, 6
      %v4595 = vsel %vm2777, %v4557, %v4594
      %4596 = vrot.lane.b32.xlu0 %v4595, 96
      %v4597 = vpop.permute.xlu0 %4596
      %v4599 = vrot.slane %v4516, 7
      %v4600 = vsel %vm2869, %v4563, %v4599
      %4601 = vrot.lane.b32.xlu0 %v4600, 112
      %v4602 = vpop.permute.xlu0 %4601
      %v4604 = vsel %vm1542, %v4506, %v4530
      %v4605 = vsel %vm3572, %v4604, %v4536
      %v4606 = vsel %vm3610, %v4605, %v4542
      %v4607 = vsel %vm412, %v4606, %v4548
      %v4608 = vsel %vm3685, %v4607, %v4554
      %v4609 = vsel %vm3723, %v4608, %v4560
      %v4610 = vsel %vm3761, %v4609, %v4566
      %v4611 = vsel %vm1542, %v4511, %v4572
      %v4612 = vsel %vm3572, %v4611, %v4577
      %v4613 = vsel %vm3610, %v4612, %v4582
      %v4614 = vsel %vm412, %v4613, %v4587
      %v4615 = vsel %vm3685, %v4614, %v4592
      %v4616 = vsel %vm3723, %v4615, %v4597
      %v4617 = vsel %vm3761, %v4616, %v4602
      %v4619 = vrot.slane %v4521, 1
      %v4620 = vsel %vm2415, %v4569, %v4619
      %4621 = vrot.lane.b32.xlu0 %v4620, 16
      %v4622 = vpop.permute.xlu0 %4621
      %v4624 = vrot.slane %v4521, 2
      %v4625 = vsel %vm2505, %v4574, %v4624
      %4626 = vrot.lane.b32.xlu0 %v4625, 32
      %v4627 = vpop.permute.xlu0 %4626
      %v4629 = vrot.slane %v4521, 3
      %v4630 = vsel %vm2595, %v4579, %v4629
      %4631 = vrot.lane.b32.xlu0 %v4630, 48
      %v4632 = vpop.permute.xlu0 %4631
      %v4634 = vrot.slane %v4521, 4
      %v4635 = vsel %vm2685, %v4584, %v4634
      %4636 = vrot.lane.b32.xlu0 %v4635, 64
      %v4637 = vpop.permute.xlu0 %4636
      %v4639 = vrot.slane %v4521, 5
      %v4640 = vsel %vm3193, %v4589, %v4639
      %4641 = vrot.lane.b32.xlu0 %v4640, 80
      %v4642 = vpop.permute.xlu0 %4641
      %v4644 = vrot.slane %v4521, 6
      %v4645 = vsel %vm2777, %v4594, %v4644
      %4646 = vrot.lane.b32.xlu0 %v4645, 96
      %v4647 = vpop.permute.xlu0 %4646
      %v4649 = vrot.slane %v4521, 7
      %v4650 = vsel %vm2869, %v4599, %v4649
      %4651 = vrot.lane.b32.xlu0 %v4650, 112
      %v4652 = vpop.permute.xlu0 %4651
      %v4654 = vsel %vm1542, %v4516, %v4622
      %v4655 = vsel %vm3572, %v4654, %v4627
      %v4656 = vsel %vm3610, %v4655, %v4632
      %v4657 = vsel %vm412, %v4656, %v4637
      %v4658 = vsel %vm3685, %v4657, %v4642
      %v4659 = vsel %vm3723, %v4658, %v4647
      %v4660 = vsel %vm3761, %v4659, %v4652
      %v4661 = vld [vmem:[%s3] sm:$0xff]
      %v4662 = vld [vmem:[%s3 + $0x8] sm:$0xff]
      %v4663 = vld [vmem:[%s3 + $0x10] sm:$0xff]
      %v4664 = vld [vmem:[%s3 + $0x18] sm:$0xff]
      %v4665 = vld [vmem:[%s3 + $0x20] sm:$0xff]
      %v4666 = vld [vmem:[%s3 + $0x28] sm:$0xff]
      %v4667 = vld [vmem:[%s3 + $0x30] sm:$0xff]
      %v4668 = vld [vmem:[%s3 + $0x38] sm:$0xff]
      %v4669 = vld [vmem:[%s3 + $0x40] sm:$0xff]
      %v4670 = vld [vmem:[%s3 + $0x48] sm:$0xff]
      %v4671 = vld [vmem:[%s3 + $0x50] sm:$0xff]
      %v4672 = vld [vmem:[%s3 + $0x58] sm:$0xff]
      %v4673 = vld [vmem:[%s3 + $0x60] sm:$0xff]
      %v4674 = vld [vmem:[%s3 + $0x68] sm:$0xff]
      %v4675 = vld [vmem:[%s3 + $0x70] sm:$0xff]
      %v4676 = vld [vmem:[%s3 + $0x78] sm:$0xff]
      %v4677 = vld [vmem:[%s3 + $0x80] sm:$0xff]
      %v4678 = vld [vmem:[%s3 + $0x88] sm:$0xff]
      %v4679 = vld [vmem:[%s3 + $0x90] sm:$0xff]
      %v4680 = vld [vmem:[%s3 + $0x98] sm:$0xff]
      %v4681 = vld [vmem:[%s3 + $0xa0] sm:$0xff]
      %v4682 = vld [vmem:[%s3 + $0xa8] sm:$0xff]
      %v4683 = vld [vmem:[%s3 + $0xb0] sm:$0xff]
      %v4684 = vld [vmem:[%s3 + $0xb8] sm:$0xff]
      %v4685 = vld [vmem:[%s3 + $0xc0] sm:$0xff]
      %v4686 = vld [vmem:[%s3 + $0xc8] sm:$0xff]
      %v4687 = vld [vmem:[%s3 + $0xd0] sm:$0xff]
      %v4688 = vld [vmem:[%s3 + $0xd8] sm:$0xff]
      %v4689 = vld [vmem:[%s3 + $0xe0] sm:$0xff]
      %v4690 = vld [vmem:[%s3 + $0xe8] sm:$0xff]
      %v4691 = vld [vmem:[%s3 + $0xf0] sm:$0xff]
      %v4692 = vld [vmem:[%s3 + $0xf8] sm:$0xff]
      %v4693 = vld [vmem:[%s3 + $0x100] sm:$0xff]
      %v4694 = vld [vmem:[%s3 + $0x108] sm:$0xff]
      %v4695 = vld [vmem:[%s3 + $0x110] sm:$0xff]
      %v4696 = vld [vmem:[%s3 + $0x118] sm:$0xff]
      %v4697 = vld [vmem:[%s3 + $0x120] sm:$0xff]
      %v4698 = vld [vmem:[%s3 + $0x128] sm:$0xff]
      %v4699 = vld [vmem:[%s3 + $0x130] sm:$0xff]
      %v4700 = vld [vmem:[%s3 + $0x138] sm:$0xff]
      %v4701 = vld [vmem:[%s3 + $0x140] sm:$0xff]
      %v4702 = vld [vmem:[%s3 + $0x148] sm:$0xff]
      %v4703 = vld [vmem:[%s3 + $0x150] sm:$0xff]
      %v4704 = vld [vmem:[%s3 + $0x158] sm:$0xff]
      %v4705 = vld [vmem:[%s3 + $0x160] sm:$0xff]
      %v4706 = vld [vmem:[%s3 + $0x168] sm:$0xff]
      %v4707 = vld [vmem:[%s3 + $0x170] sm:$0xff]
      %v4708 = vld [vmem:[%s3 + $0x178] sm:$0xff]
      %v4709 = vld [vmem:[%s3 + $0x180] sm:$0xff]
      %v4710 = vld [vmem:[%s3 + $0x188] sm:$0xff]
      %v4711 = vsel %vm1542, %v4521, 0
      %4713 = vmatprep.subr.mxu0 0.0
      %4714 = vmatpush1.msra.mxu0 %v4676
      %4715 = vmatprep.subr.mxu0 0.0
      %4716 = vmatpush1.msra.mxu0 %v4675
      %4717 = vmatprep.subr.mxu0 0.0
      %4718 = vmatpush1.msra.mxu0 %v4674
      %4719 = vmatprep.subr.mxu0 0.0
      %4720 = vmatpush1.msra.mxu0 %v4673
      %4721 = vmatprep.subr.mxu0 0.0
      %4722 = vmatpush1.msra.mxu0 %v4672
      %4723 = vmatprep.subr.mxu0 0.0
      %4724 = vmatpush1.msra.mxu0 %v4671
      %4725 = vmatprep.subr.mxu0 0.0
      %4726 = vmatpush1.msra.mxu0 %v4670
      %4727 = vmatprep.subr.mxu0 0.0
      %4728 = vmatpush1.msra.mxu0 %v4669
      %4729 = vmatprep.subr.mxu0 0.0
      %4730 = vmatpush1.msra.mxu0 %v4668
      %4731 = vmatprep.subr.mxu0 0.0
      %4732 = vmatpush1.msra.mxu0 %v4667
      %4733 = vmatprep.subr.mxu0 0.0
      %4734 = vmatpush1.msra.mxu0 %v4666
      %4735 = vmatprep.subr.mxu0 0.0
      %4736 = vmatpush1.msra.mxu0 %v4665
      %4737 = vmatprep.subr.mxu0 0.0
      %4738 = vmatpush1.msra.mxu0 %v4664
      %4739 = vmatprep.subr.mxu0 0.0
      %4740 = vmatpush1.msra.mxu0 %v4663
      %4741 = vmatprep.subr.mxu0 0.0
      %4742 = vmatpush1.msra.mxu0 %v4662
      %4743 = vmatprep.subr.mxu0 0.0
      %4744 = vmatpush1.msra.mxu0 %v4661
      %4745 = vmatprep.subr.mxu0 0.0
      %4746 = vmatpush2.msra.mxu0 %v4692
      %4747 = vmatprep.subr.mxu0 0.0
      %4748 = vmatpush2.msra.mxu0 %v4691
      %4749 = vmatprep.subr.mxu0 0.0
      %4750 = vmatpush2.msra.mxu0 %v4690
      %4751 = vmatprep.subr.mxu0 0.0
      %4752 = vmatpush2.msra.mxu0 %v4689
      %4753 = vmatprep.subr.mxu0 0.0
      %4754 = vmatpush2.msra.mxu0 %v4688
      %4755 = vmatprep.subr.mxu0 0.0
      %4756 = vmatpush2.msra.mxu0 %v4687
      %4757 = vmatprep.subr.mxu0 0.0
      %4758 = vmatpush2.msra.mxu0 %v4686
      %4759 = vmatprep.subr.mxu0 0.0
      %4760 = vmatpush2.msra.mxu0 %v4685
      %4761 = vmatprep.subr.mxu0 0.0
      %4762 = vmatpush2.msra.mxu0 %v4684
      %4763 = vmatprep.subr.mxu0 0.0
      %4764 = vmatpush2.msra.mxu0 %v4683
      %4765 = vmatprep.subr.mxu0 0.0
      %4766 = vmatpush2.msra.mxu0 %v4682
      %4767 = vmatprep.subr.mxu0 0.0
      %4768 = vmatpush2.msra.mxu0 %v4681
      %4769 = vmatprep.subr.mxu0 0.0
      %4770 = vmatpush2.msra.mxu0 %v4680
      %4771 = vmatprep.subr.mxu0 0.0
      %4772 = vmatpush2.msra.mxu0 %v4679
      %4773 = vmatprep.subr.mxu0 0.0
      %4774 = vmatpush2.msra.mxu0 %v4678
      %4775 = vmatprep.subr.mxu0 0.0
      %4776 = vmatpush2.msra.mxu0 %v4677
      %4777 = vmatprep.mubr.f32.mxu0 %v4617
      %4778 = vmatmul.mubr.f32.gmra.mxu0 %v4610
      %v4779 = vpop.f32.mrf.mxu0
      %v4780 = vadd.f32 0.0, %v4779
      %v4781 = vpop.f32.mrf.mxu0
      %4782 = vdwg.mxu0
      %4783 = vmatprep.subr.mxu0 0.0
      %4784 = vmatpush1.msra.mxu0 %v4708
      %4785 = vmatprep.subr.mxu0 0.0
      %4786 = vmatpush1.msra.mxu0 %v4707
      %4787 = vmatprep.subr.mxu0 0.0
      %4788 = vmatpush1.msra.mxu0 %v4706
      %4789 = vmatprep.subr.mxu0 0.0
      %4790 = vmatpush1.msra.mxu0 %v4705
      %4791 = vmatprep.subr.mxu0 0.0
      %4792 = vmatpush1.msra.mxu0 %v4704
      %4793 = vmatprep.subr.mxu0 0.0
      %4794 = vmatpush1.msra.mxu0 %v4703
      %4795 = vmatprep.subr.mxu0 0.0
      %4796 = vmatpush1.msra.mxu0 %v4702
      %4797 = vmatprep.subr.mxu0 0.0
      %4798 = vmatpush1.msra.mxu0 %v4701
      %4799 = vmatprep.subr.mxu0 0.0
      %4800 = vmatpush1.msra.mxu0 %v4700
      %4801 = vmatprep.subr.mxu0 0.0
      %4802 = vmatpush1.msra.mxu0 %v4699
      %4803 = vmatprep.subr.mxu0 0.0
      %4804 = vmatpush1.msra.mxu0 %v4698
      %4805 = vmatprep.subr.mxu0 0.0
      %4806 = vmatpush1.msra.mxu0 %v4697
      %4807 = vmatprep.subr.mxu0 0.0
      %4808 = vmatpush1.msra.mxu0 %v4696
      %4809 = vmatprep.subr.mxu0 0.0
      %4810 = vmatpush1.msra.mxu0 %v4695
      %4811 = vmatprep.subr.mxu0 0.0
      %4812 = vmatpush1.msra.mxu0 %v4694
      %4813 = vmatprep.subr.mxu0 0.0
      %4814 = vmatpush1.msra.mxu0 %v4693
      %4815 = vmatprep.subr.mxu0 0.0
      %4816 = vmatpush2.msra.mxu0 0.0
      %4817 = vmatprep.subr.mxu0 0.0
      %4818 = vmatpush2.msra.mxu0 0.0
      %4819 = vmatprep.subr.mxu0 0.0
      %4820 = vmatpush2.msra.mxu0 0.0
      %4821 = vmatprep.subr.mxu0 0.0
      %4822 = vmatpush2.msra.mxu0 0.0
      %4823 = vmatprep.subr.mxu0 0.0
      %4824 = vmatpush2.msra.mxu0 0.0
      %4825 = vmatprep.subr.mxu0 0.0
      %4826 = vmatpush2.msra.mxu0 0.0
      %4827 = vmatprep.subr.mxu0 0.0
      %4828 = vmatpush2.msra.mxu0 0.0
      %4829 = vmatprep.subr.mxu0 0.0
      %4830 = vmatpush2.msra.mxu0 0.0
      %4831 = vmatprep.subr.mxu0 0.0
      %4832 = vmatpush2.msra.mxu0 0.0
      %4833 = vmatprep.subr.mxu0 0.0
      %4834 = vmatpush2.msra.mxu0 0.0
      %4835 = vmatprep.subr.mxu0 0.0
      %4836 = vmatpush2.msra.mxu0 0.0
      %4837 = vmatprep.subr.mxu0 0.0
      %4838 = vmatpush2.msra.mxu0 0.0
      %4839 = vmatprep.subr.mxu0 0.0
      %4840 = vmatpush2.msra.mxu0 0.0
      %4841 = vmatprep.subr.mxu0 0.0
      %4842 = vmatpush2.msra.mxu0 0.0
      %4843 = vmatprep.subr.mxu0 0.0
      %4844 = vmatpush2.msra.mxu0 %v4710
      %4845 = vmatprep.subr.mxu0 0.0
      %4846 = vmatpush2.msra.mxu0 %v4709
      %4847 = vmatprep.mubr.f32.mxu0 %v4711
      %4848 = vmatmul.mubr.f32.gmra.mxu0 %v4660
      %v4849 = vpop.f32.mrf.mxu0
      %v4850 = vadd.f32 %v4780, %v4849
      %v4851 = vpop.f32.mrf.mxu0
      %4852 = vdwg.mxu0
      %v4853 = vmax.f32 %v4850, 0.0
      %v4854 = vld [vmem:[%s4] sm:$0xff]
      %v4855 = vld [vmem:[%s4 + $0x8] sm:$0xff]
      %v4856 = vld [vmem:[%s4 + $0x10] sm:$0xff]
      %v4857 = vld [vmem:[%s4 + $0x18] sm:$0xff]
      %v4858 = vld [vmem:[%s4 + $0x20] sm:$0xff]
      %v4859 = vld [vmem:[%s4 + $0x28] sm:$0xff]
      %v4860 = vld [vmem:[%s4 + $0x30] sm:$0xff]
      %v4861 = vld [vmem:[%s4 + $0x38] sm:$0xff]
      %v4862 = vld [vmem:[%s4 + $0x40] sm:$0xff]
      %v4863 = vld [vmem:[%s4 + $0x48] sm:$0xff]
      %v4864 = vld [vmem:[%s4 + $0x50] sm:$0xff]
      %v4865 = vld [vmem:[%s4 + $0x58] sm:$0xff]
      %v4866 = vld [vmem:[%s4 + $0x60] sm:$0xff]
      %v4867 = vld [vmem:[%s4 + $0x68] sm:$0xff]
      %v4868 = vld [vmem:[%s4 + $0x70] sm:$0xff]
      %v4869 = vld [vmem:[%s4 + $0x78] sm:$0xff]
      %4870 = vmatprep.subr.mxu0 0.0
      %4871 = vmatpush1.msra.mxu0 %v4869
      %4872 = vmatprep.subr.mxu0 0.0
      %4873 = vmatpush1.msra.mxu0 %v4868
      %4874 = vmatprep.subr.mxu0 0.0
      %4875 = vmatpush1.msra.mxu0 %v4867
      %4876 = vmatprep.subr.mxu0 0.0
      %4877 = vmatpush1.msra.mxu0 %v4866
      %4878 = vmatprep.subr.mxu0 0.0
      %4879 = vmatpush1.msra.mxu0 %v4865
      %4880 = vmatprep.subr.mxu0 0.0
      %4881 = vmatpush1.msra.mxu0 %v4864
      %4882 = vmatprep.subr.mxu0 0.0
      %4883 = vmatpush1.msra.mxu0 %v4863
      %4884 = vmatprep.subr.mxu0 0.0
      %4885 = vmatpush1.msra.mxu0 %v4862
      %4886 = vmatprep.subr.mxu0 0.0
      %4887 = vmatpush1.msra.mxu0 %v4861
      %4888 = vmatprep.subr.mxu0 0.0
      %4889 = vmatpush1.msra.mxu0 %v4860
      %4890 = vmatprep.subr.mxu0 0.0
      %4891 = vmatpush1.msra.mxu0 %v4859
      %4892 = vmatprep.subr.mxu0 0.0
      %4893 = vmatpush1.msra.mxu0 %v4858
      %4894 = vmatprep.subr.mxu0 0.0
      %4895 = vmatpush1.msra.mxu0 %v4857
      %4896 = vmatprep.subr.mxu0 0.0
      %4897 = vmatpush1.msra.mxu0 %v4856
      %4898 = vmatprep.subr.mxu0 0.0
      %4899 = vmatpush1.msra.mxu0 %v4855
      %4900 = vmatprep.subr.mxu0 0.0
      %4901 = vmatpush1.msra.mxu0 %v4854
      %4902 = vmatprep.subr.mxu0 0.0
      %4903 = vmatpush2.msra.mxu0 0.0
      %4904 = vmatprep.subr.mxu0 0.0
      %4905 = vmatpush2.msra.mxu0 0.0
      %4906 = vmatprep.subr.mxu0 0.0
      %4907 = vmatpush2.msra.mxu0 0.0
      %4908 = vmatprep.subr.mxu0 0.0
      %4909 = vmatpush2.msra.mxu0 0.0
      %4910 = vmatprep.subr.mxu0 0.0
      %4911 = vmatpush2.msra.mxu0 0.0
      %4912 = vmatprep.subr.mxu0 0.0
      %4913 = vmatpush2.msra.mxu0 0.0
      %4914 = vmatprep.subr.mxu0 0.0
      %4915 = vmatpush2.msra.mxu0 0.0
      %4916 = vmatprep.subr.mxu0 0.0
      %4917 = vmatpush2.msra.mxu0 0.0
      %4918 = vmatprep.subr.mxu0 0.0
      %4919 = vmatpush2.msra.mxu0 0.0
      %4920 = vmatprep.subr.mxu0 0.0
      %4921 = vmatpush2.msra.mxu0 0.0
      %4922 = vmatprep.subr.mxu0 0.0
      %4923 = vmatpush2.msra.mxu0 0.0
      %4924 = vmatprep.subr.mxu0 0.0
      %4925 = vmatpush2.msra.mxu0 0.0
      %4926 = vmatprep.subr.mxu0 0.0
      %4927 = vmatpush2.msra.mxu0 0.0
      %4928 = vmatprep.subr.mxu0 0.0
      %4929 = vmatpush2.msra.mxu0 0.0
      %4930 = vmatprep.subr.mxu0 0.0
      %4931 = vmatpush2.msra.mxu0 0.0
      %4932 = vmatprep.subr.mxu0 0.0
      %4933 = vmatpush2.msra.mxu0 0.0
      %4934 = vmatprep.mubr.f32.mxu0 0.0
      %4935 = vmatmul.mubr.f32.gmra.mxu0 %v4853
      %v4936 = vpop.f32.mrf.mxu0
      %v4937 = vadd.f32 0.0, %v4936
      %v4938 = vpop.f32.mrf.mxu0
      %4939 = vdwg.mxu0
      %v4940 = vmax.f32 %v4937, 0.0
      %v4941 = vld [vmem:[%s5] sm:$0xff]
      %v4942 = vld [vmem:[%s5 + $0x8] sm:$0xff]
      %v4943 = vld [vmem:[%s5 + $0x10] sm:$0xff]
      %v4944 = vld [vmem:[%s5 + $0x18] sm:$0xff]
      %v4945 = vld [vmem:[%s5 + $0x20] sm:$0xff]
      %v4946 = vld [vmem:[%s5 + $0x28] sm:$0xff]
      %v4947 = vld [vmem:[%s5 + $0x30] sm:$0xff]
      %v4948 = vld [vmem:[%s5 + $0x38] sm:$0xff]
      %v4949 = vld [vmem:[%s5 + $0x40] sm:$0xff]
      %v4950 = vld [vmem:[%s5 + $0x48] sm:$0xff]
      %v4951 = vld [vmem:[%s5 + $0x50] sm:$0xff]
      %v4952 = vld [vmem:[%s5 + $0x58] sm:$0xff]
      %v4953 = vld [vmem:[%s5 + $0x60] sm:$0xff]
      %v4954 = vld [vmem:[%s5 + $0x68] sm:$0xff]
      %v4955 = vld [vmem:[%s5 + $0x70] sm:$0xff]
      %v4956 = vld [vmem:[%s5 + $0x78] sm:$0xff]
      %4957 = vmatprep.subr.mxu0 0.0
      %4958 = vmatpush1.msra.mxu0 %v4956
      %4959 = vmatprep.subr.mxu0 0.0
      %4960 = vmatpush1.msra.mxu0 %v4955
      %4961 = vmatprep.subr.mxu0 0.0
      %4962 = vmatpush1.msra.mxu0 %v4954
      %4963 = vmatprep.subr.mxu0 0.0
      %4964 = vmatpush1.msra.mxu0 %v4953
      %4965 = vmatprep.subr.mxu0 0.0
      %4966 = vmatpush1.msra.mxu0 %v4952
      %4967 = vmatprep.subr.mxu0 0.0
      %4968 = vmatpush1.msra.mxu0 %v4951
      %4969 = vmatprep.subr.mxu0 0.0
      %4970 = vmatpush1.msra.mxu0 %v4950
      %4971 = vmatprep.subr.mxu0 0.0
      %4972 = vmatpush1.msra.mxu0 %v4949
      %4973 = vmatprep.subr.mxu0 0.0
      %4974 = vmatpush1.msra.mxu0 %v4948
      %4975 = vmatprep.subr.mxu0 0.0
      %4976 = vmatpush1.msra.mxu0 %v4947
      %4977 = vmatprep.subr.mxu0 0.0
      %4978 = vmatpush1.msra.mxu0 %v4946
      %4979 = vmatprep.subr.mxu0 0.0
      %4980 = vmatpush1.msra.mxu0 %v4945
      %4981 = vmatprep.subr.mxu0 0.0
      %4982 = vmatpush1.msra.mxu0 %v4944
      %4983 = vmatprep.subr.mxu0 0.0
      %4984 = vmatpush1.msra.mxu0 %v4943
      %4985 = vmatprep.subr.mxu0 0.0
      %4986 = vmatpush1.msra.mxu0 %v4942
      %4987 = vmatprep.subr.mxu0 0.0
      %4988 = vmatpush1.msra.mxu0 %v4941
      %4989 = vmatprep.subr.mxu0 0.0
      %4990 = vmatpush2.msra.mxu0 0.0
      %4991 = vmatprep.subr.mxu0 0.0
      %4992 = vmatpush2.msra.mxu0 0.0
      %4993 = vmatprep.subr.mxu0 0.0
      %4994 = vmatpush2.msra.mxu0 0.0
      %4995 = vmatprep.subr.mxu0 0.0
      %4996 = vmatpush2.msra.mxu0 0.0
      %4997 = vmatprep.subr.mxu0 0.0
      %4998 = vmatpush2.msra.mxu0 0.0
      %4999 = vmatprep.subr.mxu0 0.0
      %5000 = vmatpush2.msra.mxu0 0.0
      %5001 = vmatprep.subr.mxu0 0.0
      %5002 = vmatpush2.msra.mxu0 0.0
      %5003 = vmatprep.subr.mxu0 0.0
      %5004 = vmatpush2.msra.mxu0 0.0
      %5005 = vmatprep.subr.mxu0 0.0
      %5006 = vmatpush2.msra.mxu0 0.0
      %5007 = vmatprep.subr.mxu0 0.0
      %5008 = vmatpush2.msra.mxu0 0.0
      %5009 = vmatprep.subr.mxu0 0.0
      %5010 = vmatpush2.msra.mxu0 0.0
      %5011 = vmatprep.subr.mxu0 0.0
      %5012 = vmatpush2.msra.mxu0 0.0
      %5013 = vmatprep.subr.mxu0 0.0
      %5014 = vmatpush2.msra.mxu0 0.0
      %5015 = vmatprep.subr.mxu0 0.0
      %5016 = vmatpush2.msra.mxu0 0.0
      %5017 = vmatprep.subr.mxu0 0.0
      %5018 = vmatpush2.msra.mxu0 0.0
      %5019 = vmatprep.subr.mxu0 0.0
      %5020 = vmatpush2.msra.mxu0 0.0
      %5021 = vmatprep.mubr.f32.mxu0 0.0
      %5022 = vmatmul.mubr.f32.gmra.mxu0 %v4940
      %v5023 = vpop.f32.mrf.mxu0
      %v5024 = vadd.f32 0.0, %v5023
      %v5025 = vpop.f32.mrf.mxu0
      %5026 = vdwg.mxu0
      %5027 = vst [vmem:[%s305] sm:$0xff] %v5024
      %p5028 = scmp.lt.s32.totalorder %s19, 1
      %s5029 = scalar_select %p5028, %s19, 1
      %s5030 = smul.addr %s5029, 8
      %s5031 = scalar_lea.vmem %s8, %s5030
      // Predicated region
      $region53: #{cnn_lenet_forward.1} parent=51 // pred_check
        %p5032 = pneg %p210
      $region54: #{cnn_lenet_forward.1} parent=51 // pred_check_branch
        %5034 = sbr.rel (%p5032) target = $region56
      $region55: #{cnn_lenet_forward.1} parent=51 // pred_region
        _
      $region56: #{cnn_lenet_forward.1} parent=51 // pred_fallthru
        _
    $region52: #{cnn_lenet_forward.1} parent=5 // pred_fallthru
      _
    %p5035 = scmp.le.s32.totalorder 2, %s14
    // Predicated region
    $region57: #{cnn_lenet_forward.1} parent=5 // pred_check
      %p5036 = pneg %p5035
    $region58: #{cnn_lenet_forward.1} parent=5 // pred_check_branch
      %5038 = sbr.rel (%p5036) target = $region60
    $region59: #{cnn_lenet_forward.1} parent=5 // pred_region
      %s5039 = ssub.s32 %s14, 2
      // Predicated region
      $region61: #{cnn_lenet_forward.1} parent=59 // pred_check
        %p5040 = pneg %p216
      $region62: #{cnn_lenet_forward.1} parent=59 // pred_check_branch
        %5042 = sbr.rel (%p5040) target = $region64
      $region63: #{cnn_lenet_forward.1} parent=59 // pred_region
        %p5043 = scmp.lt.s32.totalorder %s20, 1
        %s5044 = scalar_select %p5043, %s20, 1
        %s5045 = smul.addr %s5044, 8
        %s5046 = scalar_lea.vmem %s8, %s5045
      $region64: #{cnn_lenet_forward.1} parent=59 // pred_fallthru
        _
    $region60: #{cnn_lenet_forward.1} parent=5 // pred_fallthru
      _
  $region6: #{cnn_lenet_forward.1} parent=0 // loop_footer
    %s18 = sadd.s32 1, %s14
  $region7: #{cnn_lenet_forward.1} parent=0 // loop_footer_branch
    %13 = sbr.rel target = $region3
  $region8: #{cnn_lenet_forward.1} parent=0 // loop_exit
    _

</llo_original>
